<compile_context>
chip_gen: v6e
topology: v6e:2x2x1
jax: 0.10.0
libtpu: 0.0.40
codegen_flags: <defaults>
</compile_context>

<pallas_src>
import math
import functools

import jax
import jax.numpy as jnp
from jax import lax
from jax.experimental import pallas as pl
from jax.experimental.pallas import tpu as pltpu


# ----------------------------------------------------------------------------
# Compatibility shims / helpers
# ----------------------------------------------------------------------------

_CompilerParams = getattr(pltpu, "CompilerParams", None) or getattr(
    pltpu, "TPUCompilerParams"
)
_MemSpace = getattr(pltpu, "MemorySpace", None) or getattr(pltpu, "TPUMemorySpace")
_SMEM = _MemSpace.SMEM


def _round_up(x, m):
    return (x + m - 1) // m * m


def _recip(x):
    if hasattr(pl, "reciprocal"):
        return pl.reciprocal(x, approx=True)
    return 1.0 / x


@functools.lru_cache(maxsize=1)
def _vmem_limit():
    # Raise the scoped-VMEM budget only on chips with 128 MiB VMEM (v5e/v6e);
    # keep the compiler default on 64 MiB parts (v7x) to preserve headroom.
    try:
        cap = pltpu.get_tpu_info().vmem_capacity_bytes
        if cap >= 128 * 1024 * 1024:
            return 96 * 1024 * 1024
    except Exception:
        pass
    return None


def _cparams(dimension_semantics):
    kw = dict(dimension_semantics=dimension_semantics)
    lim = _vmem_limit()
    if lim is not None:
        kw["vmem_limit_bytes"] = lim
    return _CompilerParams(**kw)


@functools.lru_cache(maxsize=1)
def _strided_roll_supported():
    """Probe-compile the strided lane roll used for the fused rel-shift."""

    def kern(x_ref, o_ref):
        o_ref[...] = pltpu.roll(x_ref[...], 3, axis=1, stride=1, stride_axis=0)

    try:
        fn = pl.pallas_call(
            kern, out_shape=jax.ShapeDtypeStruct((8, 128), jnp.float32)
        )
        jax.jit(fn).lower(jnp.zeros((8, 128), jnp.float32)).compile()
        return True
    except Exception:
        return False


# ----------------------------------------------------------------------------
# Tiled matmul + bias (+ activation)
# ----------------------------------------------------------------------------

def _matmul_bias_kernel(x_ref, w_ref, b_ref, o_ref, acc_ref, *, activation):
    @pl.when(pl.program_id(2) == 0)
    def _init():
        acc_ref[...] = jnp.zeros_like(acc_ref)

    acc_ref[...] += jnp.dot(
        x_ref[...], w_ref[...], preferred_element_type=jnp.float32
    )

    @pl.when(pl.program_id(2) == pl.num_programs(2) - 1)
    def _finalize():
        y = acc_ref[...] + b_ref[...]
        if activation == "swish":
            y = y * jax.nn.sigmoid(y)
        elif activation == "relu":
            y = jnp.maximum(y, 0.0)
        o_ref[...] = y.astype(o_ref.dtype)


def matmul_bias(x, w, b, activation="none", out_dtype=jnp.bfloat16,
                tm=512, tn=256, tk=512):
    """x:(M,K) @ w:(K,N) + b:(N,).  bf16 MXU inputs, f32 accumulation, bf16 out."""
    M, K = x.shape
    Kw, N = w.shape
    assert Kw == K
    tm = min(tm, _round_up(M, 8))
    tn = min(tn, _round_up(N, 128))
    tk = min(tk, _round_up(K, 128))
    Mp, Kp, Np = _round_up(M, tm), _round_up(K, tk), _round_up(N, tn)

    if x.dtype != jnp.bfloat16:
        x = x.astype(jnp.bfloat16)
    if w.dtype != jnp.bfloat16:
        w = w.astype(jnp.bfloat16)
    if (Mp, Kp) != (M, K):
        x = jnp.pad(x, ((0, Mp - M), (0, Kp - K)))
    if (Kp, Np) != (K, N):
        w = jnp.pad(w, ((0, Kp - K), (0, Np - N)))
    bp = b.astype(jnp.float32).reshape(1, N)
    if Np != N:
        bp = jnp.pad(bp, ((0, 0), (0, Np - N)))

    grid = (Mp // tm, Np // tn, Kp // tk)
    out = pl.pallas_call(
        functools.partial(_matmul_bias_kernel, activation=activation),
        grid=grid,
        in_specs=[
            pl.BlockSpec((tm, tk), lambda i, j, k: (i, k)),
            pl.BlockSpec((tk, tn), lambda i, j, k: (k, j)),
            pl.BlockSpec((1, tn), lambda i, j, k: (0, j)),
        ],
        out_specs=pl.BlockSpec((tm, tn), lambda i, j, k: (i, j)),
        out_shape=jax.ShapeDtypeStruct((Mp, Np), out_dtype),
        scratch_shapes=[pltpu.VMEM((tm, tn), jnp.float32)],
        compiler_params=_cparams(("parallel", "parallel", "arbitrary")),
    )(x, w, bp)
    if (Mp, Np) != (M, N):
        out = out[:M, :N]
    return out


# ----------------------------------------------------------------------------
# LayerNorm
# ----------------------------------------------------------------------------

def _layernorm_kernel(x_ref, g_ref, b_ref, o_ref):
    x = x_ref[...].astype(jnp.float32)
    mean = jnp.mean(x, axis=-1, keepdims=True)
    var = jnp.mean(jnp.square(x - mean), axis=-1, keepdims=True)
    y = (x - mean) * lax.rsqrt(var + 1e-5) * g_ref[...] + b_ref[...]
    o_ref[...] = y.astype(o_ref.dtype)


def layer_norm(x2d, g, b, out_dtype=jnp.bfloat16, tm=256):
    # TODO(synk): fuse LayerNorm into the prologue of the consuming matmul.
    M, D = x2d.shape
    tm = min(tm, _round_up(M, 8))
    Mp = _round_up(M, tm)
    if Mp != M:
        x2d = jnp.pad(x2d, ((0, Mp - M), (0, 0)))
    out = pl.pallas_call(
        _layernorm_kernel,
        grid=(Mp // tm,),
        in_specs=[
            pl.BlockSpec((tm, D), lambda i: (i, 0)),
            pl.BlockSpec((1, D), lambda i: (0, 0)),
            pl.BlockSpec((1, D), lambda i: (0, 0)),
        ],
        out_specs=pl.BlockSpec((tm, D), lambda i: (i, 0)),
        out_shape=jax.ShapeDtypeStruct((Mp, D), out_dtype),
        compiler_params=_cparams(("parallel",)),
    )(x2d, g.reshape(1, D), b.reshape(1, D))
    return out[:M] if Mp != M else out


# ----------------------------------------------------------------------------
# Fused relative-position multi-head attention
# ----------------------------------------------------------------------------

def _pick_head_group(H, dk, d):
    """Heads per program so the last-dim block is lane-dense (>=128 or full d)."""
    if dk % 128 == 0:
        return 1
    if d % 128 == 0 and 128 % dk == 0:
        hp = 128 // dk
        if H % hp == 0:
            return hp
    return H


def _rel_attn_kernel(len_ref, q_ref, k_ref, v_ref, pos_ref, bu_ref, bv_ref, o_ref, *,
                     heads, dk, nq, scale, fused_pos):
    b = pl.program_id(0)
    qi = pl.program_id(2)
    tq = q_ref.shape[1]
    T = k_ref.shape[1]
    q0 = qi * tq
    L = len_ref[b]

    row_ids = q0 + lax.broadcasted_iota(jnp.int32, (tq, 1), 0)
    col_ids = lax.broadcasted_iota(jnp.int32, (1, T), 1)
    pad_q = row_ids >= L                                   # (tq, 1) padded query rows
    mask = jnp.logical_or(pad_q, col_ids >= L)             # (tq, T), True = masked

    q_all = q_ref[0]                                       # (tq, heads*dk) bf16
    k_all = k_ref[0]                                       # (T,  heads*dk) bf16
    v_all = v_ref[0]
    bu_all = bu_ref[...]                                   # (1, heads*dk) f32
    if fused_pos:
        pe_all = pos_ref[...]                              # (P_pad, heads*dk) bf16
        bv_all = bv_ref[...]
        p_pad = pe_all.shape[0]

    ctxs = []
    for h in range(heads):
        lo, hi = h * dk, (h + 1) * dk
        qh = q_all[:, lo:hi].astype(jnp.float32)
        qu = (qh + bu_all[:, lo:hi]).astype(jnp.bfloat16)
        kh = k_all[:, lo:hi]
        vh = v_all[:, lo:hi]

        ac = lax.dot_general(qu, kh, (((1,), (1,)), ((), ())),
                             preferred_element_type=jnp.float32)       # (tq, T)

        if fused_pos:
            qv = (qh + bv_all[:, lo:hi]).astype(jnp.bfloat16)
            peh = pe_all[:, lo:hi]
            bd_pre = lax.dot_general(qv, peh, (((1,), (1,)), ((), ())),
                                     preferred_element_type=jnp.float32)  # (tq, P_pad)
            # Transformer-XL relative shift, fused in-kernel:
            #   bd[i, j] = bd_pre[i, j + (T - 1 - (q0 + i))]
            # = lane roll whose amount increments by one per query row (sublane).
            bd = pltpu.roll(bd_pre, p_pad - (T - 1), axis=1,
                            stride=1, stride_axis=0)
            if nq > 1:
                bd = pltpu.roll(bd, q0, axis=1)
            bd = bd[:, :T]
        else:
            bd = pos_ref[0, h].astype(jnp.float32)                      # (tq, T)

        s = (ac + bd) * scale
        s = jnp.where(mask, -10000.0, s)
        m = jnp.max(s, axis=-1, keepdims=True)
        e = jnp.exp(s - m)
        attn = e * _recip(jnp.sum(e, axis=-1, keepdims=True))
        attn = jnp.where(pad_q, 0.0, attn)        # masked cols already underflowed
        ctxs.append(jnp.dot(attn.astype(vh.dtype), vh,
                            preferred_element_type=jnp.float32))        # (tq, dk)

    out = ctxs[0] if len(ctxs) == 1 else jnp.concatenate(ctxs, axis=-1)
    o_ref[0] = out.astype(o_ref.dtype)


def rel_attention(q, k, v, pos_arg, bias_u, bias_v, lengths, n_heads, scale, tq, fused):
    """q/k/v: (B, T, d) bf16.  Output: (B, T, d) bf16 (lane-dense blocks)."""
    # TODO(synk): add KV-block online softmax for very long T (scores kept as (tq,T)).
    B, T, d = q.shape
    dk = d // n_heads
    hp = _pick_head_group(n_heads, dk, d)
    hd = hp * dk
    G = n_heads // hp
    nq = T // tq

    if fused:
        pos_spec = pl.BlockSpec((pos_arg.shape[0], hd), lambda b, g, qi: (0, g))
    else:
        pos_spec = pl.BlockSpec((1, hp, tq, T), lambda b, g, qi: (b, g, qi, 0))

    kern = functools.partial(_rel_attn_kernel, heads=hp, dk=dk, nq=nq,
                             scale=scale, fused_pos=fused)
    return pl.pallas_call(
        kern,
        grid=(B, G, nq),
        in_specs=[
            pl.BlockSpec(memory_space=_SMEM),
            pl.BlockSpec((1, tq, hd), lambda b, g, qi: (b, qi, g)),
            pl.BlockSpec((1, T, hd), lambda b, g, qi: (b, 0, g)),
            pl.BlockSpec((1, T, hd), lambda b, g, qi: (b, 0, g)),
            pos_spec,
            pl.BlockSpec((1, hd), lambda b, g, qi: (0, g)),
            pl.BlockSpec((1, hd), lambda b, g, qi: (0, g)),
        ],
        out_specs=pl.BlockSpec((1, tq, hd), lambda b, g, qi: (b, qi, g)),
        out_shape=jax.ShapeDtypeStruct((B, T, d), jnp.bfloat16),
        compiler_params=_cparams(("parallel", "parallel", "parallel")),
    )(lengths.astype(jnp.int32), q, k, v, pos_arg, bias_u, bias_v)


def rel_shift(bd):
    """Transformer-XL relative shift (torch pad/view trick) -- fallback path only."""
    B, H, T, P = bd.shape
    x = jnp.pad(bd, ((0, 0), (0, 0), (0, 0), (1, 0)))
    x = x.reshape(B, H, P + 1, T)
    x = x[:, :, 1:, :].reshape(B, H, T, P)
    return x[:, :, :, :T]


def _bd_fallback(q, bias_v, pe_proj, n_heads):
    """XLA positional-score path (bf16), used only if the strided roll is unsupported."""
    B, T, d = q.shape
    dk = d // n_heads
    P = 2 * T - 1
    qv = q.astype(jnp.float32).reshape(B, T, n_heads, dk) + bias_v.reshape(1, 1, n_heads, dk)
    pe = pe_proj[:P].astype(jnp.float32).reshape(P, n_heads, dk)
    bd = jnp.einsum("bthd,phd->bhtp", qv.astype(jnp.bfloat16), pe.astype(jnp.bfloat16),
                    preferred_element_type=jnp.float32)
    return rel_shift(bd).astype(jnp.bfloat16)


def rel_mha(p, x, pos_emb, lengths, n_heads, tq):
    """RelPositionMultiHeadAttention.  x:(B,T,d) bf16, pos_emb:(P_pad,d)."""
    B, T, d = x.shape
    dk = d // n_heads
    x2 = x.reshape(B * T, d)

    q = matmul_bias(x2, p["wq"], p["bq"]).reshape(B, T, d)
    k = matmul_bias(x2, p["wk"], p["bk"]).reshape(B, T, d)
    v = matmul_bias(x2, p["wv"], p["bv"]).reshape(B, T, d)

    # linear_pos (no bias) on the (zero-padded) relative positional table.
    pe_proj = matmul_bias(pos_emb, p["w_pos"], jnp.zeros((d,), jnp.float32))  # (P_pad,d)

    fused = _strided_roll_supported()
    pos_arg = pe_proj if fused else _bd_fallback(q, p["pos_bias_v"], pe_proj, n_heads)

    ctx = rel_attention(q, k, v, pos_arg, p["pos_bias_u"], p["pos_bias_v"],
                        lengths, n_heads, 1.0 / math.sqrt(dk), tq, fused)
    out = matmul_bias(ctx.reshape(B * T, d), p["wo"], p["bo"]).reshape(B, T, d)
    return out


# ----------------------------------------------------------------------------
# Conformer convolution module (GLU + depthwise conv + BN + Swish fused)
# ----------------------------------------------------------------------------

def _glu_dwconv_bn_swish_kernel(len_ref, val_ref, gate_ref, w_ref, b_ref, sc_ref,
                                sh_ref, o_ref, *, K, pad):
    b_idx = pl.program_id(0)
    T = o_ref.shape[1]
    tc = o_ref.shape[2]
    L = len_ref[b_idx]

    val = val_ref[0].astype(jnp.float32)                  # (T, tc)
    gate = gate_ref[0].astype(jnp.float32)
    h = val * jax.nn.sigmoid(gate)                        # GLU
    t = lax.broadcasted_iota(jnp.int32, (T, 1), 0)
    h = jnp.where(t < L, h, 0.0)                          # zero padded time (pre-conv)

    parts = []
    if pad > 0:
        parts.append(jnp.zeros((pad, tc), jnp.float32))
    parts.append(h)
    if K - 1 - pad > 0:
        parts.append(jnp.zeros((K - 1 - pad, tc), jnp.float32))
    hpad = jnp.concatenate(parts, axis=0) if len(parts) > 1 else h   # (T+K-1, tc)

    w = w_ref[...].astype(jnp.float32)                    # (K, tc)
    acc = jnp.zeros((T, tc), jnp.float32)
    # Depthwise conv: taps grouped so only 7 sublane-misaligned shifts are needed;
    # the inner slices are 8-row (sublane) aligned views.
    # TODO(synk): tile over time with a (K-1)-row halo for very long T.
    for r in range(8):
        g_max = (K - 1 - r) // 8
        if g_max < 0:
            continue
        h_r = hpad[r:r + g_max * 8 + T]
        for g in range(g_max + 1):
            k = g * 8 + r
            acc = acc + h_r[g * 8: g * 8 + T] * w[k:k + 1, :]

    z = acc + b_ref[...]
    z = z * sc_ref[...] + sh_ref[...]                     # folded BatchNorm (running)
    o_ref[0] = (z * jax.nn.sigmoid(z)).astype(o_ref.dtype)   # Swish


def glu_dwconv_bn_swish(val, gate, lengths, w, b, bn_scale, bn_shift):
    """val/gate: (B,T,C) halves of the pointwise-conv1 output; w:(K,C) taps."""
    B, T, C = val.shape
    K = w.shape[0]
    pad = (K - 1) // 2
    tc = 128 if C % 128 == 0 else C
    kern = functools.partial(_glu_dwconv_bn_swish_kernel, K=K, pad=pad)
    return pl.pallas_call(
        kern,
        grid=(B, C // tc),
        in_specs=[
            pl.BlockSpec(memory_space=_SMEM),
            pl.BlockSpec((1, T, tc), lambda i, c: (i, 0, c)),
            pl.BlockSpec((1, T, tc), lambda i, c: (i, 0, c)),
            pl.BlockSpec((K, tc), lambda i, c: (0, c)),
            pl.BlockSpec((1, tc), lambda i, c: (0, c)),
            pl.BlockSpec((1, tc), lambda i, c: (0, c)),
            pl.BlockSpec((1, tc), lambda i, c: (0, c)),
        ],
        out_specs=pl.BlockSpec((1, T, tc), lambda i, c: (i, 0, c)),
        out_shape=jax.ShapeDtypeStruct((B, T, C), jnp.bfloat16),
        compiler_params=_cparams(("parallel", "parallel")),
    )(lengths.astype(jnp.int32), val, gate, w, b.reshape(1, C),
      bn_scale.reshape(1, C), bn_shift.reshape(1, C))


def conv_module(p, x, lengths):
    B, T, d = x.shape
    x2 = x.reshape(B * T, d)
    # pointwise conv1 split into value/gate halves (== torch GLU split of 2d channels)
    val = matmul_bias(x2, p["pw1_w_val"], p["pw1_b_val"]).reshape(B, T, d)
    gate = matmul_bias(x2, p["pw1_w_gate"], p["pw1_b_gate"]).reshape(B, T, d)
    bn_scale = p["bn_g"] / jnp.sqrt(p["bn_rv"] + 1e-5)
    bn_shift = p["bn_b"] - p["bn_rm"] * bn_scale
    h = glu_dwconv_bn_swish(val, gate, lengths, p["dw_w"], p["dw_b"], bn_scale, bn_shift)
    out = matmul_bias(h.reshape(B * T, d), p["pw2_w"], p["pw2_b"]).reshape(B, T, d)
    return out


# ----------------------------------------------------------------------------
# Feed-forward, layer, encoder
# ----------------------------------------------------------------------------

def feed_forward(p, x2d):
    h = matmul_bias(x2d, p["w1"], p["b1"], activation="swish")
    return matmul_bias(h, p["w2"], p["b2"])


def conformer_layer(p, x, pos_emb, lengths, n_heads, tq):
    B, T, d = x.shape
    x2 = x.reshape(B * T, d)
    # FF1 (half-step)
    h = layer_norm(x2, p["ln_ff1_g"], p["ln_ff1_b"])
    h = feed_forward(p["ff1"], h)
    residual = (x2 + 0.5 * h).astype(jnp.bfloat16)
    # MHSA (relative positional)
    h = layer_norm(residual, p["ln_att_g"], p["ln_att_b"]).reshape(B, T, d)
    h = rel_mha(p["att"], h, pos_emb, lengths, n_heads, tq)
    residual = (residual + h.reshape(B * T, d)).astype(jnp.bfloat16)
    # Conv module
    h = layer_norm(residual, p["ln_conv_g"], p["ln_conv_b"]).reshape(B, T, d)
    h = conv_module(p["conv"], h, lengths)
    residual = (residual + h.reshape(B * T, d)).astype(jnp.bfloat16)
    # FF2 (half-step)
    h = layer_norm(residual, p["ln_ff2_g"], p["ln_ff2_b"])
    h = feed_forward(p["ff2"], h)
    residual = (residual + 0.5 * h).astype(jnp.bfloat16)
    # final norm
    out = layer_norm(residual, p["ln_out_g"], p["ln_out_b"])
    return out.reshape(B, T, d)


def pre_encode(p, x, lengths):
    """ConvSubsampling (striding, factor 4): (B,T,feat_in) -> (B,T//4,d_model)."""
    B, T, F = x.shape
    xi = x[:, None, :, :]                                              # NCHW
    # TODO(synk): the two 3x3/stride-2 convs use XLA's native conv (avoids a 9x
    # im2col HBM intermediate); an in-kernel im2col matmul is a future step.
    h = lax.conv_general_dilated(
        xi, p["conv1_w"], (2, 2), ((1, 1), (1, 1)),
        dimension_numbers=("NCHW", "OIHW", "NCHW"))
    h = jax.nn.relu(h + p["conv1_b"][None, :, None, None])
    h = lax.conv_general_dilated(
        h, p["conv2_w"], (2, 2), ((1, 1), (1, 1)),
        dimension_numbers=("NCHW", "OIHW", "NCHW"))
    h = jax.nn.relu(h + p["conv2_b"][None, :, None, None])
    _, C, T2, F2 = h.shape
    h = jnp.transpose(h, (0, 2, 1, 3)).reshape(B, T2, C * F2)
    d = p["lin_w"].shape[1]
    h = matmul_bias(h.reshape(B * T2, C * F2), p["lin_w"], p["lin_b"]).reshape(B, T2, d)

    def calc(L):
        return (L + 2 * 1 - 3) // 2 + 1
    lengths = calc(calc(lengths))
    return h, lengths


def make_rel_pe(max_len, d):
    positions = jnp.arange(max_len - 1, -max_len, -1, dtype=jnp.float32)[:, None]
    div_term = jnp.exp(jnp.arange(0, d, 2, dtype=jnp.float32) * (-(math.log(10000.0) / d)))
    pe = jnp.zeros((2 * max_len - 1, d), jnp.float32)
    pe = pe.at[:, 0::2].set(jnp.sin(positions * div_term))
    pe = pe.at[:, 1::2].set(jnp.cos(positions * div_term))
    return pe


def conformer_encoder_forward(params, features, feature_lengths, cfg):
    """features:(B, feat_in, time) -> ((B, d_model, time//4), (B,))."""
    x = jnp.transpose(features, (0, 2, 1)).astype(jnp.float32)
    x, lengths = pre_encode(params["pre"], x, feature_lengths)
    B, T, d = x.shape
    x = (x * math.sqrt(d)).astype(jnp.bfloat16)        # xscale; dropouts identity

    tq = min(128, _round_up(T, 8))
    T_pad = _round_up(T, tq)
    if T_pad != T:
        x = jnp.pad(x, ((0, 0), (0, T_pad - T), (0, 0)))

    max_len = cfg["pos_emb_max_len"]
    assert max_len >= T_pad, "pos_emb_max_len must cover the (padded) sequence length"
    P = 2 * T_pad - 1
    pos_emb = params["pe"][max_len - T_pad: max_len + T_pad - 1]       # (P, d) f32
    P_pad = _round_up(P, 128)
    if P_pad != P:
        pos_emb = jnp.pad(pos_emb, ((0, P_pad - P), (0, 0)))

    for lp in params["layers"]:
        x = conformer_layer(lp, x, pos_emb, lengths, cfg["n_heads"], tq)

    x = x[:, :T].astype(jnp.float32)
    return jnp.transpose(x, (0, 2, 1)), lengths


# ----------------------------------------------------------------------------
# Deterministic parameter init (synthetic; weights pre-cast to bf16)
# ----------------------------------------------------------------------------

def _normal(key, shape, scale=0.02):
    return (scale * jax.random.normal(key, shape)).astype(jnp.float32)


def init_params(key, cfg):
    feat_in, d = cfg["feat_in"], cfg["d_model"]
    C = cfg["sampling_conv_channels"]
    dff = d * cfg["ff_expansion_factor"]
    K = cfg["conv_kernel_size"]
    keys = iter(jax.random.split(key, 512))

    def nk():
        return next(keys)

    def dense(din, dout, bias=True):
        w = _normal(nk(), (din, dout)).astype(jnp.bfloat16)
        b = _normal(nk(), (dout,)) if bias else jnp.zeros((dout,), jnp.float32)
        return w, b

    f1 = (feat_in - 1) // 2 + 1
    f2 = (f1 - 1) // 2 + 1
    pre = {
        "conv1_w": _normal(nk(), (C, 1, 3, 3)),
        "conv1_b": _normal(nk(), (C,)),
        "conv2_w": _normal(nk(), (C, C, 3, 3)),
        "conv2_b": _normal(nk(), (C,)),
    }
    pre["lin_w"], pre["lin_b"] = dense(C * f2, d)

    layers = []
    for _ in range(cfg["n_layers"]):
        att = {}
        att["wq"], att["bq"] = dense(d, d)
        att["wk"], att["bk"] = dense(d, d)
        att["wv"], att["bv"] = dense(d, d)
        att["w_pos"], _ = dense(d, d, bias=False)
        att["wo"], att["bo"] = dense(d, d)
        att["pos_bias_u"] = _normal(nk(), (1, d))      # (H, dk) flattened head-major
        att["pos_bias_v"] = _normal(nk(), (1, d))
        ff1 = {}
        ff1["w1"], ff1["b1"] = dense(d, dff)
        ff1["w2"], ff1["b2"] = dense(dff, d)
        ff2 = {}
        ff2["w1"], ff2["b1"] = dense(d, dff)
        ff2["w2"], ff2["b2"] = dense(dff, d)
        conv = {}
        conv["pw1_w_val"], conv["pw1_b_val"] = dense(d, d)     # GLU value half
        conv["pw1_w_gate"], conv["pw1_b_gate"] = dense(d, d)   # GLU gate half
        conv["dw_w"] = _normal(nk(), (K, d))
        conv["dw_b"] = _normal(nk(), (d,))
        conv["bn_g"] = jnp.ones((d,), jnp.float32)
        conv["bn_b"] = jnp.zeros((d,), jnp.float32)
        conv["bn_rm"] = jnp.zeros((d,), jnp.float32)
        conv["bn_rv"] = jnp.ones((d,), jnp.float32)
        conv["pw2_w"], conv["pw2_b"] = dense(d, d)
        lp = {"att": att, "ff1": ff1, "ff2": ff2, "conv": conv}
        for name in ["ff1", "att", "conv", "ff2", "out"]:
            lp[f"ln_{name}_g"] = jnp.ones((d,), jnp.float32)
            lp[f"ln_{name}_b"] = jnp.zeros((d,), jnp.float32)
        layers.append(lp)

    pe = make_rel_pe(cfg["pos_emb_max_len"], d)
    return {"pre": pre, "layers": layers, "pe": pe}


# ----------------------------------------------------------------------------
# Main
# ----------------------------------------------------------------------------

if __name__ == "__main__":
    cfg = dict(
        feat_in=16, d_model=32, n_layers=2, pos_emb_max_len=64,
        sampling_conv_channels=32, ff_expansion_factor=4,
        n_heads=4, conv_kernel_size=31,
    )
    key = jax.random.PRNGKey(0)
    pkey, xkey = jax.random.split(key)
    params = init_params(pkey, cfg)

    # Resolve the fused-rel-shift capability probe before tracing the jitted forward.
    _ = _strided_roll_supported()

    B, T_in = 2, 32
    features = jax.random.normal(xkey, (B, cfg["feat_in"], T_in), dtype=jnp.float32)
    feature_lengths = jnp.array([32, 24], dtype=jnp.int32)

    fwd = jax.jit(lambda p, f, l: conformer_encoder_forward(p, f, l, cfg))
    out_feats, out_lens = fwd(params, features, feature_lengths)
    jax.block_until_ready((out_feats, out_lens))

    assert out_feats.shape == (B, cfg["d_model"], 8), out_feats.shape
    assert out_lens.shape == (B,), out_lens.shape
    print("KERNEL_OK")
</pallas_src>

<mosaic_0001>
module attributes {stable_mosaic.version = 11 : i64} {
  func.func @_matmul_bias_kernel(%arg0: i32, %arg1: i32, %arg2: i32, %arg3: memref<16x128xbf16, #tpu.memory_space<vmem>>, %arg4: memref<128x128xbf16, #tpu.memory_space<vmem>>, %arg5: memref<1x128xf32, #tpu.memory_space<vmem>>, %arg6: memref<16x128xbf16, #tpu.memory_space<vmem>>, %arg7: memref<16x128xf32, #tpu.memory_space<vmem>>) attributes {dimension_semantics = [#tpu.dimension_semantics<parallel>, #tpu.dimension_semantics<parallel>, #tpu.dimension_semantics<arbitrary>], iteration_bounds = array<i64: 1, 1, 1>, scalar_prefetch = 0 : i64, scratch_operands = 1 : i64, tpu.core_type = #tpu.core_type<tc>, window_params = [{transform_indices = @transform_0, window_bounds = array<i64: 16, 128>}, {transform_indices = @transform_1, window_bounds = array<i64: 128, 128>}, {transform_indices = @transform_2, window_bounds = array<i64: 1, 128>}, {transform_indices = @transform_3, window_bounds = array<i64: 16, 128>}]} {
    %c0_i32 = arith.constant 0 : i32
    %0 = arith.cmpi eq, %arg2, %c0_i32 : i32
    %1 = arith.extui %0 : i1 to i32
    %c0_i32_0 = arith.constant 0 : i32
    %2 = arith.cmpi ne, %1, %c0_i32_0 : i32
    scf.if %2 {
      %cst_10 = arith.constant 0.000000e+00 : f32
      %12 = vector.broadcast %cst_10 : f32 to vector<16x128xf32>
      %c0_11 = arith.constant 0 : index
      %c0_12 = arith.constant 0 : index
      %13 = vector.load %arg7[%c0_11, %c0_12] : memref<16x128xf32, #tpu.memory_space<vmem>>, vector<16x128xf32>
      tpu.vector_store %arg7[%c0_11, %c0_12], %12 {strides = array<i32>} : memref<16x128xf32, #tpu.memory_space<vmem>>, vector<16x128xf32>,
    } else {
    }
    %c0 = arith.constant 0 : index
    %c0_1 = arith.constant 0 : index
    %3 = vector.load %arg7[%c0, %c0_1] : memref<16x128xf32, #tpu.memory_space<vmem>>, vector<16x128xf32>
    %c0_2 = arith.constant 0 : index
    %c0_3 = arith.constant 0 : index
    %4 = vector.load %arg3[%c0_2, %c0_3] : memref<16x128xbf16, #tpu.memory_space<vmem>>, vector<16x128xbf16>
    %c0_4 = arith.constant 0 : index
    %c0_5 = arith.constant 0 : index
    %5 = vector.load %arg4[%c0_4, %c0_5] : memref<128x128xbf16, #tpu.memory_space<vmem>>, vector<128x128xbf16>
    %cst = arith.constant dense<0.000000e+00> : vector<16x128xf32>
    %6 = tpu.matmul %4, %5, %cst {dimension_numbers = #tpu.dot_dimension_numbers<[1], [0], [0], [1], [0, 0, 1, 1], [], []>} : vector<16x128xbf16>, vector<128x128xbf16>, vector<16x128xf32> -> vector<16x128xf32>
    %7 = arith.addf %3, %6 : vector<16x128xf32>
    %c0_6 = arith.constant 0 : index
    %c0_7 = arith.constant 0 : index
    %8 = vector.load %arg7[%c0_6, %c0_7] : memref<16x128xf32, #tpu.memory_space<vmem>>, vector<16x128xf32>
    tpu.vector_store %arg7[%c0_6, %c0_7], %7 {strides = array<i32>} : memref<16x128xf32, #tpu.memory_space<vmem>>, vector<16x128xf32>,
    %c0_i32_8 = arith.constant 0 : i32
    %9 = arith.cmpi eq, %arg2, %c0_i32_8 : i32
    %10 = arith.extui %9 : i1 to i32
    %c0_i32_9 = arith.constant 0 : i32
    %11 = arith.cmpi ne, %10, %c0_i32_9 : i32
    scf.if %11 {
      %c0_10 = arith.constant 0 : index
      %c0_11 = arith.constant 0 : index
      %12 = vector.load %arg7[%c0_10, %c0_11] : memref<16x128xf32, #tpu.memory_space<vmem>>, vector<16x128xf32>
      %c0_12 = arith.constant 0 : index
      %c0_13 = arith.constant 0 : index
      %13 = vector.load %arg5[%c0_12, %c0_13] : memref<1x128xf32, #tpu.memory_space<vmem>>, vector<1x128xf32>
      %14 = vector.broadcast %13 : vector<1x128xf32> to vector<16x128xf32>
      %15 = arith.addf %12, %14 : vector<16x128xf32>
      %16 = arith.truncf %15 : vector<16x128xf32> to vector<16x128xbf16>
      %c0_14 = arith.constant 0 : index
      %c0_15 = arith.constant 0 : index
      %17 = vector.load %arg6[%c0_14, %c0_15] : memref<16x128xbf16, #tpu.memory_space<vmem>>, vector<16x128xbf16>
      tpu.vector_store %arg6[%c0_14, %c0_15], %16 {strides = array<i32>} : memref<16x128xbf16, #tpu.memory_space<vmem>>, vector<16x128xbf16>,
    } else {
    }
    return
  }
  func.func @transform_0(%arg0: i32, %arg1: i32, %arg2: i32) -> (i32, i32) {
    %c0_i32 = arith.constant 0 : i32
    return %arg0, %arg2 : i32, i32
  }
  func.func @transform_1(%arg0: i32, %arg1: i32, %arg2: i32) -> (i32, i32) {
    %c0_i32 = arith.constant 0 : i32
    return %arg2, %arg1 : i32, i32
  }
  func.func @transform_2(%arg0: i32, %arg1: i32, %arg2: i32) -> (i32, i32) {
    %c0_i32 = arith.constant 0 : i32
    %c0_i32_0 = arith.constant 0 : i32
    return %c0_i32, %arg1 : i32, i32
  }
  func.func @transform_3(%arg0: i32, %arg1: i32, %arg2: i32) -> (i32, i32) {
    %c0_i32 = arith.constant 0 : i32
    return %arg0, %arg1 : i32, i32
  }
}

module attributes {stable_mosaic.version = 11 : i64} {
  func.func @_layernorm_kernel(%arg0: i32, %arg1: memref<16x32xbf16, #tpu.memory_space<vmem>>, %arg2: memref<1x32xf32, #tpu.memory_space<vmem>>, %arg3: memref<1x32xf32, #tpu.memory_space<vmem>>, %arg4: memref<16x32xbf16, #tpu.memory_space<vmem>>) attributes {dimension_semantics = [#tpu.dimension_semantics<parallel>], iteration_bounds = array<i64: 1>, scalar_prefetch = 0 : i64, scratch_operands = 0 : i64, tpu.core_type = #tpu.core_type<tc>, window_params = [{transform_indices = @transform_0, window_bounds = array<i64: 16, 32>}, {pipeline_mode = #tpu.pipeline_mode<synchronous>, transform_indices = @transform_1, window_bounds = array<i64: 1, 32>}, {pipeline_mode = #tpu.pipeline_mode<synchronous>, transform_indices = @transform_2, window_bounds = array<i64: 1, 32>}, {transform_indices = @transform_3, window_bounds = array<i64: 16, 32>}]} {
    %c0 = arith.constant 0 : index
    %c0_0 = arith.constant 0 : index
    %0 = vector.load %arg1[%c0, %c0_0] : memref<16x32xbf16, #tpu.memory_space<vmem>>, vector<16x32xbf16>
    %1 = arith.extf %0 : vector<16x32xbf16> to vector<16x32xf32>
    %cst = arith.constant dense<0.000000e+00> : vector<16xf32>
    %2 = vector.multi_reduction <add>, %1, %cst [1] : vector<16x32xf32> to vector<16xf32>
    %3 = vector.shape_cast %2 : vector<16xf32> to vector<16x1xf32>
    %cst_1 = arith.constant 3.200000e+01 : f32
    %4 = vector.broadcast %cst_1 : f32 to vector<16x1xf32>
    %5 = arith.divf %3, %4 : vector<16x1xf32>
    %6 = vector.broadcast %5 : vector<16x1xf32> to vector<16x32xf32>
    %7 = arith.subf %1, %6 : vector<16x32xf32>
    %8 = arith.mulf %7, %7 : vector<16x32xf32>
    %cst_2 = arith.constant dense<0.000000e+00> : vector<16xf32>
    %9 = vector.multi_reduction <add>, %8, %cst_2 [1] : vector<16x32xf32> to vector<16xf32>
    %10 = vector.shape_cast %9 : vector<16xf32> to vector<16x1xf32>
    %cst_3 = arith.constant 3.200000e+01 : f32
    %11 = vector.broadcast %cst_3 : f32 to vector<16x1xf32>
    %12 = arith.divf %10, %11 : vector<16x1xf32>
    %13 = vector.broadcast %5 : vector<16x1xf32> to vector<16x32xf32>
    %14 = arith.subf %1, %13 : vector<16x32xf32>
    %cst_4 = arith.constant 9.99999974E-6 : f32
    %15 = vector.broadcast %cst_4 : f32 to vector<16x1xf32>
    %16 = arith.addf %12, %15 : vector<16x1xf32>
    %17 = math.rsqrt %16 : vector<16x1xf32>
    %18 = vector.broadcast %17 : vector<16x1xf32> to vector<16x32xf32>
    %19 = arith.mulf %14, %18 : vector<16x32xf32>
    %c0_5 = arith.constant 0 : index
    %c0_6 = arith.constant 0 : index
    %20 = vector.load %arg2[%c0_5, %c0_6] : memref<1x32xf32, #tpu.memory_space<vmem>>, vector<1x32xf32>
    %21 = vector.broadcast %20 : vector<1x32xf32> to vector<16x32xf32>
    %22 = arith.mulf %19, %21 : vector<16x32xf32>
    %c0_7 = arith.constant 0 : index
    %c0_8 = arith.constant 0 : index
    %23 = vector.load %arg3[%c0_7, %c0_8] : memref<1x32xf32, #tpu.memory_space<vmem>>, vector<1x32xf32>
    %24 = vector.broadcast %23 : vector<1x32xf32> to vector<16x32xf32>
    %25 = arith.addf %22, %24 : vector<16x32xf32>
    %26 = arith.truncf %25 : vector<16x32xf32> to vector<16x32xbf16>
    %c0_9 = arith.constant 0 : index
    %c0_10 = arith.constant 0 : index
    %27 = vector.load %arg4[%c0_9, %c0_10] : memref<16x32xbf16, #tpu.memory_space<vmem>>, vector<16x32xbf16>
    tpu.vector_store %arg4[%c0_9, %c0_10], %26 {strides = array<i32>} : memref<16x32xbf16, #tpu.memory_space<vmem>>, vector<16x32xbf16>,
    return
  }
  func.func @transform_0(%arg0: i32) -> (i32, i32) {
    %c0_i32 = arith.constant 0 : i32
    %c0_i32_0 = arith.constant 0 : i32
    return %arg0, %c0_i32 : i32, i32
  }
  func.func @transform_1(%arg0: i32) -> (i32, i32) {
    %c0_i32 = arith.constant 0 : i32
    %c0_i32_0 = arith.constant 0 : i32
    %c0_i32_1 = arith.constant 0 : i32
    return %c0_i32, %c0_i32_0 : i32, i32
  }
  func.func @transform_2(%arg0: i32) -> (i32, i32) {
    %c0_i32 = arith.constant 0 : i32
    %c0_i32_0 = arith.constant 0 : i32
    %c0_i32_1 = arith.constant 0 : i32
    return %c0_i32, %c0_i32_0 : i32, i32
  }
  func.func @transform_3(%arg0: i32) -> (i32, i32) {
    %c0_i32 = arith.constant 0 : i32
    %c0_i32_0 = arith.constant 0 : i32
    return %arg0, %c0_i32 : i32, i32
  }
}

module attributes {stable_mosaic.version = 11 : i64} {
  func.func @_matmul_bias_kernel(%arg0: i32, %arg1: i32, %arg2: i32, %arg3: memref<16x128xbf16, #tpu.memory_space<vmem>>, %arg4: memref<128x128xbf16, #tpu.memory_space<vmem>>, %arg5: memref<1x128xf32, #tpu.memory_space<vmem>>, %arg6: memref<16x128xbf16, #tpu.memory_space<vmem>>, %arg7: memref<16x128xf32, #tpu.memory_space<vmem>>) attributes {dimension_semantics = [#tpu.dimension_semantics<parallel>, #tpu.dimension_semantics<parallel>, #tpu.dimension_semantics<arbitrary>], iteration_bounds = array<i64: 1, 1, 1>, scalar_prefetch = 0 : i64, scratch_operands = 1 : i64, tpu.core_type = #tpu.core_type<tc>, window_params = [{transform_indices = @transform_0, window_bounds = array<i64: 16, 128>}, {transform_indices = @transform_1, window_bounds = array<i64: 128, 128>}, {transform_indices = @transform_2, window_bounds = array<i64: 1, 128>}, {transform_indices = @transform_3, window_bounds = array<i64: 16, 128>}]} {
    %c0_i32 = arith.constant 0 : i32
    %0 = arith.cmpi eq, %arg2, %c0_i32 : i32
    %1 = arith.extui %0 : i1 to i32
    %c0_i32_0 = arith.constant 0 : i32
    %2 = arith.cmpi ne, %1, %c0_i32_0 : i32
    scf.if %2 {
      %cst_10 = arith.constant 0.000000e+00 : f32
      %12 = vector.broadcast %cst_10 : f32 to vector<16x128xf32>
      %c0_11 = arith.constant 0 : index
      %c0_12 = arith.constant 0 : index
      %13 = vector.load %arg7[%c0_11, %c0_12] : memref<16x128xf32, #tpu.memory_space<vmem>>, vector<16x128xf32>
      tpu.vector_store %arg7[%c0_11, %c0_12], %12 {strides = array<i32>} : memref<16x128xf32, #tpu.memory_space<vmem>>, vector<16x128xf32>,
    } else {
    }
    %c0 = arith.constant 0 : index
    %c0_1 = arith.constant 0 : index
    %3 = vector.load %arg7[%c0, %c0_1] : memref<16x128xf32, #tpu.memory_space<vmem>>, vector<16x128xf32>
    %c0_2 = arith.constant 0 : index
    %c0_3 = arith.constant 0 : index
    %4 = vector.load %arg3[%c0_2, %c0_3] : memref<16x128xbf16, #tpu.memory_space<vmem>>, vector<16x128xbf16>
    %c0_4 = arith.constant 0 : index
    %c0_5 = arith.constant 0 : index
    %5 = vector.load %arg4[%c0_4, %c0_5] : memref<128x128xbf16, #tpu.memory_space<vmem>>, vector<128x128xbf16>
    %cst = arith.constant dense<0.000000e+00> : vector<16x128xf32>
    %6 = tpu.matmul %4, %5, %cst {dimension_numbers = #tpu.dot_dimension_numbers<[1], [0], [0], [1], [0, 0, 1, 1], [], []>} : vector<16x128xbf16>, vector<128x128xbf16>, vector<16x128xf32> -> vector<16x128xf32>
    %7 = arith.addf %3, %6 : vector<16x128xf32>
    %c0_6 = arith.constant 0 : index
    %c0_7 = arith.constant 0 : index
    %8 = vector.load %arg7[%c0_6, %c0_7] : memref<16x128xf32, #tpu.memory_space<vmem>>, vector<16x128xf32>
    tpu.vector_store %arg7[%c0_6, %c0_7], %7 {strides = array<i32>} : memref<16x128xf32, #tpu.memory_space<vmem>>, vector<16x128xf32>,
    %c0_i32_8 = arith.constant 0 : i32
    %9 = arith.cmpi eq, %arg2, %c0_i32_8 : i32
    %10 = arith.extui %9 : i1 to i32
    %c0_i32_9 = arith.constant 0 : i32
    %11 = arith.cmpi ne, %10, %c0_i32_9 : i32
    scf.if %11 {
      %c0_10 = arith.constant 0 : index
      %c0_11 = arith.constant 0 : index
      %12 = vector.load %arg7[%c0_10, %c0_11] : memref<16x128xf32, #tpu.memory_space<vmem>>, vector<16x128xf32>
      %c0_12 = arith.constant 0 : index
      %c0_13 = arith.constant 0 : index
      %13 = vector.load %arg5[%c0_12, %c0_13] : memref<1x128xf32, #tpu.memory_space<vmem>>, vector<1x128xf32>
      %14 = vector.broadcast %13 : vector<1x128xf32> to vector<16x128xf32>
      %15 = arith.addf %12, %14 : vector<16x128xf32>
      %16 = arith.negf %15 : vector<16x128xf32>
      %17 = math.exp %16 : vector<16x128xf32>
      %cst_14 = arith.constant 1.000000e+00 : f32
      %18 = vector.broadcast %cst_14 : f32 to vector<16x128xf32>
      %19 = arith.addf %18, %17 : vector<16x128xf32>
      %20 = arith.divf %18, %19 : vector<16x128xf32>
      %21 = arith.mulf %15, %20 : vector<16x128xf32>
      %22 = arith.truncf %21 : vector<16x128xf32> to vector<16x128xbf16>
      %c0_15 = arith.constant 0 : index
      %c0_16 = arith.constant 0 : index
      %23 = vector.load %arg6[%c0_15, %c0_16] : memref<16x128xbf16, #tpu.memory_space<vmem>>, vector<16x128xbf16>
      tpu.vector_store %arg6[%c0_15, %c0_16], %22 {strides = array<i32>} : memref<16x128xbf16, #tpu.memory_space<vmem>>, vector<16x128xbf16>,
    } else {
    }
    return
  }
  func.func @transform_0(%arg0: i32, %arg1: i32, %arg2: i32) -> (i32, i32) {
    %c0_i32 = arith.constant 0 : i32
    return %arg0, %arg2 : i32, i32
  }
  func.func @transform_1(%arg0: i32, %arg1: i32, %arg2: i32) -> (i32, i32) {
    %c0_i32 = arith.constant 0 : i32
    return %arg2, %arg1 : i32, i32
  }
  func.func @transform_2(%arg0: i32, %arg1: i32, %arg2: i32) -> (i32, i32) {
    %c0_i32 = arith.constant 0 : i32
    %c0_i32_0 = arith.constant 0 : i32
    return %c0_i32, %arg1 : i32, i32
  }
  func.func @transform_3(%arg0: i32, %arg1: i32, %arg2: i32) -> (i32, i32) {
    %c0_i32 = arith.constant 0 : i32
    return %arg0, %arg1 : i32, i32
  }
}

module attributes {stable_mosaic.version = 11 : i64} {
  func.func @_matmul_bias_kernel(%arg0: i32, %arg1: i32, %arg2: i32, %arg3: memref<128x128xbf16, #tpu.memory_space<vmem>>, %arg4: memref<128x128xbf16, #tpu.memory_space<vmem>>, %arg5: memref<1x128xf32, #tpu.memory_space<vmem>>, %arg6: memref<128x128xbf16, #tpu.memory_space<vmem>>, %arg7: memref<128x128xf32, #tpu.memory_space<vmem>>) attributes {dimension_semantics = [#tpu.dimension_semantics<parallel>, #tpu.dimension_semantics<parallel>, #tpu.dimension_semantics<arbitrary>], iteration_bounds = array<i64: 1, 1, 1>, scalar_prefetch = 0 : i64, scratch_operands = 1 : i64, tpu.core_type = #tpu.core_type<tc>, window_params = [{transform_indices = @transform_0, window_bounds = array<i64: 128, 128>}, {transform_indices = @transform_1, window_bounds = array<i64: 128, 128>}, {transform_indices = @transform_2, window_bounds = array<i64: 1, 128>}, {transform_indices = @transform_3, window_bounds = array<i64: 128, 128>}]} {
    %c0_i32 = arith.constant 0 : i32
    %0 = arith.cmpi eq, %arg2, %c0_i32 : i32
    %1 = arith.extui %0 : i1 to i32
    %c0_i32_0 = arith.constant 0 : i32
    %2 = arith.cmpi ne, %1, %c0_i32_0 : i32
    scf.if %2 {
      %cst_10 = arith.constant 0.000000e+00 : f32
      %12 = vector.broadcast %cst_10 : f32 to vector<128x128xf32>
      %c0_11 = arith.constant 0 : index
      %c0_12 = arith.constant 0 : index
      %13 = vector.load %arg7[%c0_11, %c0_12] : memref<128x128xf32, #tpu.memory_space<vmem>>, vector<128x128xf32>
      tpu.vector_store %arg7[%c0_11, %c0_12], %12 {strides = array<i32>} : memref<128x128xf32, #tpu.memory_space<vmem>>, vector<128x128xf32>,
    } else {
    }
    %c0 = arith.constant 0 : index
    %c0_1 = arith.constant 0 : index
    %3 = vector.load %arg7[%c0, %c0_1] : memref<128x128xf32, #tpu.memory_space<vmem>>, vector<128x128xf32>
    %c0_2 = arith.constant 0 : index
    %c0_3 = arith.constant 0 : index
    %4 = vector.load %arg3[%c0_2, %c0_3] : memref<128x128xbf16, #tpu.memory_space<vmem>>, vector<128x128xbf16>
    %c0_4 = arith.constant 0 : index
    %c0_5 = arith.constant 0 : index
    %5 = vector.load %arg4[%c0_4, %c0_5] : memref<128x128xbf16, #tpu.memory_space<vmem>>, vector<128x128xbf16>
    %cst = arith.constant dense<0.000000e+00> : vector<128x128xf32>
    %6 = tpu.matmul %4, %5, %cst {dimension_numbers = #tpu.dot_dimension_numbers<[1], [0], [0], [1], [0, 0, 1, 1], [], []>} : vector<128x128xbf16>, vector<128x128xbf16>, vector<128x128xf32> -> vector<128x128xf32>
    %7 = arith.addf %3, %6 : vector<128x128xf32>
    %c0_6 = arith.constant 0 : index
    %c0_7 = arith.constant 0 : index
    %8 = vector.load %arg7[%c0_6, %c0_7] : memref<128x128xf32, #tpu.memory_space<vmem>>, vector<128x128xf32>
    tpu.vector_store %arg7[%c0_6, %c0_7], %7 {strides = array<i32>} : memref<128x128xf32, #tpu.memory_space<vmem>>, vector<128x128xf32>,
    %c0_i32_8 = arith.constant 0 : i32
    %9 = arith.cmpi eq, %arg2, %c0_i32_8 : i32
    %10 = arith.extui %9 : i1 to i32
    %c0_i32_9 = arith.constant 0 : i32
    %11 = arith.cmpi ne, %10, %c0_i32_9 : i32
    scf.if %11 {
      %c0_10 = arith.constant 0 : index
      %c0_11 = arith.constant 0 : index
      %12 = vector.load %arg7[%c0_10, %c0_11] : memref<128x128xf32, #tpu.memory_space<vmem>>, vector<128x128xf32>
      %c0_12 = arith.constant 0 : index
      %c0_13 = arith.constant 0 : index
      %13 = vector.load %arg5[%c0_12, %c0_13] : memref<1x128xf32, #tpu.memory_space<vmem>>, vector<1x128xf32>
      %14 = vector.broadcast %13 : vector<1x128xf32> to vector<128x128xf32>
      %15 = arith.addf %12, %14 : vector<128x128xf32>
      %16 = arith.truncf %15 : vector<128x128xf32> to vector<128x128xbf16>
      %c0_14 = arith.constant 0 : index
      %c0_15 = arith.constant 0 : index
      %17 = vector.load %arg6[%c0_14, %c0_15] : memref<128x128xbf16, #tpu.memory_space<vmem>>, vector<128x128xbf16>
      tpu.vector_store %arg6[%c0_14, %c0_15], %16 {strides = array<i32>} : memref<128x128xbf16, #tpu.memory_space<vmem>>, vector<128x128xbf16>,
    } else {
    }
    return
  }
  func.func @transform_0(%arg0: i32, %arg1: i32, %arg2: i32) -> (i32, i32) {
    %c0_i32 = arith.constant 0 : i32
    return %arg0, %arg2 : i32, i32
  }
  func.func @transform_1(%arg0: i32, %arg1: i32, %arg2: i32) -> (i32, i32) {
    %c0_i32 = arith.constant 0 : i32
    return %arg2, %arg1 : i32, i32
  }
  func.func @transform_2(%arg0: i32, %arg1: i32, %arg2: i32) -> (i32, i32) {
    %c0_i32 = arith.constant 0 : i32
    %c0_i32_0 = arith.constant 0 : i32
    return %c0_i32, %arg1 : i32, i32
  }
  func.func @transform_3(%arg0: i32, %arg1: i32, %arg2: i32) -> (i32, i32) {
    %c0_i32 = arith.constant 0 : i32
    return %arg0, %arg1 : i32, i32
  }
}

module attributes {stable_mosaic.version = 11 : i64} {
  func.func @_rel_attn_kernel(%arg0: i32, %arg1: i32, %arg2: i32, %arg3: memref<2xi32, #tpu.memory_space<smem>>, %arg4: memref<1x8x32xbf16, #tpu.memory_space<vmem>>, %arg5: memref<1x8x32xbf16, #tpu.memory_space<vmem>>, %arg6: memref<1x8x32xbf16, #tpu.memory_space<vmem>>, %arg7: memref<1x4x8x8xbf16, #tpu.memory_space<vmem>>, %arg8: memref<1x32xf32, #tpu.memory_space<vmem>>, %arg9: memref<1x32xf32, #tpu.memory_space<vmem>>, %arg10: memref<1x8x32xbf16, #tpu.memory_space<vmem>>) attributes {dimension_semantics = [#tpu.dimension_semantics<parallel>, #tpu.dimension_semantics<parallel>, #tpu.dimension_semantics<parallel>], iteration_bounds = array<i64: 2, 1, 1>, scalar_prefetch = 0 : i64, scratch_operands = 0 : i64, tpu.core_type = #tpu.core_type<tc>, window_params = [{transform_indices = @transform_0, window_bounds = array<i64: 2>}, {transform_indices = @transform_1, window_bounds = array<i64: 1, 8, 32>}, {transform_indices = @transform_2, window_bounds = array<i64: 1, 8, 32>}, {transform_indices = @transform_3, window_bounds = array<i64: 1, 8, 32>}, {transform_indices = @transform_4, window_bounds = array<i64: 1, 4, 8, 8>}, {transform_indices = @transform_5, window_bounds = array<i64: 1, 32>}, {transform_indices = @transform_6, window_bounds = array<i64: 1, 32>}, {transform_indices = @transform_7, window_bounds = array<i64: 1, 8, 32>}]} {
    %c8_i32 = arith.constant 8 : i32
    %0 = arith.muli %arg2, %c8_i32 : i32
    %1 = arith.index_cast %arg0 : i32 to index
    %2 = memref.load %arg3[%1] : memref<2xi32, #tpu.memory_space<smem>>
    %3 = tpu.iota {dimensions = array<i32: 0>} : vector<8x1xi32>
    %4 = vector.broadcast %0 : i32 to vector<8x1xi32>
    %5 = arith.addi %4, %3 : vector<8x1xi32>
    %6 = tpu.iota {dimensions = array<i32: 1>} : vector<1x8xi32>
    %7 = vector.broadcast %2 : i32 to vector<8x1xi32>
    %8 = arith.cmpi sge, %5, %7 : vector<8x1xi32>
    %9 = vector.broadcast %2 : i32 to vector<1x8xi32>
    %10 = arith.cmpi sge, %6, %9 : vector<1x8xi32>
    %11 = vector.broadcast %8 : vector<8x1xi1> to vector<8x8xi1>
    %12 = vector.broadcast %10 : vector<1x8xi1> to vector<8x8xi1>
    %13 = arith.ori %11, %12 : vector<8x8xi1>
    %c0 = arith.constant 0 : index
    %c0_0 = arith.constant 0 : index
    %c0_1 = arith.constant 0 : index
    %14 = vector.load %arg4[%c0, %c0_0, %c0_1] : memref<1x8x32xbf16, #tpu.memory_space<vmem>>, vector<1x8x32xbf16>
    %15 = vector.shape_cast %14 : vector<1x8x32xbf16> to vector<8x32xbf16>
    %c0_2 = arith.constant 0 : index
    %c0_3 = arith.constant 0 : index
    %c0_4 = arith.constant 0 : index
    %16 = vector.load %arg5[%c0_2, %c0_3, %c0_4] : memref<1x8x32xbf16, #tpu.memory_space<vmem>>, vector<1x8x32xbf16>
    %17 = vector.shape_cast %16 : vector<1x8x32xbf16> to vector<8x32xbf16>
    %c0_5 = arith.constant 0 : index
    %c0_6 = arith.constant 0 : index
    %c0_7 = arith.constant 0 : index
    %18 = vector.load %arg6[%c0_5, %c0_6, %c0_7] : memref<1x8x32xbf16, #tpu.memory_space<vmem>>, vector<1x8x32xbf16>
    %19 = vector.shape_cast %18 : vector<1x8x32xbf16> to vector<8x32xbf16>
    %c0_8 = arith.constant 0 : index
    %c0_9 = arith.constant 0 : index
    %20 = vector.load %arg8[%c0_8, %c0_9] : memref<1x32xf32, #tpu.memory_space<vmem>>, vector<1x32xf32>
    %21 = vector.extract_strided_slice %15 {offsets = [0, 0], sizes = [8, 8], strides = [1, 1]} : vector<8x32xbf16> to vector<8x8xbf16>
    %22 = arith.extf %21 : vector<8x8xbf16> to vector<8x8xf32>
    %23 = vector.extract_strided_slice %20 {offsets = [0, 0], sizes = [1, 8], strides = [1, 1]} : vector<1x32xf32> to vector<1x8xf32>
    %24 = vector.broadcast %23 : vector<1x8xf32> to vector<8x8xf32>
    %25 = arith.addf %22, %24 : vector<8x8xf32>
    %26 = arith.truncf %25 : vector<8x8xf32> to vector<8x8xbf16>
    %27 = vector.extract_strided_slice %17 {offsets = [0, 0], sizes = [8, 8], strides = [1, 1]} : vector<8x32xbf16> to vector<8x8xbf16>
    %28 = vector.extract_strided_slice %19 {offsets = [0, 0], sizes = [8, 8], strides = [1, 1]} : vector<8x32xbf16> to vector<8x8xbf16>
    %cst = arith.constant dense<0.000000e+00> : vector<8x8xf32>
    %29 = tpu.matmul %26, %27, %cst {dimension_numbers = #tpu.dot_dimension_numbers<[1], [1], [0], [0], [0, 0, 1, 0], [], []>} : vector<8x8xbf16>, vector<8x8xbf16>, vector<8x8xf32> -> vector<8x8xf32>
    %c0_10 = arith.constant 0 : index
    %c0_11 = arith.constant 0 : index
    %c0_12 = arith.constant 0 : index
    %c0_13 = arith.constant 0 : index
    %30 = vector.load %arg7[%c0_10, %c0_11, %c0_12, %c0_13] : memref<1x4x8x8xbf16, #tpu.memory_space<vmem>>, vector<1x1x8x8xbf16>
    %31 = vector.shape_cast %30 : vector<1x1x8x8xbf16> to vector<8x8xbf16>
    %32 = arith.extf %31 : vector<8x8xbf16> to vector<8x8xf32>
    %33 = arith.addf %29, %32 : vector<8x8xf32>
    %cst_14 = arith.constant 0.353553385 : f32
    %34 = vector.broadcast %cst_14 : f32 to vector<8x8xf32>
    %35 = arith.mulf %33, %34 : vector<8x8xf32>
    %cst_15 = arith.constant -1.000000e+04 : f32
    %36 = vector.broadcast %cst_15 : f32 to vector<8x8xf32>
    %37 = arith.select %13, %36, %35 : vector<8x8xi1>, vector<8x8xf32>
    %cst_16 = arith.constant dense<0xFF800000> : vector<8xf32>
    %38 = vector.multi_reduction <maximumf>, %37, %cst_16 [1] : vector<8x8xf32> to vector<8xf32>
    %39 = vector.shape_cast %38 : vector<8xf32> to vector<8x1xf32>
    %40 = vector.broadcast %39 : vector<8x1xf32> to vector<8x8xf32>
    %41 = arith.subf %37, %40 : vector<8x8xf32>
    %42 = math.exp %41 : vector<8x8xf32>
    %cst_17 = arith.constant dense<0.000000e+00> : vector<8xf32>
    %43 = vector.multi_reduction <add>, %42, %cst_17 [1] : vector<8x8xf32> to vector<8xf32>
    %44 = vector.shape_cast %43 : vector<8xf32> to vector<8x1xf32>
    %45 = tpu.reciprocal %44 {approx = true} : vector<8x1xf32> -> vector<8x1xf32>
    %46 = vector.broadcast %45 : vector<8x1xf32> to vector<8x8xf32>
    %47 = arith.mulf %42, %46 : vector<8x8xf32>
    %cst_18 = arith.constant 0.000000e+00 : f32
    %48 = vector.shape_cast %8 : vector<8x1xi1> to vector<8x1xi1>
    %49 = vector.broadcast %48 : vector<8x1xi1> to vector<8x8xi1>
    %50 = vector.broadcast %cst_18 : f32 to vector<8x8xf32>
    %51 = arith.select %49, %50, %47 : vector<8x8xi1>, vector<8x8xf32>
    %52 = arith.truncf %51 : vector<8x8xf32> to vector<8x8xbf16>
    %cst_19 = arith.constant dense<0.000000e+00> : vector<8x8xf32>
    %53 = tpu.matmul %52, %28, %cst_19 {dimension_numbers = #tpu.dot_dimension_numbers<[1], [0], [0], [1], [0, 0, 1, 1], [], []>} : vector<8x8xbf16>, vector<8x8xbf16>, vector<8x8xf32> -> vector<8x8xf32>
    %54 = vector.extract_strided_slice %15 {offsets = [0, 8], sizes = [8, 8], strides = [1, 1]} : vector<8x32xbf16> to vector<8x8xbf16>
    %55 = arith.extf %54 : vector<8x8xbf16> to vector<8x8xf32>
    %56 = vector.extract_strided_slice %20 {offsets = [0, 8], sizes = [1, 8], strides = [1, 1]} : vector<1x32xf32> to vector<1x8xf32>
    %57 = vector.broadcast %56 : vector<1x8xf32> to vector<8x8xf32>
    %58 = arith.addf %55, %57 : vector<8x8xf32>
    %59 = arith.truncf %58 : vector<8x8xf32> to vector<8x8xbf16>
    %60 = vector.extract_strided_slice %17 {offsets = [0, 8], sizes = [8, 8], strides = [1, 1]} : vector<8x32xbf16> to vector<8x8xbf16>
    %61 = vector.extract_strided_slice %19 {offsets = [0, 8], sizes = [8, 8], strides = [1, 1]} : vector<8x32xbf16> to vector<8x8xbf16>
    %cst_20 = arith.constant dense<0.000000e+00> : vector<8x8xf32>
    %62 = tpu.matmul %59, %60, %cst_20 {dimension_numbers = #tpu.dot_dimension_numbers<[1], [1], [0], [0], [0, 0, 1, 0], [], []>} : vector<8x8xbf16>, vector<8x8xbf16>, vector<8x8xf32> -> vector<8x8xf32>
    %c0_21 = arith.constant 0 : index
    %c1 = arith.constant 1 : index
    %c0_22 = arith.constant 0 : index
    %c0_23 = arith.constant 0 : index
    %63 = vector.load %arg7[%c0_21, %c1, %c0_22, %c0_23] : memref<1x4x8x8xbf16, #tpu.memory_space<vmem>>, vector<1x1x8x8xbf16>
    %64 = vector.shape_cast %63 : vector<1x1x8x8xbf16> to vector<8x8xbf16>
    %65 = arith.extf %64 : vector<8x8xbf16> to vector<8x8xf32>
    %66 = arith.addf %62, %65 : vector<8x8xf32>
    %cst_24 = arith.constant 0.353553385 : f32
    %67 = vector.broadcast %cst_24 : f32 to vector<8x8xf32>
    %68 = arith.mulf %66, %67 : vector<8x8xf32>
    %cst_25 = arith.constant -1.000000e+04 : f32
    %69 = vector.broadcast %cst_25 : f32 to vector<8x8xf32>
    %70 = arith.select %13, %69, %68 : vector<8x8xi1>, vector<8x8xf32>
    %cst_26 = arith.constant dense<0xFF800000> : vector<8xf32>
    %71 = vector.multi_reduction <maximumf>, %70, %cst_26 [1] : vector<8x8xf32> to vector<8xf32>
    %72 = vector.shape_cast %71 : vector<8xf32> to vector<8x1xf32>
    %73 = vector.broadcast %72 : vector<8x1xf32> to vector<8x8xf32>
    %74 = arith.subf %70, %73 : vector<8x8xf32>
    %75 = math.exp %74 : vector<8x8xf32>
    %cst_27 = arith.constant dense<0.000000e+00> : vector<8xf32>
    %76 = vector.multi_reduction <add>, %75, %cst_27 [1] : vector<8x8xf32> to vector<8xf32>
    %77 = vector.shape_cast %76 : vector<8xf32> to vector<8x1xf32>
    %78 = tpu.reciprocal %77 {approx = true} : vector<8x1xf32> -> vector<8x1xf32>
    %79 = vector.broadcast %78 : vector<8x1xf32> to vector<8x8xf32>
    %80 = arith.mulf %75, %79 : vector<8x8xf32>
    %cst_28 = arith.constant 0.000000e+00 : f32
    %81 = vector.shape_cast %8 : vector<8x1xi1> to vector<8x1xi1>
    %82 = vector.broadcast %81 : vector<8x1xi1> to vector<8x8xi1>
    %83 = vector.broadcast %cst_28 : f32 to vector<8x8xf32>
    %84 = arith.select %82, %83, %80 : vector<8x8xi1>, vector<8x8xf32>
    %85 = arith.truncf %84 : vector<8x8xf32> to vector<8x8xbf16>
    %cst_29 = arith.constant dense<0.000000e+00> : vector<8x8xf32>
    %86 = tpu.matmul %85, %61, %cst_29 {dimension_numbers = #tpu.dot_dimension_numbers<[1], [0], [0], [1], [0, 0, 1, 1], [], []>} : vector<8x8xbf16>, vector<8x8xbf16>, vector<8x8xf32> -> vector<8x8xf32>
    %87 = vector.extract_strided_slice %15 {offsets = [0, 16], sizes = [8, 8], strides = [1, 1]} : vector<8x32xbf16> to vector<8x8xbf16>
    %88 = arith.extf %87 : vector<8x8xbf16> to vector<8x8xf32>
    %89 = vector.extract_strided_slice %20 {offsets = [0, 16], sizes = [1, 8], strides = [1, 1]} : vector<1x32xf32> to vector<1x8xf32>
    %90 = vector.broadcast %89 : vector<1x8xf32> to vector<8x8xf32>
    %91 = arith.addf %88, %90 : vector<8x8xf32>
    %92 = arith.truncf %91 : vector<8x8xf32> to vector<8x8xbf16>
    %93 = vector.extract_strided_slice %17 {offsets = [0, 16], sizes = [8, 8], strides = [1, 1]} : vector<8x32xbf16> to vector<8x8xbf16>
    %94 = vector.extract_strided_slice %19 {offsets = [0, 16], sizes = [8, 8], strides = [1, 1]} : vector<8x32xbf16> to vector<8x8xbf16>
    %cst_30 = arith.constant dense<0.000000e+00> : vector<8x8xf32>
    %95 = tpu.matmul %92, %93, %cst_30 {dimension_numbers = #tpu.dot_dimension_numbers<[1], [1], [0], [0], [0, 0, 1, 0], [], []>} : vector<8x8xbf16>, vector<8x8xbf16>, vector<8x8xf32> -> vector<8x8xf32>
    %c0_31 = arith.constant 0 : index
    %c2 = arith.constant 2 : index
    %c0_32 = arith.constant 0 : index
    %c0_33 = arith.constant 0 : index
    %96 = vector.load %arg7[%c0_31, %c2, %c0_32, %c0_33] : memref<1x4x8x8xbf16, #tpu.memory_space<vmem>>, vector<1x1x8x8xbf16>
    %97 = vector.shape_cast %96 : vector<1x1x8x8xbf16> to vector<8x8xbf16>
    %98 = arith.extf %97 : vector<8x8xbf16> to vector<8x8xf32>
    %99 = arith.addf %95, %98 : vector<8x8xf32>
    %cst_34 = arith.constant 0.353553385 : f32
    %100 = vector.broadcast %cst_34 : f32 to vector<8x8xf32>
    %101 = arith.mulf %99, %100 : vector<8x8xf32>
    %cst_35 = arith.constant -1.000000e+04 : f32
    %102 = vector.broadcast %cst_35 : f32 to vector<8x8xf32>
    %103 = arith.select %13, %102, %101 : vector<8x8xi1>, vector<8x8xf32>
    %cst_36 = arith.constant dense<0xFF800000> : vector<8xf32>
    %104 = vector.multi_reduction <maximumf>, %103, %cst_36 [1] : vector<8x8xf32> to vector<8xf32>
    %105 = vector.shape_cast %104 : vector<8xf32> to vector<8x1xf32>
    %106 = vector.broadcast %105 : vector<8x1xf32> to vector<8x8xf32>
    %107 = arith.subf %103, %106 : vector<8x8xf32>
    %108 = math.exp %107 : vector<8x8xf32>
    %cst_37 = arith.constant dense<0.000000e+00> : vector<8xf32>
    %109 = vector.multi_reduction <add>, %108, %cst_37 [1] : vector<8x8xf32> to vector<8xf32>
    %110 = vector.shape_cast %109 : vector<8xf32> to vector<8x1xf32>
    %111 = tpu.reciprocal %110 {approx = true} : vector<8x1xf32> -> vector<8x1xf32>
    %112 = vector.broadcast %111 : vector<8x1xf32> to vector<8x8xf32>
    %113 = arith.mulf %108, %112 : vector<8x8xf32>
    %cst_38 = arith.constant 0.000000e+00 : f32
    %114 = vector.shape_cast %8 : vector<8x1xi1> to vector<8x1xi1>
    %115 = vector.broadcast %114 : vector<8x1xi1> to vector<8x8xi1>
    %116 = vector.broadcast %cst_38 : f32 to vector<8x8xf32>
    %117 = arith.select %115, %116, %113 : vector<8x8xi1>, vector<8x8xf32>
    %118 = arith.truncf %117 : vector<8x8xf32> to vector<8x8xbf16>
    %cst_39 = arith.constant dense<0.000000e+00> : vector<8x8xf32>
    %119 = tpu.matmul %118, %94, %cst_39 {dimension_numbers = #tpu.dot_dimension_numbers<[1], [0], [0], [1], [0, 0, 1, 1], [], []>} : vector<8x8xbf16>, vector<8x8xbf16>, vector<8x8xf32> -> vector<8x8xf32>
    %120 = vector.extract_strided_slice %15 {offsets = [0, 24], sizes = [8, 8], strides = [1, 1]} : vector<8x32xbf16> to vector<8x8xbf16>
    %121 = arith.extf %120 : vector<8x8xbf16> to vector<8x8xf32>
    %122 = vector.extract_strided_slice %20 {offsets = [0, 24], sizes = [1, 8], strides = [1, 1]} : vector<1x32xf32> to vector<1x8xf32>
    %123 = vector.broadcast %122 : vector<1x8xf32> to vector<8x8xf32>
    %124 = arith.addf %121, %123 : vector<8x8xf32>
    %125 = arith.truncf %124 : vector<8x8xf32> to vector<8x8xbf16>
    %126 = vector.extract_strided_slice %17 {offsets = [0, 24], sizes = [8, 8], strides = [1, 1]} : vector<8x32xbf16> to vector<8x8xbf16>
    %127 = vector.extract_strided_slice %19 {offsets = [0, 24], sizes = [8, 8], strides = [1, 1]} : vector<8x32xbf16> to vector<8x8xbf16>
    %cst_40 = arith.constant dense<0.000000e+00> : vector<8x8xf32>
    %128 = tpu.matmul %125, %126, %cst_40 {dimension_numbers = #tpu.dot_dimension_numbers<[1], [1], [0], [0], [0, 0, 1, 0], [], []>} : vector<8x8xbf16>, vector<8x8xbf16>, vector<8x8xf32> -> vector<8x8xf32>
    %c0_41 = arith.constant 0 : index
    %c3 = arith.constant 3 : index
    %c0_42 = arith.constant 0 : index
    %c0_43 = arith.constant 0 : index
    %129 = vector.load %arg7[%c0_41, %c3, %c0_42, %c0_43] : memref<1x4x8x8xbf16, #tpu.memory_space<vmem>>, vector<1x1x8x8xbf16>
    %130 = vector.shape_cast %129 : vector<1x1x8x8xbf16> to vector<8x8xbf16>
    %131 = arith.extf %130 : vector<8x8xbf16> to vector<8x8xf32>
    %132 = arith.addf %128, %131 : vector<8x8xf32>
    %cst_44 = arith.constant 0.353553385 : f32
    %133 = vector.broadcast %cst_44 : f32 to vector<8x8xf32>
    %134 = arith.mulf %132, %133 : vector<8x8xf32>
    %cst_45 = arith.constant -1.000000e+04 : f32
    %135 = vector.broadcast %cst_45 : f32 to vector<8x8xf32>
    %136 = arith.select %13, %135, %134 : vector<8x8xi1>, vector<8x8xf32>
    %cst_46 = arith.constant dense<0xFF800000> : vector<8xf32>
    %137 = vector.multi_reduction <maximumf>, %136, %cst_46 [1] : vector<8x8xf32> to vector<8xf32>
    %138 = vector.shape_cast %137 : vector<8xf32> to vector<8x1xf32>
    %139 = vector.broadcast %138 : vector<8x1xf32> to vector<8x8xf32>
    %140 = arith.subf %136, %139 : vector<8x8xf32>
    %141 = math.exp %140 : vector<8x8xf32>
    %cst_47 = arith.constant dense<0.000000e+00> : vector<8xf32>
    %142 = vector.multi_reduction <add>, %141, %cst_47 [1] : vector<8x8xf32> to vector<8xf32>
    %143 = vector.shape_cast %142 : vector<8xf32> to vector<8x1xf32>
    %144 = tpu.reciprocal %143 {approx = true} : vector<8x1xf32> -> vector<8x1xf32>
    %145 = vector.broadcast %144 : vector<8x1xf32> to vector<8x8xf32>
    %146 = arith.mulf %141, %145 : vector<8x8xf32>
    %cst_48 = arith.constant 0.000000e+00 : f32
    %147 = vector.shape_cast %8 : vector<8x1xi1> to vector<8x1xi1>
    %148 = vector.broadcast %147 : vector<8x1xi1> to vector<8x8xi1>
    %149 = vector.broadcast %cst_48 : f32 to vector<8x8xf32>
    %150 = arith.select %148, %149, %146 : vector<8x8xi1>, vector<8x8xf32>
    %151 = arith.truncf %150 : vector<8x8xf32> to vector<8x8xbf16>
    %cst_49 = arith.constant dense<0.000000e+00> : vector<8x8xf32>
    %152 = tpu.matmul %151, %127, %cst_49 {dimension_numbers = #tpu.dot_dimension_numbers<[1], [0], [0], [1], [0, 0, 1, 1], [], []>} : vector<8x8xbf16>, vector<8x8xbf16>, vector<8x8xf32> -> vector<8x8xf32>
    %153 = tpu.concatenate %53, %86, %119, %152 in 1 : vector<8x8xf32>, vector<8x8xf32>, vector<8x8xf32>, vector<8x8xf32> -> vector<8x32xf32>
    %154 = arith.truncf %153 : vector<8x32xf32> to vector<8x32xbf16>
    %c0_50 = arith.constant 0 : index
    %c0_51 = arith.constant 0 : index
    %c0_52 = arith.constant 0 : index
    %155 = vector.load %arg10[%c0_50, %c0_51, %c0_52] : memref<1x8x32xbf16, #tpu.memory_space<vmem>>, vector<1x8x32xbf16>
    %156 = vector.shape_cast %155 : vector<1x8x32xbf16> to vector<8x32xbf16>
    %157 = vector.shape_cast %154 : vector<8x32xbf16> to vector<1x8x32xbf16>
    tpu.vector_store %arg10[%c0_50, %c0_51, %c0_52], %157 {strides = array<i32>} : memref<1x8x32xbf16, #tpu.memory_space<vmem>>, vector<1x8x32xbf16>,
    return
  }
  func.func @transform_0(%arg0: i32, %arg1: i32, %arg2: i32) -> i32 {
    %c0_i32 = arith.constant 0 : i32
    %c0_i32_0 = arith.constant 0 : i32
    return %c0_i32 : i32
  }
  func.func @transform_1(%arg0: i32, %arg1: i32, %arg2: i32) -> (i32, i32, i32) {
    %c0_i32 = arith.constant 0 : i32
    return %arg0, %arg2, %arg1 : i32, i32, i32
  }
  func.func @transform_2(%arg0: i32, %arg1: i32, %arg2: i32) -> (i32, i32, i32) {
    %c0_i32 = arith.constant 0 : i32
    %c0_i32_0 = arith.constant 0 : i32
    return %arg0, %c0_i32, %arg1 : i32, i32, i32
  }
  func.func @transform_3(%arg0: i32, %arg1: i32, %arg2: i32) -> (i32, i32, i32) {
    %c0_i32 = arith.constant 0 : i32
    %c0_i32_0 = arith.constant 0 : i32
    return %arg0, %c0_i32, %arg1 : i32, i32, i32
  }
  func.func @transform_4(%arg0: i32, %arg1: i32, %arg2: i32) -> (i32, i32, i32, i32) {
    %c0_i32 = arith.constant 0 : i32
    %c0_i32_0 = arith.constant 0 : i32
    return %arg0, %arg1, %arg2, %c0_i32 : i32, i32, i32, i32
  }
  func.func @transform_5(%arg0: i32, %arg1: i32, %arg2: i32) -> (i32, i32) {
    %c0_i32 = arith.constant 0 : i32
    %c0_i32_0 = arith.constant 0 : i32
    return %c0_i32, %arg1 : i32, i32
  }
  func.func @transform_6(%arg0: i32, %arg1: i32, %arg2: i32) -> (i32, i32) {
    %c0_i32 = arith.constant 0 : i32
    %c0_i32_0 = arith.constant 0 : i32
    return %c0_i32, %arg1 : i32, i32
  }
  func.func @transform_7(%arg0: i32, %arg1: i32, %arg2: i32) -> (i32, i32, i32) {
    %c0_i32 = arith.constant 0 : i32
    return %arg0, %arg2, %arg1 : i32, i32, i32
  }
}

module attributes {stable_mosaic.version = 11 : i64} {
  func.func @_glu_dwconv_bn_swish_kernel(%arg0: i32, %arg1: i32, %arg2: memref<2xi32, #tpu.memory_space<smem>>, %arg3: memref<1x8x32xbf16, #tpu.memory_space<vmem>>, %arg4: memref<1x8x32xbf16, #tpu.memory_space<vmem>>, %arg5: memref<31x32xf32, #tpu.memory_space<vmem>>, %arg6: memref<1x32xf32, #tpu.memory_space<vmem>>, %arg7: memref<1x32xf32, #tpu.memory_space<vmem>>, %arg8: memref<1x32xf32, #tpu.memory_space<vmem>>, %arg9: memref<1x8x32xbf16, #tpu.memory_space<vmem>>) attributes {dimension_semantics = [#tpu.dimension_semantics<parallel>, #tpu.dimension_semantics<parallel>], iteration_bounds = array<i64: 2, 1>, scalar_prefetch = 0 : i64, scratch_operands = 0 : i64, tpu.core_type = #tpu.core_type<tc>, window_params = [{transform_indices = @transform_0, window_bounds = array<i64: 2>}, {transform_indices = @transform_1, window_bounds = array<i64: 1, 8, 32>}, {transform_indices = @transform_2, window_bounds = array<i64: 1, 8, 32>}, {transform_indices = @transform_3, window_bounds = array<i64: 31, 32>}, {transform_indices = @transform_4, window_bounds = array<i64: 1, 32>}, {transform_indices = @transform_5, window_bounds = array<i64: 1, 32>}, {transform_indices = @transform_6, window_bounds = array<i64: 1, 32>}, {transform_indices = @transform_7, window_bounds = array<i64: 1, 8, 32>}]} {
    %0 = arith.index_cast %arg0 : i32 to index
    %1 = memref.load %arg2[%0] : memref<2xi32, #tpu.memory_space<smem>>
    %c0 = arith.constant 0 : index
    %c0_0 = arith.constant 0 : index
    %c0_1 = arith.constant 0 : index
    %2 = vector.load %arg3[%c0, %c0_0, %c0_1] : memref<1x8x32xbf16, #tpu.memory_space<vmem>>, vector<1x8x32xbf16>
    %3 = vector.shape_cast %2 : vector<1x8x32xbf16> to vector<8x32xbf16>
    %4 = arith.extf %3 : vector<8x32xbf16> to vector<8x32xf32>
    %c0_2 = arith.constant 0 : index
    %c0_3 = arith.constant 0 : index
    %c0_4 = arith.constant 0 : index
    %5 = vector.load %arg4[%c0_2, %c0_3, %c0_4] : memref<1x8x32xbf16, #tpu.memory_space<vmem>>, vector<1x8x32xbf16>
    %6 = vector.shape_cast %5 : vector<1x8x32xbf16> to vector<8x32xbf16>
    %7 = arith.extf %6 : vector<8x32xbf16> to vector<8x32xf32>
    %8 = arith.negf %7 : vector<8x32xf32>
    %9 = math.exp %8 : vector<8x32xf32>
    %cst = arith.constant 1.000000e+00 : f32
    %10 = vector.broadcast %cst : f32 to vector<8x32xf32>
    %11 = arith.addf %10, %9 : vector<8x32xf32>
    %12 = arith.divf %10, %11 : vector<8x32xf32>
    %13 = arith.mulf %4, %12 : vector<8x32xf32>
    %14 = tpu.iota {dimensions = array<i32: 0>} : vector<8x1xi32>
    %15 = vector.broadcast %1 : i32 to vector<8x1xi32>
    %16 = arith.cmpi slt, %14, %15 : vector<8x1xi32>
    %cst_5 = arith.constant 0.000000e+00 : f32
    %17 = vector.shape_cast %16 : vector<8x1xi1> to vector<8x1xi1>
    %18 = vector.broadcast %17 : vector<8x1xi1> to vector<8x32xi1>
    %19 = vector.broadcast %cst_5 : f32 to vector<8x32xf32>
    %20 = arith.select %18, %13, %19 : vector<8x32xi1>, vector<8x32xf32>
    %cst_6 = arith.constant 0.000000e+00 : f32
    %21 = vector.broadcast %cst_6 : f32 to vector<15x32xf32>
    %cst_7 = arith.constant 0.000000e+00 : f32
    %22 = vector.broadcast %cst_7 : f32 to vector<15x32xf32>
    %23 = tpu.concatenate %21, %20, %22 in 0 : vector<15x32xf32>, vector<8x32xf32>, vector<15x32xf32> -> vector<38x32xf32>
    %c0_8 = arith.constant 0 : index
    %c0_9 = arith.constant 0 : index
    %24 = vector.load %arg5[%c0_8, %c0_9] : memref<31x32xf32, #tpu.memory_space<vmem>>, vector<31x32xf32>
    %cst_10 = arith.constant 0.000000e+00 : f32
    %25 = vector.broadcast %cst_10 : f32 to vector<8x32xf32>
    %26 = vector.extract_strided_slice %23 {offsets = [0, 0], sizes = [32, 32], strides = [1, 1]} : vector<38x32xf32> to vector<32x32xf32>
    %27 = vector.extract_strided_slice %26 {offsets = [0, 0], sizes = [8, 32], strides = [1, 1]} : vector<32x32xf32> to vector<8x32xf32>
    %28 = vector.extract_strided_slice %24 {offsets = [0, 0], sizes = [1, 32], strides = [1, 1]} : vector<31x32xf32> to vector<1x32xf32>
    %29 = vector.broadcast %28 : vector<1x32xf32> to vector<8x32xf32>
    %30 = arith.mulf %27, %29 : vector<8x32xf32>
    %31 = arith.addf %25, %30 : vector<8x32xf32>
    %32 = vector.extract_strided_slice %26 {offsets = [8, 0], sizes = [8, 32], strides = [1, 1]} : vector<32x32xf32> to vector<8x32xf32>
    %33 = vector.extract_strided_slice %24 {offsets = [8, 0], sizes = [1, 32], strides = [1, 1]} : vector<31x32xf32> to vector<1x32xf32>
    %34 = vector.broadcast %33 : vector<1x32xf32> to vector<8x32xf32>
    %35 = arith.mulf %32, %34 : vector<8x32xf32>
    %36 = arith.addf %31, %35 : vector<8x32xf32>
    %37 = vector.extract_strided_slice %26 {offsets = [16, 0], sizes = [8, 32], strides = [1, 1]} : vector<32x32xf32> to vector<8x32xf32>
    %38 = vector.extract_strided_slice %24 {offsets = [16, 0], sizes = [1, 32], strides = [1, 1]} : vector<31x32xf32> to vector<1x32xf32>
    %39 = vector.broadcast %38 : vector<1x32xf32> to vector<8x32xf32>
    %40 = arith.mulf %37, %39 : vector<8x32xf32>
    %41 = arith.addf %36, %40 : vector<8x32xf32>
    %42 = vector.extract_strided_slice %26 {offsets = [24, 0], sizes = [8, 32], strides = [1, 1]} : vector<32x32xf32> to vector<8x32xf32>
    %43 = vector.extract_strided_slice %24 {offsets = [24, 0], sizes = [1, 32], strides = [1, 1]} : vector<31x32xf32> to vector<1x32xf32>
    %44 = vector.broadcast %43 : vector<1x32xf32> to vector<8x32xf32>
    %45 = arith.mulf %42, %44 : vector<8x32xf32>
    %46 = arith.addf %41, %45 : vector<8x32xf32>
    %47 = vector.extract_strided_slice %23 {offsets = [1, 0], sizes = [32, 32], strides = [1, 1]} : vector<38x32xf32> to vector<32x32xf32>
    %48 = vector.extract_strided_slice %47 {offsets = [0, 0], sizes = [8, 32], strides = [1, 1]} : vector<32x32xf32> to vector<8x32xf32>
    %49 = vector.extract_strided_slice %24 {offsets = [1, 0], sizes = [1, 32], strides = [1, 1]} : vector<31x32xf32> to vector<1x32xf32>
    %50 = vector.broadcast %49 : vector<1x32xf32> to vector<8x32xf32>
    %51 = arith.mulf %48, %50 : vector<8x32xf32>
    %52 = arith.addf %46, %51 : vector<8x32xf32>
    %53 = vector.extract_strided_slice %47 {offsets = [8, 0], sizes = [8, 32], strides = [1, 1]} : vector<32x32xf32> to vector<8x32xf32>
    %54 = vector.extract_strided_slice %24 {offsets = [9, 0], sizes = [1, 32], strides = [1, 1]} : vector<31x32xf32> to vector<1x32xf32>
    %55 = vector.broadcast %54 : vector<1x32xf32> to vector<8x32xf32>
    %56 = arith.mulf %53, %55 : vector<8x32xf32>
    %57 = arith.addf %52, %56 : vector<8x32xf32>
    %58 = vector.extract_strided_slice %47 {offsets = [16, 0], sizes = [8, 32], strides = [1, 1]} : vector<32x32xf32> to vector<8x32xf32>
    %59 = vector.extract_strided_slice %24 {offsets = [17, 0], sizes = [1, 32], strides = [1, 1]} : vector<31x32xf32> to vector<1x32xf32>
    %60 = vector.broadcast %59 : vector<1x32xf32> to vector<8x32xf32>
    %61 = arith.mulf %58, %60 : vector<8x32xf32>
    %62 = arith.addf %57, %61 : vector<8x32xf32>
    %63 = vector.extract_strided_slice %47 {offsets = [24, 0], sizes = [8, 32], strides = [1, 1]} : vector<32x32xf32> to vector<8x32xf32>
    %64 = vector.extract_strided_slice %24 {offsets = [25, 0], sizes = [1, 32], strides = [1, 1]} : vector<31x32xf32> to vector<1x32xf32>
    %65 = vector.broadcast %64 : vector<1x32xf32> to vector<8x32xf32>
    %66 = arith.mulf %63, %65 : vector<8x32xf32>
    %67 = arith.addf %62, %66 : vector<8x32xf32>
    %68 = vector.extract_strided_slice %23 {offsets = [2, 0], sizes = [32, 32], strides = [1, 1]} : vector<38x32xf32> to vector<32x32xf32>
    %69 = vector.extract_strided_slice %68 {offsets = [0, 0], sizes = [8, 32], strides = [1, 1]} : vector<32x32xf32> to vector<8x32xf32>
    %70 = vector.extract_strided_slice %24 {offsets = [2, 0], sizes = [1, 32], strides = [1, 1]} : vector<31x32xf32> to vector<1x32xf32>
    %71 = vector.broadcast %70 : vector<1x32xf32> to vector<8x32xf32>
    %72 = arith.mulf %69, %71 : vector<8x32xf32>
    %73 = arith.addf %67, %72 : vector<8x32xf32>
    %74 = vector.extract_strided_slice %68 {offsets = [8, 0], sizes = [8, 32], strides = [1, 1]} : vector<32x32xf32> to vector<8x32xf32>
    %75 = vector.extract_strided_slice %24 {offsets = [10, 0], sizes = [1, 32], strides = [1, 1]} : vector<31x32xf32> to vector<1x32xf32>
    %76 = vector.broadcast %75 : vector<1x32xf32> to vector<8x32xf32>
    %77 = arith.mulf %74, %76 : vector<8x32xf32>
    %78 = arith.addf %73, %77 : vector<8x32xf32>
    %79 = vector.extract_strided_slice %68 {offsets = [16, 0], sizes = [8, 32], strides = [1, 1]} : vector<32x32xf32> to vector<8x32xf32>
    %80 = vector.extract_strided_slice %24 {offsets = [18, 0], sizes = [1, 32], strides = [1, 1]} : vector<31x32xf32> to vector<1x32xf32>
    %81 = vector.broadcast %80 : vector<1x32xf32> to vector<8x32xf32>
    %82 = arith.mulf %79, %81 : vector<8x32xf32>
    %83 = arith.addf %78, %82 : vector<8x32xf32>
    %84 = vector.extract_strided_slice %68 {offsets = [24, 0], sizes = [8, 32], strides = [1, 1]} : vector<32x32xf32> to vector<8x32xf32>
    %85 = vector.extract_strided_slice %24 {offsets = [26, 0], sizes = [1, 32], strides = [1, 1]} : vector<31x32xf32> to vector<1x32xf32>
    %86 = vector.broadcast %85 : vector<1x32xf32> to vector<8x32xf32>
    %87 = arith.mulf %84, %86 : vector<8x32xf32>
    %88 = arith.addf %83, %87 : vector<8x32xf32>
    %89 = vector.extract_strided_slice %23 {offsets = [3, 0], sizes = [32, 32], strides = [1, 1]} : vector<38x32xf32> to vector<32x32xf32>
    %90 = vector.extract_strided_slice %89 {offsets = [0, 0], sizes = [8, 32], strides = [1, 1]} : vector<32x32xf32> to vector<8x32xf32>
    %91 = vector.extract_strided_slice %24 {offsets = [3, 0], sizes = [1, 32], strides = [1, 1]} : vector<31x32xf32> to vector<1x32xf32>
    %92 = vector.broadcast %91 : vector<1x32xf32> to vector<8x32xf32>
    %93 = arith.mulf %90, %92 : vector<8x32xf32>
    %94 = arith.addf %88, %93 : vector<8x32xf32>
    %95 = vector.extract_strided_slice %89 {offsets = [8, 0], sizes = [8, 32], strides = [1, 1]} : vector<32x32xf32> to vector<8x32xf32>
    %96 = vector.extract_strided_slice %24 {offsets = [11, 0], sizes = [1, 32], strides = [1, 1]} : vector<31x32xf32> to vector<1x32xf32>
    %97 = vector.broadcast %96 : vector<1x32xf32> to vector<8x32xf32>
    %98 = arith.mulf %95, %97 : vector<8x32xf32>
    %99 = arith.addf %94, %98 : vector<8x32xf32>
    %100 = vector.extract_strided_slice %89 {offsets = [16, 0], sizes = [8, 32], strides = [1, 1]} : vector<32x32xf32> to vector<8x32xf32>
    %101 = vector.extract_strided_slice %24 {offsets = [19, 0], sizes = [1, 32], strides = [1, 1]} : vector<31x32xf32> to vector<1x32xf32>
    %102 = vector.broadcast %101 : vector<1x32xf32> to vector<8x32xf32>
    %103 = arith.mulf %100, %102 : vector<8x32xf32>
    %104 = arith.addf %99, %103 : vector<8x32xf32>
    %105 = vector.extract_strided_slice %89 {offsets = [24, 0], sizes = [8, 32], strides = [1, 1]} : vector<32x32xf32> to vector<8x32xf32>
    %106 = vector.extract_strided_slice %24 {offsets = [27, 0], sizes = [1, 32], strides = [1, 1]} : vector<31x32xf32> to vector<1x32xf32>
    %107 = vector.broadcast %106 : vector<1x32xf32> to vector<8x32xf32>
    %108 = arith.mulf %105, %107 : vector<8x32xf32>
    %109 = arith.addf %104, %108 : vector<8x32xf32>
    %110 = vector.extract_strided_slice %23 {offsets = [4, 0], sizes = [32, 32], strides = [1, 1]} : vector<38x32xf32> to vector<32x32xf32>
    %111 = vector.extract_strided_slice %110 {offsets = [0, 0], sizes = [8, 32], strides = [1, 1]} : vector<32x32xf32> to vector<8x32xf32>
    %112 = vector.extract_strided_slice %24 {offsets = [4, 0], sizes = [1, 32], strides = [1, 1]} : vector<31x32xf32> to vector<1x32xf32>
    %113 = vector.broadcast %112 : vector<1x32xf32> to vector<8x32xf32>
    %114 = arith.mulf %111, %113 : vector<8x32xf32>
    %115 = arith.addf %109, %114 : vector<8x32xf32>
    %116 = vector.extract_strided_slice %110 {offsets = [8, 0], sizes = [8, 32], strides = [1, 1]} : vector<32x32xf32> to vector<8x32xf32>
    %117 = vector.extract_strided_slice %24 {offsets = [12, 0], sizes = [1, 32], strides = [1, 1]} : vector<31x32xf32> to vector<1x32xf32>
    %118 = vector.broadcast %117 : vector<1x32xf32> to vector<8x32xf32>
    %119 = arith.mulf %116, %118 : vector<8x32xf32>
    %120 = arith.addf %115, %119 : vector<8x32xf32>
    %121 = vector.extract_strided_slice %110 {offsets = [16, 0], sizes = [8, 32], strides = [1, 1]} : vector<32x32xf32> to vector<8x32xf32>
    %122 = vector.extract_strided_slice %24 {offsets = [20, 0], sizes = [1, 32], strides = [1, 1]} : vector<31x32xf32> to vector<1x32xf32>
    %123 = vector.broadcast %122 : vector<1x32xf32> to vector<8x32xf32>
    %124 = arith.mulf %121, %123 : vector<8x32xf32>
    %125 = arith.addf %120, %124 : vector<8x32xf32>
    %126 = vector.extract_strided_slice %110 {offsets = [24, 0], sizes = [8, 32], strides = [1, 1]} : vector<32x32xf32> to vector<8x32xf32>
    %127 = vector.extract_strided_slice %24 {offsets = [28, 0], sizes = [1, 32], strides = [1, 1]} : vector<31x32xf32> to vector<1x32xf32>
    %128 = vector.broadcast %127 : vector<1x32xf32> to vector<8x32xf32>
    %129 = arith.mulf %126, %128 : vector<8x32xf32>
    %130 = arith.addf %125, %129 : vector<8x32xf32>
    %131 = vector.extract_strided_slice %23 {offsets = [5, 0], sizes = [32, 32], strides = [1, 1]} : vector<38x32xf32> to vector<32x32xf32>
    %132 = vector.extract_strided_slice %131 {offsets = [0, 0], sizes = [8, 32], strides = [1, 1]} : vector<32x32xf32> to vector<8x32xf32>
    %133 = vector.extract_strided_slice %24 {offsets = [5, 0], sizes = [1, 32], strides = [1, 1]} : vector<31x32xf32> to vector<1x32xf32>
    %134 = vector.broadcast %133 : vector<1x32xf32> to vector<8x32xf32>
    %135 = arith.mulf %132, %134 : vector<8x32xf32>
    %136 = arith.addf %130, %135 : vector<8x32xf32>
    %137 = vector.extract_strided_slice %131 {offsets = [8, 0], sizes = [8, 32], strides = [1, 1]} : vector<32x32xf32> to vector<8x32xf32>
    %138 = vector.extract_strided_slice %24 {offsets = [13, 0], sizes = [1, 32], strides = [1, 1]} : vector<31x32xf32> to vector<1x32xf32>
    %139 = vector.broadcast %138 : vector<1x32xf32> to vector<8x32xf32>
    %140 = arith.mulf %137, %139 : vector<8x32xf32>
    %141 = arith.addf %136, %140 : vector<8x32xf32>
    %142 = vector.extract_strided_slice %131 {offsets = [16, 0], sizes = [8, 32], strides = [1, 1]} : vector<32x32xf32> to vector<8x32xf32>
    %143 = vector.extract_strided_slice %24 {offsets = [21, 0], sizes = [1, 32], strides = [1, 1]} : vector<31x32xf32> to vector<1x32xf32>
    %144 = vector.broadcast %143 : vector<1x32xf32> to vector<8x32xf32>
    %145 = arith.mulf %142, %144 : vector<8x32xf32>
    %146 = arith.addf %141, %145 : vector<8x32xf32>
    %147 = vector.extract_strided_slice %131 {offsets = [24, 0], sizes = [8, 32], strides = [1, 1]} : vector<32x32xf32> to vector<8x32xf32>
    %148 = vector.extract_strided_slice %24 {offsets = [29, 0], sizes = [1, 32], strides = [1, 1]} : vector<31x32xf32> to vector<1x32xf32>
    %149 = vector.broadcast %148 : vector<1x32xf32> to vector<8x32xf32>
    %150 = arith.mulf %147, %149 : vector<8x32xf32>
    %151 = arith.addf %146, %150 : vector<8x32xf32>
    %152 = vector.extract_strided_slice %23 {offsets = [6, 0], sizes = [32, 32], strides = [1, 1]} : vector<38x32xf32> to vector<32x32xf32>
    %153 = vector.extract_strided_slice %152 {offsets = [0, 0], sizes = [8, 32], strides = [1, 1]} : vector<32x32xf32> to vector<8x32xf32>
    %154 = vector.extract_strided_slice %24 {offsets = [6, 0], sizes = [1, 32], strides = [1, 1]} : vector<31x32xf32> to vector<1x32xf32>
    %155 = vector.broadcast %154 : vector<1x32xf32> to vector<8x32xf32>
    %156 = arith.mulf %153, %155 : vector<8x32xf32>
    %157 = arith.addf %151, %156 : vector<8x32xf32>
    %158 = vector.extract_strided_slice %152 {offsets = [8, 0], sizes = [8, 32], strides = [1, 1]} : vector<32x32xf32> to vector<8x32xf32>
    %159 = vector.extract_strided_slice %24 {offsets = [14, 0], sizes = [1, 32], strides = [1, 1]} : vector<31x32xf32> to vector<1x32xf32>
    %160 = vector.broadcast %159 : vector<1x32xf32> to vector<8x32xf32>
    %161 = arith.mulf %158, %160 : vector<8x32xf32>
    %162 = arith.addf %157, %161 : vector<8x32xf32>
    %163 = vector.extract_strided_slice %152 {offsets = [16, 0], sizes = [8, 32], strides = [1, 1]} : vector<32x32xf32> to vector<8x32xf32>
    %164 = vector.extract_strided_slice %24 {offsets = [22, 0], sizes = [1, 32], strides = [1, 1]} : vector<31x32xf32> to vector<1x32xf32>
    %165 = vector.broadcast %164 : vector<1x32xf32> to vector<8x32xf32>
    %166 = arith.mulf %163, %165 : vector<8x32xf32>
    %167 = arith.addf %162, %166 : vector<8x32xf32>
    %168 = vector.extract_strided_slice %152 {offsets = [24, 0], sizes = [8, 32], strides = [1, 1]} : vector<32x32xf32> to vector<8x32xf32>
    %169 = vector.extract_strided_slice %24 {offsets = [30, 0], sizes = [1, 32], strides = [1, 1]} : vector<31x32xf32> to vector<1x32xf32>
    %170 = vector.broadcast %169 : vector<1x32xf32> to vector<8x32xf32>
    %171 = arith.mulf %168, %170 : vector<8x32xf32>
    %172 = arith.addf %167, %171 : vector<8x32xf32>
    %173 = vector.extract_strided_slice %23 {offsets = [7, 0], sizes = [24, 32], strides = [1, 1]} : vector<38x32xf32> to vector<24x32xf32>
    %174 = vector.extract_strided_slice %173 {offsets = [0, 0], sizes = [8, 32], strides = [1, 1]} : vector<24x32xf32> to vector<8x32xf32>
    %175 = vector.extract_strided_slice %24 {offsets = [7, 0], sizes = [1, 32], strides = [1, 1]} : vector<31x32xf32> to vector<1x32xf32>
    %176 = vector.broadcast %175 : vector<1x32xf32> to vector<8x32xf32>
    %177 = arith.mulf %174, %176 : vector<8x32xf32>
    %178 = arith.addf %172, %177 : vector<8x32xf32>
    %179 = vector.extract_strided_slice %173 {offsets = [8, 0], sizes = [8, 32], strides = [1, 1]} : vector<24x32xf32> to vector<8x32xf32>
    %180 = vector.extract_strided_slice %24 {offsets = [15, 0], sizes = [1, 32], strides = [1, 1]} : vector<31x32xf32> to vector<1x32xf32>
    %181 = vector.broadcast %180 : vector<1x32xf32> to vector<8x32xf32>
    %182 = arith.mulf %179, %181 : vector<8x32xf32>
    %183 = arith.addf %178, %182 : vector<8x32xf32>
    %184 = vector.extract_strided_slice %173 {offsets = [16, 0], sizes = [8, 32], strides = [1, 1]} : vector<24x32xf32> to vector<8x32xf32>
    %185 = vector.extract_strided_slice %24 {offsets = [23, 0], sizes = [1, 32], strides = [1, 1]} : vector<31x32xf32> to vector<1x32xf32>
    %186 = vector.broadcast %185 : vector<1x32xf32> to vector<8x32xf32>
    %187 = arith.mulf %184, %186 : vector<8x32xf32>
    %188 = arith.addf %183, %187 : vector<8x32xf32>
    %c0_11 = arith.constant 0 : index
    %c0_12 = arith.constant 0 : index
    %189 = vector.load %arg6[%c0_11, %c0_12] : memref<1x32xf32, #tpu.memory_space<vmem>>, vector<1x32xf32>
    %190 = vector.broadcast %189 : vector<1x32xf32> to vector<8x32xf32>
    %191 = arith.addf %188, %190 : vector<8x32xf32>
    %c0_13 = arith.constant 0 : index
    %c0_14 = arith.constant 0 : index
    %192 = vector.load %arg7[%c0_13, %c0_14] : memref<1x32xf32, #tpu.memory_space<vmem>>, vector<1x32xf32>
    %193 = vector.broadcast %192 : vector<1x32xf32> to vector<8x32xf32>
    %194 = arith.mulf %191, %193 : vector<8x32xf32>
    %c0_15 = arith.constant 0 : index
    %c0_16 = arith.constant 0 : index
    %195 = vector.load %arg8[%c0_15, %c0_16] : memref<1x32xf32, #tpu.memory_space<vmem>>, vector<1x32xf32>
    %196 = vector.broadcast %195 : vector<1x32xf32> to vector<8x32xf32>
    %197 = arith.addf %194, %196 : vector<8x32xf32>
    %198 = arith.negf %197 : vector<8x32xf32>
    %199 = math.exp %198 : vector<8x32xf32>
    %cst_17 = arith.constant 1.000000e+00 : f32
    %200 = vector.broadcast %cst_17 : f32 to vector<8x32xf32>
    %201 = arith.addf %200, %199 : vector<8x32xf32>
    %202 = arith.divf %200, %201 : vector<8x32xf32>
    %203 = arith.mulf %197, %202 : vector<8x32xf32>
    %204 = arith.truncf %203 : vector<8x32xf32> to vector<8x32xbf16>
    %c0_18 = arith.constant 0 : index
    %c0_19 = arith.constant 0 : index
    %c0_20 = arith.constant 0 : index
    %205 = vector.load %arg9[%c0_18, %c0_19, %c0_20] : memref<1x8x32xbf16, #tpu.memory_space<vmem>>, vector<1x8x32xbf16>
    %206 = vector.shape_cast %205 : vector<1x8x32xbf16> to vector<8x32xbf16>
    %207 = vector.shape_cast %204 : vector<8x32xbf16> to vector<1x8x32xbf16>
    tpu.vector_store %arg9[%c0_18, %c0_19, %c0_20], %207 {strides = array<i32>} : memref<1x8x32xbf16, #tpu.memory_space<vmem>>, vector<1x8x32xbf16>,
    return
  }
  func.func @transform_0(%arg0: i32, %arg1: i32) -> i32 {
    %c0_i32 = arith.constant 0 : i32
    %c0_i32_0 = arith.constant 0 : i32
    return %c0_i32 : i32
  }
  func.func @transform_1(%arg0: i32, %arg1: i32) -> (i32, i32, i32) {
    %c0_i32 = arith.constant 0 : i32
    %c0_i32_0 = arith.constant 0 : i32
    return %arg0, %c0_i32, %arg1 : i32, i32, i32
  }
  func.func @transform_2(%arg0: i32, %arg1: i32) -> (i32, i32, i32) {
    %c0_i32 = arith.constant 0 : i32
    %c0_i32_0 = arith.constant 0 : i32
    return %arg0, %c0_i32, %arg1 : i32, i32, i32
  }
  func.func @transform_3(%arg0: i32, %arg1: i32) -> (i32, i32) {
    %c0_i32 = arith.constant 0 : i32
    %c0_i32_0 = arith.constant 0 : i32
    return %c0_i32, %arg1 : i32, i32
  }
  func.func @transform_4(%arg0: i32, %arg1: i32) -> (i32, i32) {
    %c0_i32 = arith.constant 0 : i32
    %c0_i32_0 = arith.constant 0 : i32
    return %c0_i32, %arg1 : i32, i32
  }
  func.func @transform_5(%arg0: i32, %arg1: i32) -> (i32, i32) {
    %c0_i32 = arith.constant 0 : i32
    %c0_i32_0 = arith.constant 0 : i32
    return %c0_i32, %arg1 : i32, i32
  }
  func.func @transform_6(%arg0: i32, %arg1: i32) -> (i32, i32) {
    %c0_i32 = arith.constant 0 : i32
    %c0_i32_0 = arith.constant 0 : i32
    return %c0_i32, %arg1 : i32, i32
  }
  func.func @transform_7(%arg0: i32, %arg1: i32) -> (i32, i32, i32) {
    %c0_i32 = arith.constant 0 : i32
    %c0_i32_0 = arith.constant 0 : i32
    return %arg0, %c0_i32, %arg1 : i32, i32, i32
  }
}

</mosaic_0001>

<llo_original>
// kernel: _lambda_.40
$region0: #{_lambda_.40}
  #allocation0 [shape = 'u32[]', space=smem, size = 0x4, offset = 0x4, fixed_abs, tag = 'smem constant byte address 0x4 - core index']
  #allocation1 [shape = 'u32[144,128]{1,0:T(1,128)}', space=vmem, size = 0x12000, scoped, tag = 'internal scratch']
  %s0 = inlined_call_operand.vmem [shape: bf16[16,32], index: 0, kind: input, shape index: {}]
  %s1 = inlined_call_operand.vmem [shape: f32[1,32], index: 1, kind: input, shape index: {}]
  %s2 = inlined_call_operand.vmem [shape: f32[1,32], index: 2, kind: input, shape index: {}]
  %s3 = inlined_call_operand.vmem [shape: bf16[16,32], index: 3, kind: output, shape index: {}]
  %s4 = sld [smem:[#allocation0]]
  $region22: #{_lambda_.40} parent=0
    _
  %s6 = ssub.s32 1, %s4
  %s7 = scalar_select 0, %s6, %s4
  // Predicated region
  $region2: #{_lambda_.40} parent=0 // pred_check
    _
  $region3: #{_lambda_.40} parent=0 // pred_check_branch
    %9 = sbr.rel (0) target = $region5
  $region4: #{_lambda_.40} parent=0 // pred_region
    _
  $region5: #{_lambda_.40} parent=0 // pred_fallthru
    _
  // Predicated region
  $region6: #{_lambda_.40} parent=0 // pred_check
    _
  $region7: #{_lambda_.40} parent=0 // pred_check_branch
    %11 = sbr.rel (0) target = $region9
  $region8: #{_lambda_.40} parent=0 // pred_region
    _
  $region9: #{_lambda_.40} parent=0 // pred_fallthru
    _
  // Predicated region
  $region10: #{_lambda_.40} parent=0 // pred_check
    _
  $region11: #{_lambda_.40} parent=0 // pred_check_branch
    %13 = sbr.rel (0) target = $region13
  $region12: #{_lambda_.40} parent=0 // pred_region
    _
  $region13: #{_lambda_.40} parent=0 // pred_fallthru
    _
  %v14 = vld [vmem:[%s0] sm:$0xf]
  %v15 = vld [vmem:[%s0 + $0x4] sm:$0xf]
  %v16 = vunpack.c.l.bf16 %v14
  %v17 = vunpack.c.l.bf16 %v15
  %vm18 = vcmask 261120
  %v19 = vsel %vm18, %v16, 0.0
  %20 = vadd.xlane.f32.xlu0 %v19
  %v21 = vpop.xlane.xlu0 %20
  %v22 = vsel %vm18, %v17, 0.0
  %23 = vadd.xlane.f32.xlu0 %v22
  %v24 = vpop.xlane.xlu0 %23
  %v25 = vrcp.pop 32.0
  %v26 = vmul.f32 %v21, %v25
  %v27 = vmul.f32 %v24, %v25
  %v28 = vsub.f32 %v16, %v26
  %v29 = vsub.f32 %v17, %v27
  %v30 = vmul.f32 %v28, %v28
  %v31 = vmul.f32 %v29, %v29
  %v32 = vsel %vm18, %v30, 0.0
  %33 = vadd.xlane.f32.xlu0 %v32
  %v34 = vpop.xlane.xlu0 %33
  %v35 = vsel %vm18, %v31, 0.0
  %36 = vadd.xlane.f32.xlu0 %v35
  %v37 = vpop.xlane.xlu0 %36
  %v38 = vmul.f32 %v34, %v25
  %v39 = vmul.f32 %v37, %v25
  %v40 = vadd.f32 %v38, 1e-05
  %v41 = vadd.f32 %v39, 1e-05
  %v42 = vrsqrt.pop %v40
  %v43 = vrsqrt.pop %v41
  %v44 = vmul.f32 %v28, %v42
  %v45 = vmul.f32 %v29, %v43
  %v46 = vld [vmem:[%s1] sm:$0x1]
  %v48 = vlaneseq
  %v49 = vshrl.u32 %v48, 7
  %v50 = vsub.s32 0, %v49
  %v51 = vrot.slane %v46, %v50
  %v53 = vmul.f32 %v44, %v51
  %v54 = vmul.f32 %v45, %v51
  %v55 = vld [vmem:[%s2] sm:$0x1]
  %v57 = vlaneseq
  %v58 = vshrl.u32 %v57, 7
  %v59 = vsub.s32 0, %v58
  %v60 = vrot.slane %v55, %v59
  %v62 = vadd.f32 %v53, %v60
  %v63 = vadd.f32 %v54, %v60
  %v64 = vpack.c.bf16 %v63, %v62
  %v66 = vunpack.c.l.b16 %v64
  %v67 = vunpack.c.h.b16 %v64
  %v68 = vpack.c.b16 %v66, %v66
  %v69 = vpack.c.b16 %v67, %v67
  %vm72 = vcmask 257024
  %73 = vst.msk [vmem:[%s3] sm:$0xf] %vm72, %v68
  %74 = vst.msk [vmem:[%s3 + $0x4] sm:$0xf] %vm72, %v69
  // Predicated region
  $region14: #{_lambda_.40} parent=0 // pred_check
    _
  $region15: #{_lambda_.40} parent=0 // pred_check_branch
    %76 = sbr.rel (0) target = $region17
  $region16: #{_lambda_.40} parent=0 // pred_region
    _
  $region17: #{_lambda_.40} parent=0 // pred_fallthru
    _
  // Predicated region
  $region18: #{_lambda_.40} parent=0 // pred_check
    _
  $region19: #{_lambda_.40} parent=0 // pred_check_branch
    %78 = sbr.rel (0) target = $region21
  $region20: #{_lambda_.40} parent=0 // pred_region
    _
  $region21: #{_lambda_.40} parent=0 // pred_fallthru
    _

// kernel: _lambda_.39
$region0: #{_lambda_.39}
  #allocation0 [shape = 'u32[]', space=smem, size = 0x4, offset = 0x4, fixed_abs, tag = 'smem constant byte address 0x4 - core index']
  #allocation1 [shape = 'u32[144,128]{1,0:T(1,128)}', space=vmem, size = 0x12000, scoped, tag = 'internal scratch']
  #allocation2 [shape = 'f32[16,128]{1,0:T(8,128)}', space=vmem, size = 0x2000, scoped, tag = 'scratch operand']
  %s0 = inlined_call_operand.vmem [shape: bf16[16,128], index: 0, kind: input, shape index: {}]
  %s1 = inlined_call_operand.vmem [shape: bf16[128,128], index: 1, kind: input, shape index: {}]
  %s2 = inlined_call_operand.vmem [shape: f32[1,128], index: 2, kind: input, shape index: {}]
  %s3 = inlined_call_operand.vmem [shape: bf16[16,128], index: 3, kind: output, shape index: {}]
  %s4 = sld [smem:[#allocation0]]
  $region30: #{_lambda_.39} parent=0
    _
  %s6 = ssub.s32 1, %s4
  %s7 = scalar_select 0, %s6, %s4
  // Predicated region
  $region2: #{_lambda_.39} parent=0 // pred_check
    _
  $region3: #{_lambda_.39} parent=0 // pred_check_branch
    %9 = sbr.rel (0) target = $region5
  $region4: #{_lambda_.39} parent=0 // pred_region
    _
  $region5: #{_lambda_.39} parent=0 // pred_fallthru
    _
  // Predicated region
  $region6: #{_lambda_.39} parent=0 // pred_check
    _
  $region7: #{_lambda_.39} parent=0 // pred_check_branch
    %11 = sbr.rel (0) target = $region9
  $region8: #{_lambda_.39} parent=0 // pred_region
    _
  $region9: #{_lambda_.39} parent=0 // pred_fallthru
    _
  // Predicated region
  $region10: #{_lambda_.39} parent=0 // pred_check
    _
  $region11: #{_lambda_.39} parent=0 // pred_check_branch
    %13 = sbr.rel (0) target = $region13
  $region12: #{_lambda_.39} parent=0 // pred_region
    _
  $region13: #{_lambda_.39} parent=0 // pred_fallthru
    _
  %p15 = scmp.eq.s32.totalorder 0, 0
  // Predicated region
  $region14: #{_lambda_.39} parent=0 // pred_check
    %p16 = pneg %p15
  $region15: #{_lambda_.39} parent=0 // pred_check_branch
    %18 = sbr.rel (%p16) target = $region17
  $region16: #{_lambda_.39} parent=0 // pred_region
    %19 = vst [vmem:[#allocation2] sm:$0xff] 0.0
    %20 = vst [vmem:[#allocation2 + $0x8] sm:$0xff] 0.0
  $region17: #{_lambda_.39} parent=0 // pred_fallthru
    _
  %v21 = vld [vmem:[#allocation2] sm:$0xff]
  %v22 = vld [vmem:[#allocation2 + $0x8] sm:$0xff]
  %v23 = vld [vmem:[%s0] sm:$0xf]
  %v24 = vld [vmem:[%s0 + $0x4] sm:$0xf]
  %v25 = vld [vmem:[%s1] sm:$0xf]
  %v26 = vld [vmem:[%s1 + $0x4] sm:$0xf]
  %v27 = vld [vmem:[%s1 + $0x8] sm:$0xf]
  %v28 = vld [vmem:[%s1 + $0xc] sm:$0xf]
  %v29 = vld [vmem:[%s1 + $0x10] sm:$0xf]
  %v30 = vld [vmem:[%s1 + $0x14] sm:$0xf]
  %v31 = vld [vmem:[%s1 + $0x18] sm:$0xf]
  %v32 = vld [vmem:[%s1 + $0x1c] sm:$0xf]
  %v33 = vld [vmem:[%s1 + $0x20] sm:$0xf]
  %v34 = vld [vmem:[%s1 + $0x24] sm:$0xf]
  %v35 = vld [vmem:[%s1 + $0x28] sm:$0xf]
  %v36 = vld [vmem:[%s1 + $0x2c] sm:$0xf]
  %v37 = vld [vmem:[%s1 + $0x30] sm:$0xf]
  %v38 = vld [vmem:[%s1 + $0x34] sm:$0xf]
  %v39 = vld [vmem:[%s1 + $0x38] sm:$0xf]
  %v40 = vld [vmem:[%s1 + $0x3c] sm:$0xf]
  %v43 = vunpack.c.l.b16 %v23
  %v44 = vunpack.c.l.b16 %v24
  %v45 = vpack.c.b16 %v44, %v43
  %v63 = vunpack.c.l.b16 %v25
  %v64 = vunpack.c.l.b16 %v26
  %v65 = vunpack.c.l.b16 %v27
  %v66 = vunpack.c.l.b16 %v28
  %v67 = vunpack.c.l.b16 %v29
  %v68 = vunpack.c.l.b16 %v30
  %v69 = vunpack.c.l.b16 %v31
  %v70 = vunpack.c.l.b16 %v32
  %v71 = vunpack.c.l.b16 %v33
  %v72 = vunpack.c.l.b16 %v34
  %v73 = vunpack.c.l.b16 %v35
  %v74 = vunpack.c.l.b16 %v36
  %v75 = vunpack.c.l.b16 %v37
  %v76 = vunpack.c.l.b16 %v38
  %v77 = vunpack.c.l.b16 %v39
  %v78 = vunpack.c.l.b16 %v40
  %v79 = vpack.c.b16 %v64, %v63
  %v80 = vpack.c.b16 %v66, %v65
  %v81 = vpack.c.b16 %v68, %v67
  %v82 = vpack.c.b16 %v70, %v69
  %v83 = vpack.c.b16 %v72, %v71
  %v84 = vpack.c.b16 %v74, %v73
  %v85 = vpack.c.b16 %v76, %v75
  %v86 = vpack.c.b16 %v78, %v77
  %95 = vmatprep.subr.bf16.mxu0 0
  %96 = vmatpush1.bf16.msra.mxu0 %v86
  %97 = vmatprep.subr.bf16.mxu0 0
  %98 = vmatpush1.bf16.msra.mxu0 %v85
  %99 = vmatprep.subr.bf16.mxu0 0
  %100 = vmatpush1.bf16.msra.mxu0 %v84
  %101 = vmatprep.subr.bf16.mxu0 0
  %102 = vmatpush1.bf16.msra.mxu0 %v83
  %103 = vmatprep.subr.bf16.mxu0 0
  %104 = vmatpush1.bf16.msra.mxu0 %v82
  %105 = vmatprep.subr.bf16.mxu0 0
  %106 = vmatpush1.bf16.msra.mxu0 %v81
  %107 = vmatprep.subr.bf16.mxu0 0
  %108 = vmatpush1.bf16.msra.mxu0 %v80
  %109 = vmatprep.subr.bf16.mxu0 0
  %110 = vmatpush1.bf16.msra.mxu0 %v79
  %111 = vmatprep.subr.bf16.mxu0 0
  %112 = vmatpush2.bf16.msra.mxu0 0
  %113 = vmatprep.subr.bf16.mxu0 0
  %114 = vmatpush2.bf16.msra.mxu0 0
  %115 = vmatprep.subr.bf16.mxu0 0
  %116 = vmatpush2.bf16.msra.mxu0 0
  %117 = vmatprep.subr.bf16.mxu0 0
  %118 = vmatpush2.bf16.msra.mxu0 0
  %119 = vmatprep.subr.bf16.mxu0 0
  %120 = vmatpush2.bf16.msra.mxu0 0
  %121 = vmatprep.subr.bf16.mxu0 0
  %122 = vmatpush2.bf16.msra.mxu0 0
  %123 = vmatprep.subr.bf16.mxu0 0
  %124 = vmatpush2.bf16.msra.mxu0 0
  %125 = vmatprep.subr.bf16.mxu0 0
  %126 = vmatpush2.bf16.msra.mxu0 0
  %127 = vmatprep.mubr.bf16.mxu0 0
  %128 = vmatmul.mubr.bf16.gmra.mxu0 %v45
  %v129 = vpop.f32.mrf.mxu0
  %v130 = vadd.f32 0.0, %v129
  %v131 = vpop.f32.mrf.mxu0
  %v132 = vpop.f32.mrf.mxu0
  %v133 = vadd.f32 0.0, %v132
  %v134 = vpop.f32.mrf.mxu0
  %135 = vdwg.mxu0
  %v136 = vadd.f32 %v21, %v130
  %v137 = vadd.f32 %v22, %v133
  %138 = vst [vmem:[#allocation2] sm:$0xff] %v136
  %139 = vst [vmem:[#allocation2 + $0x8] sm:$0xff] %v137
  // Predicated region
  $region18: #{_lambda_.39} parent=0 // pred_check
    %p140 = pneg %p15
  $region19: #{_lambda_.39} parent=0 // pred_check_branch
    %142 = sbr.rel (%p140) target = $region21
  $region20: #{_lambda_.39} parent=0 // pred_region
    %v143 = vld [vmem:[#allocation2] sm:$0xff]
    %v144 = vld [vmem:[#allocation2 + $0x8] sm:$0xff]
    %v145 = vld [vmem:[%s2] sm:$0x1]
    %v147 = vlaneseq
    %v148 = vshrl.u32 %v147, 7
    %v149 = vsub.s32 0, %v148
    %v150 = vrot.slane %v145, %v149
    %v152 = vadd.f32 %v143, %v150
    %v153 = vadd.f32 %v144, %v150
    %v154 = vpack.c.bf16 %v153, %v152
    %v156 = vunpack.c.l.b16 %v154
    %v157 = vunpack.c.h.b16 %v154
    %v158 = vpack.c.b16 %v156, %v156
    %v159 = vpack.c.b16 %v157, %v157
    %162 = vst [vmem:[%s3] sm:$0xf] %v158
    %163 = vst [vmem:[%s3 + $0x4] sm:$0xf] %v159
  $region21: #{_lambda_.39} parent=0 // pred_fallthru
    _
  // Predicated region
  $region22: #{_lambda_.39} parent=0 // pred_check
    _
  $region23: #{_lambda_.39} parent=0 // pred_check_branch
    %165 = sbr.rel (0) target = $region25
  $region24: #{_lambda_.39} parent=0 // pred_region
    _
  $region25: #{_lambda_.39} parent=0 // pred_fallthru
    _
  // Predicated region
  $region26: #{_lambda_.39} parent=0 // pred_check
    _
  $region27: #{_lambda_.39} parent=0 // pred_check_branch
    %167 = sbr.rel (0) target = $region29
  $region28: #{_lambda_.39} parent=0 // pred_region
    _
  $region29: #{_lambda_.39} parent=0 // pred_fallthru
    _

// kernel: _lambda_.41
$region0: #{_lambda_.41}
  #allocation0 [shape = 'u32[]', space=smem, size = 0x4, offset = 0x4, fixed_abs, tag = 'smem constant byte address 0x4 - core index']
  #allocation1 [shape = 'u32[144,128]{1,0:T(1,128)}', space=vmem, size = 0x12000, scoped, tag = 'internal scratch']
  #allocation2 [shape = 'f32[16,128]{1,0:T(8,128)}', space=vmem, size = 0x2000, scoped, tag = 'scratch operand']
  %s0 = inlined_call_operand.vmem [shape: bf16[16,128], index: 0, kind: input, shape index: {}]
  %s1 = inlined_call_operand.vmem [shape: bf16[128,128], index: 1, kind: input, shape index: {}]
  %s2 = inlined_call_operand.vmem [shape: f32[1,128], index: 2, kind: input, shape index: {}]
  %s3 = inlined_call_operand.vmem [shape: bf16[16,128], index: 3, kind: output, shape index: {}]
  %s4 = sld [smem:[#allocation0]]
  $region30: #{_lambda_.41} parent=0
    _
  %s6 = ssub.s32 1, %s4
  %s7 = scalar_select 0, %s6, %s4
  // Predicated region
  $region2: #{_lambda_.41} parent=0 // pred_check
    _
  $region3: #{_lambda_.41} parent=0 // pred_check_branch
    %9 = sbr.rel (0) target = $region5
  $region4: #{_lambda_.41} parent=0 // pred_region
    _
  $region5: #{_lambda_.41} parent=0 // pred_fallthru
    _
  // Predicated region
  $region6: #{_lambda_.41} parent=0 // pred_check
    _
  $region7: #{_lambda_.41} parent=0 // pred_check_branch
    %11 = sbr.rel (0) target = $region9
  $region8: #{_lambda_.41} parent=0 // pred_region
    _
  $region9: #{_lambda_.41} parent=0 // pred_fallthru
    _
  // Predicated region
  $region10: #{_lambda_.41} parent=0 // pred_check
    _
  $region11: #{_lambda_.41} parent=0 // pred_check_branch
    %13 = sbr.rel (0) target = $region13
  $region12: #{_lambda_.41} parent=0 // pred_region
    _
  $region13: #{_lambda_.41} parent=0 // pred_fallthru
    _
  %p15 = scmp.eq.s32.totalorder 0, 0
  // Predicated region
  $region14: #{_lambda_.41} parent=0 // pred_check
    %p16 = pneg %p15
  $region15: #{_lambda_.41} parent=0 // pred_check_branch
    %18 = sbr.rel (%p16) target = $region17
  $region16: #{_lambda_.41} parent=0 // pred_region
    %19 = vst [vmem:[#allocation2] sm:$0xff] 0.0
    %20 = vst [vmem:[#allocation2 + $0x8] sm:$0xff] 0.0
  $region17: #{_lambda_.41} parent=0 // pred_fallthru
    _
  %v21 = vld [vmem:[#allocation2] sm:$0xff]
  %v22 = vld [vmem:[#allocation2 + $0x8] sm:$0xff]
  %v23 = vld [vmem:[%s0] sm:$0xf]
  %v24 = vld [vmem:[%s0 + $0x4] sm:$0xf]
  %v25 = vld [vmem:[%s1] sm:$0xf]
  %v26 = vld [vmem:[%s1 + $0x4] sm:$0xf]
  %v27 = vld [vmem:[%s1 + $0x8] sm:$0xf]
  %v28 = vld [vmem:[%s1 + $0xc] sm:$0xf]
  %v29 = vld [vmem:[%s1 + $0x10] sm:$0xf]
  %v30 = vld [vmem:[%s1 + $0x14] sm:$0xf]
  %v31 = vld [vmem:[%s1 + $0x18] sm:$0xf]
  %v32 = vld [vmem:[%s1 + $0x1c] sm:$0xf]
  %v33 = vld [vmem:[%s1 + $0x20] sm:$0xf]
  %v34 = vld [vmem:[%s1 + $0x24] sm:$0xf]
  %v35 = vld [vmem:[%s1 + $0x28] sm:$0xf]
  %v36 = vld [vmem:[%s1 + $0x2c] sm:$0xf]
  %v37 = vld [vmem:[%s1 + $0x30] sm:$0xf]
  %v38 = vld [vmem:[%s1 + $0x34] sm:$0xf]
  %v39 = vld [vmem:[%s1 + $0x38] sm:$0xf]
  %v40 = vld [vmem:[%s1 + $0x3c] sm:$0xf]
  %v43 = vunpack.c.l.b16 %v23
  %v44 = vunpack.c.l.b16 %v24
  %v45 = vpack.c.b16 %v44, %v43
  %v63 = vunpack.c.l.b16 %v25
  %v64 = vunpack.c.l.b16 %v26
  %v65 = vunpack.c.l.b16 %v27
  %v66 = vunpack.c.l.b16 %v28
  %v67 = vunpack.c.l.b16 %v29
  %v68 = vunpack.c.l.b16 %v30
  %v69 = vunpack.c.l.b16 %v31
  %v70 = vunpack.c.l.b16 %v32
  %v71 = vunpack.c.l.b16 %v33
  %v72 = vunpack.c.l.b16 %v34
  %v73 = vunpack.c.l.b16 %v35
  %v74 = vunpack.c.l.b16 %v36
  %v75 = vunpack.c.l.b16 %v37
  %v76 = vunpack.c.l.b16 %v38
  %v77 = vunpack.c.l.b16 %v39
  %v78 = vunpack.c.l.b16 %v40
  %v79 = vpack.c.b16 %v64, %v63
  %v80 = vpack.c.b16 %v66, %v65
  %v81 = vpack.c.b16 %v68, %v67
  %v82 = vpack.c.b16 %v70, %v69
  %v83 = vpack.c.b16 %v72, %v71
  %v84 = vpack.c.b16 %v74, %v73
  %v85 = vpack.c.b16 %v76, %v75
  %v86 = vpack.c.b16 %v78, %v77
  %95 = vmatprep.subr.bf16.mxu0 0
  %96 = vmatpush1.bf16.msra.mxu0 %v86
  %97 = vmatprep.subr.bf16.mxu0 0
  %98 = vmatpush1.bf16.msra.mxu0 %v85
  %99 = vmatprep.subr.bf16.mxu0 0
  %100 = vmatpush1.bf16.msra.mxu0 %v84
  %101 = vmatprep.subr.bf16.mxu0 0
  %102 = vmatpush1.bf16.msra.mxu0 %v83
  %103 = vmatprep.subr.bf16.mxu0 0
  %104 = vmatpush1.bf16.msra.mxu0 %v82
  %105 = vmatprep.subr.bf16.mxu0 0
  %106 = vmatpush1.bf16.msra.mxu0 %v81
  %107 = vmatprep.subr.bf16.mxu0 0
  %108 = vmatpush1.bf16.msra.mxu0 %v80
  %109 = vmatprep.subr.bf16.mxu0 0
  %110 = vmatpush1.bf16.msra.mxu0 %v79
  %111 = vmatprep.subr.bf16.mxu0 0
  %112 = vmatpush2.bf16.msra.mxu0 0
  %113 = vmatprep.subr.bf16.mxu0 0
  %114 = vmatpush2.bf16.msra.mxu0 0
  %115 = vmatprep.subr.bf16.mxu0 0
  %116 = vmatpush2.bf16.msra.mxu0 0
  %117 = vmatprep.subr.bf16.mxu0 0
  %118 = vmatpush2.bf16.msra.mxu0 0
  %119 = vmatprep.subr.bf16.mxu0 0
  %120 = vmatpush2.bf16.msra.mxu0 0
  %121 = vmatprep.subr.bf16.mxu0 0
  %122 = vmatpush2.bf16.msra.mxu0 0
  %123 = vmatprep.subr.bf16.mxu0 0
  %124 = vmatpush2.bf16.msra.mxu0 0
  %125 = vmatprep.subr.bf16.mxu0 0
  %126 = vmatpush2.bf16.msra.mxu0 0
  %127 = vmatprep.mubr.bf16.mxu0 0
  %128 = vmatmul.mubr.bf16.gmra.mxu0 %v45
  %v129 = vpop.f32.mrf.mxu0
  %v130 = vadd.f32 0.0, %v129
  %v131 = vpop.f32.mrf.mxu0
  %v132 = vpop.f32.mrf.mxu0
  %v133 = vadd.f32 0.0, %v132
  %v134 = vpop.f32.mrf.mxu0
  %135 = vdwg.mxu0
  %v136 = vadd.f32 %v21, %v130
  %v137 = vadd.f32 %v22, %v133
  %138 = vst [vmem:[#allocation2] sm:$0xff] %v136
  %139 = vst [vmem:[#allocation2 + $0x8] sm:$0xff] %v137
  // Predicated region
  $region18: #{_lambda_.41} parent=0 // pred_check
    %p140 = pneg %p15
  $region19: #{_lambda_.41} parent=0 // pred_check_branch
    %142 = sbr.rel (%p140) target = $region21
  $region20: #{_lambda_.41} parent=0 // pred_region
    %v143 = vld [vmem:[#allocation2] sm:$0xff]
    %v144 = vld [vmem:[#allocation2 + $0x8] sm:$0xff]
    %v145 = vld [vmem:[%s2] sm:$0x1]
    %v147 = vlaneseq
    %v148 = vshrl.u32 %v147, 7
    %v149 = vsub.s32 0, %v148
    %v150 = vrot.slane %v145, %v149
    %v152 = vadd.f32 %v143, %v150
    %v153 = vadd.f32 %v144, %v150
    %v154 = vxor.u32 %v152, 2147483648
    %v155 = vxor.u32 %v153, 2147483648
    %v156 = vmul.f32 %v154, 1.442695
    %v157 = vpow.pop %v156
    %v158 = vmul.f32 %v155, 1.442695
    %v159 = vpow.pop %v158
    %v160 = vadd.f32 %v157, 1.0
    %v161 = vadd.f32 %v159, 1.0
    %v162 = vrcp.pop %v160
    %v163 = vmul.f32 1.0, %v162
    %v164 = vrcp.pop %v161
    %v165 = vmul.f32 1.0, %v164
    %v166 = vmul.f32 %v152, %v163
    %v167 = vmul.f32 %v153, %v165
    %v168 = vpack.c.bf16 %v167, %v166
    %v170 = vunpack.c.l.b16 %v168
    %v171 = vunpack.c.h.b16 %v168
    %v172 = vpack.c.b16 %v170, %v170
    %v173 = vpack.c.b16 %v171, %v171
    %176 = vst [vmem:[%s3] sm:$0xf] %v172
    %177 = vst [vmem:[%s3 + $0x4] sm:$0xf] %v173
  $region21: #{_lambda_.41} parent=0 // pred_fallthru
    _
  // Predicated region
  $region22: #{_lambda_.41} parent=0 // pred_check
    _
  $region23: #{_lambda_.41} parent=0 // pred_check_branch
    %179 = sbr.rel (0) target = $region25
  $region24: #{_lambda_.41} parent=0 // pred_region
    _
  $region25: #{_lambda_.41} parent=0 // pred_fallthru
    _
  // Predicated region
  $region26: #{_lambda_.41} parent=0 // pred_check
    _
  $region27: #{_lambda_.41} parent=0 // pred_check_branch
    %181 = sbr.rel (0) target = $region29
  $region28: #{_lambda_.41} parent=0 // pred_region
    _
  $region29: #{_lambda_.41} parent=0 // pred_fallthru
    _

// kernel: _lambda_.47
$region0: #{_lambda_.47}
  #allocation0 [shape = 'u32[]', space=smem, size = 0x4, offset = 0x4, fixed_abs, tag = 'smem constant byte address 0x4 - core index']
  #allocation1 [shape = 'u32[144,128]{1,0:T(1,128)}', space=vmem, size = 0x12000, scoped, tag = 'internal scratch']
  #allocation2 [shape = 'f32[128,128]{1,0:T(8,128)}', space=vmem, size = 0x10000, scoped, tag = 'scratch operand']
  %s0 = inlined_call_operand.vmem [shape: bf16[128,128], index: 0, kind: input, shape index: {}]
  %s1 = inlined_call_operand.vmem [shape: bf16[128,128], index: 1, kind: input, shape index: {}]
  %s2 = inlined_call_operand.vmem [shape: f32[1,128], index: 2, kind: input, shape index: {}]
  %s3 = inlined_call_operand.vmem [shape: bf16[128,128], index: 3, kind: output, shape index: {}]
  %s4 = sld [smem:[#allocation0]]
  $region30: #{_lambda_.47} parent=0
    _
  %s6 = ssub.s32 1, %s4
  %s7 = scalar_select 0, %s6, %s4
  // Predicated region
  $region2: #{_lambda_.47} parent=0 // pred_check
    _
  $region3: #{_lambda_.47} parent=0 // pred_check_branch
    %9 = sbr.rel (0) target = $region5
  $region4: #{_lambda_.47} parent=0 // pred_region
    _
  $region5: #{_lambda_.47} parent=0 // pred_fallthru
    _
  // Predicated region
  $region6: #{_lambda_.47} parent=0 // pred_check
    _
  $region7: #{_lambda_.47} parent=0 // pred_check_branch
    %11 = sbr.rel (0) target = $region9
  $region8: #{_lambda_.47} parent=0 // pred_region
    _
  $region9: #{_lambda_.47} parent=0 // pred_fallthru
    _
  // Predicated region
  $region10: #{_lambda_.47} parent=0 // pred_check
    _
  $region11: #{_lambda_.47} parent=0 // pred_check_branch
    %13 = sbr.rel (0) target = $region13
  $region12: #{_lambda_.47} parent=0 // pred_region
    _
  $region13: #{_lambda_.47} parent=0 // pred_fallthru
    _
  %p15 = scmp.eq.s32.totalorder 0, 0
  // Predicated region
  $region14: #{_lambda_.47} parent=0 // pred_check
    %p16 = pneg %p15
  $region15: #{_lambda_.47} parent=0 // pred_check_branch
    %18 = sbr.rel (%p16) target = $region17
  $region16: #{_lambda_.47} parent=0 // pred_region
    %19 = vst [vmem:[#allocation2] sm:$0xff] 0.0
    %20 = vst [vmem:[#allocation2 + $0x8] sm:$0xff] 0.0
    %21 = vst [vmem:[#allocation2 + $0x10] sm:$0xff] 0.0
    %22 = vst [vmem:[#allocation2 + $0x18] sm:$0xff] 0.0
    %23 = vst [vmem:[#allocation2 + $0x20] sm:$0xff] 0.0
    %24 = vst [vmem:[#allocation2 + $0x28] sm:$0xff] 0.0
    %25 = vst [vmem:[#allocation2 + $0x30] sm:$0xff] 0.0
    %26 = vst [vmem:[#allocation2 + $0x38] sm:$0xff] 0.0
    %27 = vst [vmem:[#allocation2 + $0x40] sm:$0xff] 0.0
    %28 = vst [vmem:[#allocation2 + $0x48] sm:$0xff] 0.0
    %29 = vst [vmem:[#allocation2 + $0x50] sm:$0xff] 0.0
    %30 = vst [vmem:[#allocation2 + $0x58] sm:$0xff] 0.0
    %31 = vst [vmem:[#allocation2 + $0x60] sm:$0xff] 0.0
    %32 = vst [vmem:[#allocation2 + $0x68] sm:$0xff] 0.0
    %33 = vst [vmem:[#allocation2 + $0x70] sm:$0xff] 0.0
    %34 = vst [vmem:[#allocation2 + $0x78] sm:$0xff] 0.0
  $region17: #{_lambda_.47} parent=0 // pred_fallthru
    _
  %v35 = vld [vmem:[#allocation2] sm:$0xff]
  %v36 = vld [vmem:[#allocation2 + $0x8] sm:$0xff]
  %v37 = vld [vmem:[#allocation2 + $0x10] sm:$0xff]
  %v38 = vld [vmem:[#allocation2 + $0x18] sm:$0xff]
  %v39 = vld [vmem:[#allocation2 + $0x20] sm:$0xff]
  %v40 = vld [vmem:[#allocation2 + $0x28] sm:$0xff]
  %v41 = vld [vmem:[#allocation2 + $0x30] sm:$0xff]
  %v42 = vld [vmem:[#allocation2 + $0x38] sm:$0xff]
  %v43 = vld [vmem:[#allocation2 + $0x40] sm:$0xff]
  %v44 = vld [vmem:[#allocation2 + $0x48] sm:$0xff]
  %v45 = vld [vmem:[#allocation2 + $0x50] sm:$0xff]
  %v46 = vld [vmem:[#allocation2 + $0x58] sm:$0xff]
  %v47 = vld [vmem:[#allocation2 + $0x60] sm:$0xff]
  %v48 = vld [vmem:[#allocation2 + $0x68] sm:$0xff]
  %v49 = vld [vmem:[#allocation2 + $0x70] sm:$0xff]
  %v50 = vld [vmem:[#allocation2 + $0x78] sm:$0xff]
  %v51 = vld [vmem:[%s0] sm:$0xf]
  %v52 = vld [vmem:[%s0 + $0x4] sm:$0xf]
  %v53 = vld [vmem:[%s0 + $0x8] sm:$0xf]
  %v54 = vld [vmem:[%s0 + $0xc] sm:$0xf]
  %v55 = vld [vmem:[%s0 + $0x10] sm:$0xf]
  %v56 = vld [vmem:[%s0 + $0x14] sm:$0xf]
  %v57 = vld [vmem:[%s0 + $0x18] sm:$0xf]
  %v58 = vld [vmem:[%s0 + $0x1c] sm:$0xf]
  %v59 = vld [vmem:[%s0 + $0x20] sm:$0xf]
  %v60 = vld [vmem:[%s0 + $0x24] sm:$0xf]
  %v61 = vld [vmem:[%s0 + $0x28] sm:$0xf]
  %v62 = vld [vmem:[%s0 + $0x2c] sm:$0xf]
  %v63 = vld [vmem:[%s0 + $0x30] sm:$0xf]
  %v64 = vld [vmem:[%s0 + $0x34] sm:$0xf]
  %v65 = vld [vmem:[%s0 + $0x38] sm:$0xf]
  %v66 = vld [vmem:[%s0 + $0x3c] sm:$0xf]
  %v67 = vld [vmem:[%s1] sm:$0xf]
  %v68 = vld [vmem:[%s1 + $0x4] sm:$0xf]
  %v69 = vld [vmem:[%s1 + $0x8] sm:$0xf]
  %v70 = vld [vmem:[%s1 + $0xc] sm:$0xf]
  %v71 = vld [vmem:[%s1 + $0x10] sm:$0xf]
  %v72 = vld [vmem:[%s1 + $0x14] sm:$0xf]
  %v73 = vld [vmem:[%s1 + $0x18] sm:$0xf]
  %v74 = vld [vmem:[%s1 + $0x1c] sm:$0xf]
  %v75 = vld [vmem:[%s1 + $0x20] sm:$0xf]
  %v76 = vld [vmem:[%s1 + $0x24] sm:$0xf]
  %v77 = vld [vmem:[%s1 + $0x28] sm:$0xf]
  %v78 = vld [vmem:[%s1 + $0x2c] sm:$0xf]
  %v79 = vld [vmem:[%s1 + $0x30] sm:$0xf]
  %v80 = vld [vmem:[%s1 + $0x34] sm:$0xf]
  %v81 = vld [vmem:[%s1 + $0x38] sm:$0xf]
  %v82 = vld [vmem:[%s1 + $0x3c] sm:$0xf]
  %v99 = vunpack.c.l.b16 %v51
  %v100 = vunpack.c.l.b16 %v52
  %v101 = vunpack.c.l.b16 %v53
  %v102 = vunpack.c.l.b16 %v54
  %v103 = vunpack.c.l.b16 %v55
  %v104 = vunpack.c.l.b16 %v56
  %v105 = vunpack.c.l.b16 %v57
  %v106 = vunpack.c.l.b16 %v58
  %v107 = vunpack.c.l.b16 %v59
  %v108 = vunpack.c.l.b16 %v60
  %v109 = vunpack.c.l.b16 %v61
  %v110 = vunpack.c.l.b16 %v62
  %v111 = vunpack.c.l.b16 %v63
  %v112 = vunpack.c.l.b16 %v64
  %v113 = vunpack.c.l.b16 %v65
  %v114 = vunpack.c.l.b16 %v66
  %v115 = vpack.c.b16 %v100, %v99
  %v116 = vpack.c.b16 %v102, %v101
  %v117 = vpack.c.b16 %v104, %v103
  %v118 = vpack.c.b16 %v106, %v105
  %v119 = vpack.c.b16 %v108, %v107
  %v120 = vpack.c.b16 %v110, %v109
  %v121 = vpack.c.b16 %v112, %v111
  %v122 = vpack.c.b16 %v114, %v113
  %v147 = vunpack.c.l.b16 %v67
  %v148 = vunpack.c.l.b16 %v68
  %v149 = vunpack.c.l.b16 %v69
  %v150 = vunpack.c.l.b16 %v70
  %v151 = vunpack.c.l.b16 %v71
  %v152 = vunpack.c.l.b16 %v72
  %v153 = vunpack.c.l.b16 %v73
  %v154 = vunpack.c.l.b16 %v74
  %v155 = vunpack.c.l.b16 %v75
  %v156 = vunpack.c.l.b16 %v76
  %v157 = vunpack.c.l.b16 %v77
  %v158 = vunpack.c.l.b16 %v78
  %v159 = vunpack.c.l.b16 %v79
  %v160 = vunpack.c.l.b16 %v80
  %v161 = vunpack.c.l.b16 %v81
  %v162 = vunpack.c.l.b16 %v82
  %v163 = vpack.c.b16 %v148, %v147
  %v164 = vpack.c.b16 %v150, %v149
  %v165 = vpack.c.b16 %v152, %v151
  %v166 = vpack.c.b16 %v154, %v153
  %v167 = vpack.c.b16 %v156, %v155
  %v168 = vpack.c.b16 %v158, %v157
  %v169 = vpack.c.b16 %v160, %v159
  %v170 = vpack.c.b16 %v162, %v161
  %179 = vmatprep.subr.bf16.mxu0 0
  %180 = vmatpush1.bf16.msra.mxu0 %v170
  %181 = vmatprep.subr.bf16.mxu0 0
  %182 = vmatpush1.bf16.msra.mxu0 %v169
  %183 = vmatprep.subr.bf16.mxu0 0
  %184 = vmatpush1.bf16.msra.mxu0 %v168
  %185 = vmatprep.subr.bf16.mxu0 0
  %186 = vmatpush1.bf16.msra.mxu0 %v167
  %187 = vmatprep.subr.bf16.mxu0 0
  %188 = vmatpush1.bf16.msra.mxu0 %v166
  %189 = vmatprep.subr.bf16.mxu0 0
  %190 = vmatpush1.bf16.msra.mxu0 %v165
  %191 = vmatprep.subr.bf16.mxu0 0
  %192 = vmatpush1.bf16.msra.mxu0 %v164
  %193 = vmatprep.subr.bf16.mxu0 0
  %194 = vmatpush1.bf16.msra.mxu0 %v163
  %195 = vmatprep.subr.bf16.mxu0 0
  %196 = vmatpush2.bf16.msra.mxu0 0
  %197 = vmatprep.subr.bf16.mxu0 0
  %198 = vmatpush2.bf16.msra.mxu0 0
  %199 = vmatprep.subr.bf16.mxu0 0
  %200 = vmatpush2.bf16.msra.mxu0 0
  %201 = vmatprep.subr.bf16.mxu0 0
  %202 = vmatpush2.bf16.msra.mxu0 0
  %203 = vmatprep.subr.bf16.mxu0 0
  %204 = vmatpush2.bf16.msra.mxu0 0
  %205 = vmatprep.subr.bf16.mxu0 0
  %206 = vmatpush2.bf16.msra.mxu0 0
  %207 = vmatprep.subr.bf16.mxu0 0
  %208 = vmatpush2.bf16.msra.mxu0 0
  %209 = vmatprep.subr.bf16.mxu0 0
  %210 = vmatpush2.bf16.msra.mxu0 0
  %211 = vmatprep.mubr.bf16.mxu0 0
  %212 = vmatmul.mubr.bf16.gmra.mxu0 %v115
  %v213 = vpop.f32.mrf.mxu0
  %v214 = vadd.f32 0.0, %v213
  %v215 = vpop.f32.mrf.mxu0
  %v216 = vpop.f32.mrf.mxu0
  %v217 = vadd.f32 0.0, %v216
  %v218 = vpop.f32.mrf.mxu0
  %219 = vmatprep.mubr.bf16.mxu0 0
  %220 = vmatmul.mubr.bf16.gmra.mxu0 %v116
  %v221 = vpop.f32.mrf.mxu0
  %v222 = vadd.f32 0.0, %v221
  %v223 = vpop.f32.mrf.mxu0
  %v224 = vpop.f32.mrf.mxu0
  %v225 = vadd.f32 0.0, %v224
  %v226 = vpop.f32.mrf.mxu0
  %227 = vmatprep.mubr.bf16.mxu0 0
  %228 = vmatmul.mubr.bf16.gmra.mxu0 %v117
  %v229 = vpop.f32.mrf.mxu0
  %v230 = vadd.f32 0.0, %v229
  %v231 = vpop.f32.mrf.mxu0
  %v232 = vpop.f32.mrf.mxu0
  %v233 = vadd.f32 0.0, %v232
  %v234 = vpop.f32.mrf.mxu0
  %235 = vmatprep.mubr.bf16.mxu0 0
  %236 = vmatmul.mubr.bf16.gmra.mxu0 %v118
  %v237 = vpop.f32.mrf.mxu0
  %v238 = vadd.f32 0.0, %v237
  %v239 = vpop.f32.mrf.mxu0
  %v240 = vpop.f32.mrf.mxu0
  %v241 = vadd.f32 0.0, %v240
  %v242 = vpop.f32.mrf.mxu0
  %243 = vmatprep.mubr.bf16.mxu0 0
  %244 = vmatmul.mubr.bf16.gmra.mxu0 %v119
  %v245 = vpop.f32.mrf.mxu0
  %v246 = vadd.f32 0.0, %v245
  %v247 = vpop.f32.mrf.mxu0
  %v248 = vpop.f32.mrf.mxu0
  %v249 = vadd.f32 0.0, %v248
  %v250 = vpop.f32.mrf.mxu0
  %251 = vmatprep.mubr.bf16.mxu0 0
  %252 = vmatmul.mubr.bf16.gmra.mxu0 %v120
  %v253 = vpop.f32.mrf.mxu0
  %v254 = vadd.f32 0.0, %v253
  %v255 = vpop.f32.mrf.mxu0
  %v256 = vpop.f32.mrf.mxu0
  %v257 = vadd.f32 0.0, %v256
  %v258 = vpop.f32.mrf.mxu0
  %259 = vmatprep.mubr.bf16.mxu0 0
  %260 = vmatmul.mubr.bf16.gmra.mxu0 %v121
  %v261 = vpop.f32.mrf.mxu0
  %v262 = vadd.f32 0.0, %v261
  %v263 = vpop.f32.mrf.mxu0
  %v264 = vpop.f32.mrf.mxu0
  %v265 = vadd.f32 0.0, %v264
  %v266 = vpop.f32.mrf.mxu0
  %267 = vmatprep.mubr.bf16.mxu0 0
  %268 = vmatmul.mubr.bf16.gmra.mxu0 %v122
  %v269 = vpop.f32.mrf.mxu0
  %v270 = vadd.f32 0.0, %v269
  %v271 = vpop.f32.mrf.mxu0
  %v272 = vpop.f32.mrf.mxu0
  %v273 = vadd.f32 0.0, %v272
  %v274 = vpop.f32.mrf.mxu0
  %275 = vdwg.mxu0
  %v276 = vadd.f32 %v35, %v214
  %v277 = vadd.f32 %v36, %v217
  %v278 = vadd.f32 %v37, %v222
  %v279 = vadd.f32 %v38, %v225
  %v280 = vadd.f32 %v39, %v230
  %v281 = vadd.f32 %v40, %v233
  %v282 = vadd.f32 %v41, %v238
  %v283 = vadd.f32 %v42, %v241
  %v284 = vadd.f32 %v43, %v246
  %v285 = vadd.f32 %v44, %v249
  %v286 = vadd.f32 %v45, %v254
  %v287 = vadd.f32 %v46, %v257
  %v288 = vadd.f32 %v47, %v262
  %v289 = vadd.f32 %v48, %v265
  %v290 = vadd.f32 %v49, %v270
  %v291 = vadd.f32 %v50, %v273
  %292 = vst [vmem:[#allocation2] sm:$0xff] %v276
  %293 = vst [vmem:[#allocation2 + $0x8] sm:$0xff] %v277
  %294 = vst [vmem:[#allocation2 + $0x10] sm:$0xff] %v278
  %295 = vst [vmem:[#allocation2 + $0x18] sm:$0xff] %v279
  %296 = vst [vmem:[#allocation2 + $0x20] sm:$0xff] %v280
  %297 = vst [vmem:[#allocation2 + $0x28] sm:$0xff] %v281
  %298 = vst [vmem:[#allocation2 + $0x30] sm:$0xff] %v282
  %299 = vst [vmem:[#allocation2 + $0x38] sm:$0xff] %v283
  %300 = vst [vmem:[#allocation2 + $0x40] sm:$0xff] %v284
  %301 = vst [vmem:[#allocation2 + $0x48] sm:$0xff] %v285
  %302 = vst [vmem:[#allocation2 + $0x50] sm:$0xff] %v286
  %303 = vst [vmem:[#allocation2 + $0x58] sm:$0xff] %v287
  %304 = vst [vmem:[#allocation2 + $0x60] sm:$0xff] %v288
  %305 = vst [vmem:[#allocation2 + $0x68] sm:$0xff] %v289
  %306 = vst [vmem:[#allocation2 + $0x70] sm:$0xff] %v290
  %307 = vst [vmem:[#allocation2 + $0x78] sm:$0xff] %v291
  // Predicated region
  $region18: #{_lambda_.47} parent=0 // pred_check
    %p308 = pneg %p15
  $region19: #{_lambda_.47} parent=0 // pred_check_branch
    %310 = sbr.rel (%p308) target = $region21
  $region20: #{_lambda_.47} parent=0 // pred_region
    %v311 = vld [vmem:[#allocation2] sm:$0xff]
    %v312 = vld [vmem:[#allocation2 + $0x8] sm:$0xff]
    %v313 = vld [vmem:[#allocation2 + $0x10] sm:$0xff]
    %v314 = vld [vmem:[#allocation2 + $0x18] sm:$0xff]
    %v315 = vld [vmem:[#allocation2 + $0x20] sm:$0xff]
    %v316 = vld [vmem:[#allocation2 + $0x28] sm:$0xff]
    %v317 = vld [vmem:[#allocation2 + $0x30] sm:$0xff]
    %v318 = vld [vmem:[#allocation2 + $0x38] sm:$0xff]
    %v319 = vld [vmem:[#allocation2 + $0x40] sm:$0xff]
    %v320 = vld [vmem:[#allocation2 + $0x48] sm:$0xff]
    %v321 = vld [vmem:[#allocation2 + $0x50] sm:$0xff]
    %v322 = vld [vmem:[#allocation2 + $0x58] sm:$0xff]
    %v323 = vld [vmem:[#allocation2 + $0x60] sm:$0xff]
    %v324 = vld [vmem:[#allocation2 + $0x68] sm:$0xff]
    %v325 = vld [vmem:[#allocation2 + $0x70] sm:$0xff]
    %v326 = vld [vmem:[#allocation2 + $0x78] sm:$0xff]
    %v327 = vld [vmem:[%s2] sm:$0x1]
    %v329 = vlaneseq
    %v330 = vshrl.u32 %v329, 7
    %v331 = vsub.s32 0, %v330
    %v332 = vrot.slane %v327, %v331
    %v334 = vadd.f32 %v311, %v332
    %v335 = vadd.f32 %v312, %v332
    %v336 = vadd.f32 %v313, %v332
    %v337 = vadd.f32 %v314, %v332
    %v338 = vadd.f32 %v315, %v332
    %v339 = vadd.f32 %v316, %v332
    %v340 = vadd.f32 %v317, %v332
    %v341 = vadd.f32 %v318, %v332
    %v342 = vadd.f32 %v319, %v332
    %v343 = vadd.f32 %v320, %v332
    %v344 = vadd.f32 %v321, %v332
    %v345 = vadd.f32 %v322, %v332
    %v346 = vadd.f32 %v323, %v332
    %v347 = vadd.f32 %v324, %v332
    %v348 = vadd.f32 %v325, %v332
    %v349 = vadd.f32 %v326, %v332
    %v350 = vpack.c.bf16 %v335, %v334
    %v351 = vpack.c.bf16 %v337, %v336
    %v352 = vpack.c.bf16 %v339, %v338
    %v353 = vpack.c.bf16 %v341, %v340
    %v354 = vpack.c.bf16 %v343, %v342
    %v355 = vpack.c.bf16 %v345, %v344
    %v356 = vpack.c.bf16 %v347, %v346
    %v357 = vpack.c.bf16 %v349, %v348
    %v366 = vunpack.c.l.b16 %v350
    %v367 = vunpack.c.h.b16 %v350
    %v368 = vunpack.c.l.b16 %v351
    %v369 = vunpack.c.h.b16 %v351
    %v370 = vunpack.c.l.b16 %v352
    %v371 = vunpack.c.h.b16 %v352
    %v372 = vunpack.c.l.b16 %v353
    %v373 = vunpack.c.h.b16 %v353
    %v374 = vunpack.c.l.b16 %v354
    %v375 = vunpack.c.h.b16 %v354
    %v376 = vunpack.c.l.b16 %v355
    %v377 = vunpack.c.h.b16 %v355
    %v378 = vunpack.c.l.b16 %v356
    %v379 = vunpack.c.h.b16 %v356
    %v380 = vunpack.c.l.b16 %v357
    %v381 = vunpack.c.h.b16 %v357
    %v382 = vpack.c.b16 %v366, %v366
    %v383 = vpack.c.b16 %v367, %v367
    %v384 = vpack.c.b16 %v368, %v368
    %v385 = vpack.c.b16 %v369, %v369
    %v386 = vpack.c.b16 %v370, %v370
    %v387 = vpack.c.b16 %v371, %v371
    %v388 = vpack.c.b16 %v372, %v372
    %v389 = vpack.c.b16 %v373, %v373
    %v390 = vpack.c.b16 %v374, %v374
    %v391 = vpack.c.b16 %v375, %v375
    %v392 = vpack.c.b16 %v376, %v376
    %v393 = vpack.c.b16 %v377, %v377
    %v394 = vpack.c.b16 %v378, %v378
    %v395 = vpack.c.b16 %v379, %v379
    %v396 = vpack.c.b16 %v380, %v380
    %v397 = vpack.c.b16 %v381, %v381
    %414 = vst [vmem:[%s3] sm:$0xf] %v382
    %415 = vst [vmem:[%s3 + $0x4] sm:$0xf] %v383
    %416 = vst [vmem:[%s3 + $0x8] sm:$0xf] %v384
    %417 = vst [vmem:[%s3 + $0xc] sm:$0xf] %v385
    %418 = vst [vmem:[%s3 + $0x10] sm:$0xf] %v386
    %419 = vst [vmem:[%s3 + $0x14] sm:$0xf] %v387
    %420 = vst [vmem:[%s3 + $0x18] sm:$0xf] %v388
    %421 = vst [vmem:[%s3 + $0x1c] sm:$0xf] %v389
    %422 = vst [vmem:[%s3 + $0x20] sm:$0xf] %v390
    %423 = vst [vmem:[%s3 + $0x24] sm:$0xf] %v391
    %424 = vst [vmem:[%s3 + $0x28] sm:$0xf] %v392
    %425 = vst [vmem:[%s3 + $0x2c] sm:$0xf] %v393
    %426 = vst [vmem:[%s3 + $0x30] sm:$0xf] %v394
    %427 = vst [vmem:[%s3 + $0x34] sm:$0xf] %v395
    %428 = vst [vmem:[%s3 + $0x38] sm:$0xf] %v396
    %429 = vst [vmem:[%s3 + $0x3c] sm:$0xf] %v397
  $region21: #{_lambda_.47} parent=0 // pred_fallthru
    _
  // Predicated region
  $region22: #{_lambda_.47} parent=0 // pred_check
    _
  $region23: #{_lambda_.47} parent=0 // pred_check_branch
    %431 = sbr.rel (0) target = $region25
  $region24: #{_lambda_.47} parent=0 // pred_region
    _
  $region25: #{_lambda_.47} parent=0 // pred_fallthru
    _
  // Predicated region
  $region26: #{_lambda_.47} parent=0 // pred_check
    _
  $region27: #{_lambda_.47} parent=0 // pred_check_branch
    %433 = sbr.rel (0) target = $region29
  $region28: #{_lambda_.47} parent=0 // pred_region
    _
  $region29: #{_lambda_.47} parent=0 // pred_fallthru
    _

// kernel: _lambda_.48
$region0: #{_lambda_.48}
  #allocation0 [shape = 'u32[]', space=smem, size = 0x4, offset = 0x4, fixed_abs, tag = 'smem constant byte address 0x4 - core index']
  #allocation1 [shape = 'u32[144,128]{1,0:T(1,128)}', space=vmem, size = 0x12000, scoped, tag = 'internal scratch']
  %s0 = inlined_call_operand.vmem [shape: s32[2], index: 0, kind: input, shape index: {}]
  %s1 = inlined_call_operand.vmem [shape: bf16[2,8,32], index: 1, kind: input, shape index: {}]
  %s2 = inlined_call_operand.vmem [shape: bf16[2,8,32], index: 2, kind: input, shape index: {}]
  %s3 = inlined_call_operand.vmem [shape: bf16[2,8,32], index: 3, kind: input, shape index: {}]
  %s4 = inlined_call_operand.vmem [shape: bf16[2,4,8,8], index: 4, kind: input, shape index: {}]
  %s5 = inlined_call_operand.vmem [shape: f32[1,32], index: 5, kind: input, shape index: {}]
  %s6 = inlined_call_operand.vmem [shape: f32[1,32], index: 6, kind: input, shape index: {}]
  %s7 = inlined_call_operand.vmem [shape: bf16[2,8,32], index: 7, kind: output, shape index: {}]
  %s8 = sld [smem:[#allocation0]]
  $region65: #{_lambda_.48} parent=0
    _
  %s10 = ssub.s32 1, %s8
  %s11 = scalar_select 0, %s10, %s8
  $region1: #{_lambda_.48} parent=0
    #allocation2 [shape = 'u8[512]{0}', space=smem, size = 0x200, scoped, tag = 'input window, operand 0, single buffered']
    #allocation3 [shape = 's32[2]{0}', space=sflag, size = 0x8, scoped, tag = 'scoped memory for _lambda_.48']
    %12 = vsyncpa [#allocation3], 0
    loop: start=0, step=1, limit=4
    $region2: #{_lambda_.48} parent=1 // loop_pre_header
      _
    $region3: #{_lambda_.48} parent=1 // loop_header
      %s14 = sphi 0, %s18
      %p15 = scmp.ge.s32.totalorder %s14, 4
      %s21 = sphi 0, %s40
      %s22 = sphi 0, %s36
      %s23 = sphi 0, %s32
      %s24 = sphi 0, %s21
      %s25 = sphi 0, %s22
      %s26 = sphi 0, %s23
      %s27 = sphi 0, %s24
      %s28 = sphi 0, %s25
      %s29 = sphi 0, %s26
      %s41 = sphi 0, %s41
      %s43 = sphi 0, %s41
      %s44 = sphi 0, %s43
      %s58 = sphi 0, %s44
      %s68 = sphi 0, %s70
      %s71 = sphi 0, %s68
      %s72 = sphi 0, %s71
      %s88 = sphi 0, %s72
      %s96 = sphi 0, %s98
      %s99 = sphi 0, %s96
      %s100 = sphi 0, %s99
      %s116 = sphi 0, %s100
      %s124 = sphi 0, %s126
      %s127 = sphi 0, %s124
      %s128 = sphi 0, %s127
      %s144 = sphi 0, %s128
      %s154 = sphi 0, %s156
      %s157 = sphi 0, %s154
      %s158 = sphi 0, %s157
      %s174 = sphi 0, %s158
      %s180 = sphi 0, %s182
      %s183 = sphi 0, %s180
      %s184 = sphi 0, %s183
      %s200 = sphi 0, %s184
      %s206 = sphi 0, %s208
      %s209 = sphi 0, %s206
      %s210 = sphi 0, %s209
      %s226 = sphi 0, %s210
      %s236 = sphi 0, %s238
      %s239 = sphi 0, %s236
      %s240 = sphi 0, %s239
      %s256 = sphi 0, %s240
    $region4: #{_lambda_.48} parent=1 // loop_header_branch
      %17 = sbr.rel (%p15) target = $region8
    $region5: #{_lambda_.48} parent=1 // loop_body
      %s19 = ssub.s32 %s14, 1
      %s20 = ssub.s32 %s14, 2
      %s30 = sadd.s32 1, %s23
      %p31 = scmp.ge.s32.totalorder %s30, 1
      %s32 = scalar_select %p31, 0, %s30
      %s33 = sadd.s32 1, %s22
      %s34 = scalar_select %p31, %s33, %s22
      %p35 = scmp.ge.s32.totalorder %s34, 1
      %s36 = scalar_select %p35, 0, %s34
      %s37 = sadd.s32 1, %s21
      %s38 = scalar_select %p35, %s37, %s21
      %p39 = scmp.ge.s32.totalorder %s38, 2
      %s40 = scalar_select %p39, 0, %s38
      %s42 = sadd.s32 %s41, 1
      %p45 = scmp.eq.s32.totalorder %s14, 1
      %p46 = scmp.ne.s32.totalorder %s41, %s43
      %p47 = scmp.eq.s32.totalorder %s14, 0
      %p48 = por %p46, %p47
      %p49 = scmp.ne.s32.totalorder %s41, %s43
      %p50 = scmp.eq.s32.totalorder %s19, 1
      %p51 = por %p49, %p50
      %p52 = scmp.ne.s32.totalorder %s43, %s44
      %p53 = scmp.eq.s32.totalorder %s19, 0
      %p54 = por %p52, %p53
      %p55 = scmp.ne.s32.totalorder %s43, %s44
      %p56 = scmp.eq.s32.totalorder %s20, 1
      %p57 = por %p55, %p56
      %p59 = scmp.ne.s32.totalorder %s44, %s58
      %p60 = scmp.eq.s32.totalorder %s20, 0
      %p61 = por %p59, %p60
      %s62 = ssub.s32 %s21, %s40
      %s63 = ssub.s32 %s23, %s32
      %s64 = sor.u32 %s62, %s63
      %s65 = ssub.s32 %s22, %s36
      %s66 = sor.u32 %s64, %s65
      %p67 = scmp.eq.s32.totalorder %s66, 0
      %s69 = sadd.s32 %s68, 1
      %s70 = scalar_select %p67, %s68, %s69
      %p73 = pneg %p67
      %p74 = scmp.eq.s32.totalorder %s14, 1
      %p75 = por %p73, %p74
      %p76 = scmp.ne.s32.totalorder %s68, %s71
      %p77 = scmp.eq.s32.totalorder %s14, 0
      %p78 = por %p76, %p77
      %p79 = scmp.ne.s32.totalorder %s68, %s71
      %p80 = scmp.eq.s32.totalorder %s19, 1
      %p81 = por %p79, %p80
      %p82 = scmp.ne.s32.totalorder %s71, %s72
      %p83 = scmp.eq.s32.totalorder %s19, 0
      %p84 = por %p82, %p83
      %p85 = scmp.ne.s32.totalorder %s71, %s72
      %p86 = scmp.eq.s32.totalorder %s20, 1
      %p87 = por %p85, %p86
      %p89 = scmp.ne.s32.totalorder %s72, %s88
      %p90 = scmp.eq.s32.totalorder %s20, 0
      %p91 = por %p89, %p90
      %s92 = ssub.s32 %s21, %s40
      %s93 = ssub.s32 %s22, %s36
      %s94 = sor.u32 %s92, %s93
      %p95 = scmp.eq.s32.totalorder %s94, 0
      %s97 = sadd.s32 %s96, 1
      %s98 = scalar_select %p95, %s96, %s97
      %p101 = pneg %p95
      %p102 = scmp.eq.s32.totalorder %s14, 1
      %p103 = por %p101, %p102
      %p104 = scmp.ne.s32.totalorder %s96, %s99
      %p105 = scmp.eq.s32.totalorder %s14, 0
      %p106 = por %p104, %p105
      %p107 = scmp.ne.s32.totalorder %s96, %s99
      %p108 = scmp.eq.s32.totalorder %s19, 1
      %p109 = por %p107, %p108
      %p110 = scmp.ne.s32.totalorder %s99, %s100
      %p111 = scmp.eq.s32.totalorder %s19, 0
      %p112 = por %p110, %p111
      %p113 = scmp.ne.s32.totalorder %s99, %s100
      %p114 = scmp.eq.s32.totalorder %s20, 1
      %p115 = por %p113, %p114
      %p117 = scmp.ne.s32.totalorder %s100, %s116
      %p118 = scmp.eq.s32.totalorder %s20, 0
      %p119 = por %p117, %p118
      %s120 = ssub.s32 %s21, %s40
      %s121 = ssub.s32 %s22, %s36
      %s122 = sor.u32 %s120, %s121
      %p123 = scmp.eq.s32.totalorder %s122, 0
      %s125 = sadd.s32 %s124, 1
      %s126 = scalar_select %p123, %s124, %s125
      %p129 = pneg %p123
      %p130 = scmp.eq.s32.totalorder %s14, 1
      %p131 = por %p129, %p130
      %p132 = scmp.ne.s32.totalorder %s124, %s127
      %p133 = scmp.eq.s32.totalorder %s14, 0
      %p134 = por %p132, %p133
      %p135 = scmp.ne.s32.totalorder %s124, %s127
      %p136 = scmp.eq.s32.totalorder %s19, 1
      %p137 = por %p135, %p136
      %p138 = scmp.ne.s32.totalorder %s127, %s128
      %p139 = scmp.eq.s32.totalorder %s19, 0
      %p140 = por %p138, %p139
      %p141 = scmp.ne.s32.totalorder %s127, %s128
      %p142 = scmp.eq.s32.totalorder %s20, 1
      %p143 = por %p141, %p142
      %p145 = scmp.ne.s32.totalorder %s128, %s144
      %p146 = scmp.eq.s32.totalorder %s20, 0
      %p147 = por %p145, %p146
      %s148 = ssub.s32 %s21, %s40
      %s149 = ssub.s32 %s22, %s36
      %s150 = sor.u32 %s148, %s149
      %s151 = ssub.s32 %s23, %s32
      %s152 = sor.u32 %s150, %s151
      %p153 = scmp.eq.s32.totalorder %s152, 0
      %s155 = sadd.s32 %s154, 1
      %s156 = scalar_select %p153, %s154, %s155
      %p159 = pneg %p153
      %p160 = scmp.eq.s32.totalorder %s14, 1
      %p161 = por %p159, %p160
      %p162 = scmp.ne.s32.totalorder %s154, %s157
      %p163 = scmp.eq.s32.totalorder %s14, 0
      %p164 = por %p162, %p163
      %p165 = scmp.ne.s32.totalorder %s154, %s157
      %p166 = scmp.eq.s32.totalorder %s19, 1
      %p167 = por %p165, %p166
      %p168 = scmp.ne.s32.totalorder %s157, %s158
      %p169 = scmp.eq.s32.totalorder %s19, 0
      %p170 = por %p168, %p169
      %p171 = scmp.ne.s32.totalorder %s157, %s158
      %p172 = scmp.eq.s32.totalorder %s20, 1
      %p173 = por %p171, %p172
      %p175 = scmp.ne.s32.totalorder %s158, %s174
      %p176 = scmp.eq.s32.totalorder %s20, 0
      %p177 = por %p175, %p176
      %s178 = ssub.s32 %s22, %s36
      %p179 = scmp.eq.s32.totalorder %s178, 0
      %s181 = sadd.s32 %s180, 1
      %s182 = scalar_select %p179, %s180, %s181
      %p185 = pneg %p179
      %p186 = scmp.eq.s32.totalorder %s14, 1
      %p187 = por %p185, %p186
      %p188 = scmp.ne.s32.totalorder %s180, %s183
      %p189 = scmp.eq.s32.totalorder %s14, 0
      %p190 = por %p188, %p189
      %p191 = scmp.ne.s32.totalorder %s180, %s183
      %p192 = scmp.eq.s32.totalorder %s19, 1
      %p193 = por %p191, %p192
      %p194 = scmp.ne.s32.totalorder %s183, %s184
      %p195 = scmp.eq.s32.totalorder %s19, 0
      %p196 = por %p194, %p195
      %p197 = scmp.ne.s32.totalorder %s183, %s184
      %p198 = scmp.eq.s32.totalorder %s20, 1
      %p199 = por %p197, %p198
      %p201 = scmp.ne.s32.totalorder %s184, %s200
      %p202 = scmp.eq.s32.totalorder %s20, 0
      %p203 = por %p201, %p202
      %s204 = ssub.s32 %s22, %s36
      %p205 = scmp.eq.s32.totalorder %s204, 0
      %s207 = sadd.s32 %s206, 1
      %s208 = scalar_select %p205, %s206, %s207
      %p211 = pneg %p205
      %p212 = scmp.eq.s32.totalorder %s14, 1
      %p213 = por %p211, %p212
      %p214 = scmp.ne.s32.totalorder %s206, %s209
      %p215 = scmp.eq.s32.totalorder %s14, 0
      %p216 = por %p214, %p215
      %p217 = scmp.ne.s32.totalorder %s206, %s209
      %p218 = scmp.eq.s32.totalorder %s19, 1
      %p219 = por %p217, %p218
      %p220 = scmp.ne.s32.totalorder %s209, %s210
      %p221 = scmp.eq.s32.totalorder %s19, 0
      %p222 = por %p220, %p221
      %p223 = scmp.ne.s32.totalorder %s209, %s210
      %p224 = scmp.eq.s32.totalorder %s20, 1
      %p225 = por %p223, %p224
      %p227 = scmp.ne.s32.totalorder %s210, %s226
      %p228 = scmp.eq.s32.totalorder %s20, 0
      %p229 = por %p227, %p228
      %s230 = ssub.s32 %s21, %s40
      %s231 = ssub.s32 %s23, %s32
      %s232 = sor.u32 %s230, %s231
      %s233 = ssub.s32 %s22, %s36
      %s234 = sor.u32 %s232, %s233
      %p235 = scmp.eq.s32.totalorder %s234, 0
      %s237 = sadd.s32 %s236, 1
      %s238 = scalar_select %p235, %s236, %s237
      %p241 = pneg %p235
      %p242 = scmp.eq.s32.totalorder %s14, 1
      %p243 = por %p241, %p242
      %p244 = scmp.ne.s32.totalorder %s236, %s239
      %p245 = scmp.eq.s32.totalorder %s14, 0
      %p246 = por %p244, %p245
      %p247 = scmp.ne.s32.totalorder %s236, %s239
      %p248 = scmp.eq.s32.totalorder %s19, 1
      %p249 = por %p247, %p248
      %p250 = scmp.ne.s32.totalorder %s239, %s240
      %p251 = scmp.eq.s32.totalorder %s19, 0
      %p252 = por %p250, %p251
      %p253 = scmp.ne.s32.totalorder %s239, %s240
      %p254 = scmp.eq.s32.totalorder %s20, 1
      %p255 = por %p253, %p254
      %p257 = scmp.ne.s32.totalorder %s240, %s256
      %p258 = scmp.eq.s32.totalorder %s20, 0
      %p259 = por %p257, %p258
      %p260 = scmp.le.s32.totalorder 1, %s14
      %p261 = scmp.lt.s32.totalorder %s14, 3
      %p262 = pnand %p260, %p261
      %p263 = pneg %p262
      // Predicated region
      $region9: #{_lambda_.48} parent=5 // pred_check
        _
      $region10: #{_lambda_.48} parent=5 // pred_check_branch
        %265 = sbr.rel (%p262) target = $region12
      $region11: #{_lambda_.48} parent=5 // pred_region
        %s266 = ssub.s32 %s14, 1
        // Predicated region
        $region13: #{_lambda_.48} parent=11 // pred_check
          %p267 = pneg %p54
        $region14: #{_lambda_.48} parent=11 // pred_check_branch
          %269 = sbr.rel (%p267) target = $region16
        $region15: #{_lambda_.48} parent=11 // pred_region
          %s271 = ssub.s32 16, 16
          %272 = vsyncadd [#allocation3], %s271
          %s274 = sshll.u32 %s0, 4
          %s275 = int_to_ptr.vmem [resolvable:$true] %s274
          %277 = dma.vmem_to_smem %s275, 16, [#allocation2], [#allocation3]
        $region16: #{_lambda_.48} parent=11 // pred_fallthru
          _
        // Predicated region
        $region17: #{_lambda_.48} parent=11 // pred_check
          %p278 = pneg %p196
        $region18: #{_lambda_.48} parent=11 // pred_check_branch
          %280 = sbr.rel (%p278) target = $region20
        $region19: #{_lambda_.48} parent=11 // pred_region
          %p281 = scmp.lt.s32.totalorder %s25, 0
          %s282 = scalar_select %p281, %s25, 0
          %s283 = scalar_lea.vmem %s5, %s282
        $region20: #{_lambda_.48} parent=11 // pred_fallthru
          _
        // Predicated region
        $region21: #{_lambda_.48} parent=11 // pred_check
          %p284 = pneg %p222
        $region22: #{_lambda_.48} parent=11 // pred_check_branch
          %286 = sbr.rel (%p284) target = $region24
        $region23: #{_lambda_.48} parent=11 // pred_region
          %p287 = scmp.lt.s32.totalorder %s25, 0
          %s288 = scalar_select %p287, %s25, 0
          %s289 = scalar_lea.vmem %s6, %s288
        $region24: #{_lambda_.48} parent=11 // pred_fallthru
          _
      $region12: #{_lambda_.48} parent=5 // pred_fallthru
        _
      %p290 = scmp.lt.s32.totalorder %s14, 2
      // Predicated region
      $region25: #{_lambda_.48} parent=5 // pred_check
        %p291 = pneg %p290
      $region26: #{_lambda_.48} parent=5 // pred_check_branch
        %293 = sbr.rel (%p291) target = $region28
      $region27: #{_lambda_.48} parent=5 // pred_region
        // Predicated region
        $region29: #{_lambda_.48} parent=27 // pred_check
          %p294 = pneg %p78
        $region30: #{_lambda_.48} parent=27 // pred_check_branch
          %296 = sbr.rel (%p294) target = $region32
        $region31: #{_lambda_.48} parent=27 // pred_region
          %p297 = scmp.lt.s32.totalorder %s21, 1
          %s298 = scalar_select %p297, %s21, 1
          %p299 = scmp.lt.s32.totalorder %s23, 0
          %s300 = scalar_select %p299, %s23, 0
          %p301 = scmp.lt.s32.totalorder %s22, 0
          %s302 = scalar_select %p301, %s22, 0
          %s303 = sadd.s32 %s302, %s300
          %s304 = sadd.s32 %s303, %s298
          %s305 = smul.addr %s304, 4
          %s306 = scalar_lea.vmem %s1, %s305
        $region32: #{_lambda_.48} parent=27 // pred_fallthru
          _
        // Predicated region
        $region33: #{_lambda_.48} parent=27 // pred_check
          %p307 = pneg %p106
        $region34: #{_lambda_.48} parent=27 // pred_check_branch
          %309 = sbr.rel (%p307) target = $region36
        $region35: #{_lambda_.48} parent=27 // pred_region
          %p310 = scmp.lt.s32.totalorder %s21, 1
          %s311 = scalar_select %p310, %s21, 1
          %p312 = scmp.lt.s32.totalorder %s22, 0
          %s313 = scalar_select %p312, %s22, 0
          %s314 = sadd.s32 %s313, %s311
          %s315 = smul.addr %s314, 4
          %s316 = scalar_lea.vmem %s2, %s315
        $region36: #{_lambda_.48} parent=27 // pred_fallthru
          _
        // Predicated region
        $region37: #{_lambda_.48} parent=27 // pred_check
          %p317 = pneg %p134
        $region38: #{_lambda_.48} parent=27 // pred_check_branch
          %319 = sbr.rel (%p317) target = $region40
        $region39: #{_lambda_.48} parent=27 // pred_region
          %p320 = scmp.lt.s32.totalorder %s21, 1
          %s321 = scalar_select %p320, %s21, 1
          %p322 = scmp.lt.s32.totalorder %s22, 0
          %s323 = scalar_select %p322, %s22, 0
          %s324 = sadd.s32 %s323, %s321
          %s325 = smul.addr %s324, 4
          %s326 = scalar_lea.vmem %s3, %s325
        $region40: #{_lambda_.48} parent=27 // pred_fallthru
          _
        // Predicated region
        $region41: #{_lambda_.48} parent=27 // pred_check
          %p327 = pneg %p164
        $region42: #{_lambda_.48} parent=27 // pred_check_branch
          %329 = sbr.rel (%p327) target = $region44
        $region43: #{_lambda_.48} parent=27 // pred_region
          %s330 = smul.u32 4, %s22
          %p331 = scmp.lt.s32.totalorder %s21, 1
          %s332 = scalar_select %p331, %s21, 1
          %p333 = scmp.lt.s32.totalorder %s330, 3
          %s334 = scalar_select %p333, %s330, 3
          %p335 = scmp.lt.s32.totalorder %s23, 0
          %s336 = scalar_select %p335, %s23, 0
          %s337 = sadd.s32 %s336, %s334
          %s338 = smul.addr %s332, 4
          %s339 = sadd.s32 %s337, %s338
          %s340 = smul.addr %s339, 4
          %s341 = scalar_lea.vmem %s4, %s340
          %s342 = smul.u32 4, %s22
        $region44: #{_lambda_.48} parent=27 // pred_fallthru
          _
      $region28: #{_lambda_.48} parent=5 // pred_fallthru
        _
      %p343 = scmp.le.s32.totalorder 1, %s14
      %p344 = scmp.lt.s32.totalorder %s14, 3
      %p345 = pnand %p343, %p344
      %p346 = pneg %p345
      // Predicated region
      $region45: #{_lambda_.48} parent=5 // pred_check
        _
      $region46: #{_lambda_.48} parent=5 // pred_check_branch
        %348 = sbr.rel (%p345) target = $region48
      $region47: #{_lambda_.48} parent=5 // pred_region
        %s349 = ssub.s32 %s14, 1
        // Predicated region
        $region49: #{_lambda_.48} parent=47 // pred_check
          %p350 = pneg %p54
        $region50: #{_lambda_.48} parent=47 // pred_check_branch
          %352 = sbr.rel (%p350) target = $region52
        $region51: #{_lambda_.48} parent=47 // pred_region
          %353 = dma.done [#allocation3], 16
        $region52: #{_lambda_.48} parent=47 // pred_fallthru
          _
        %354 = sfence
        %p355 = pneg %p54
        %p356 = pneg %p51
        %p357 = scmp.lt.s32.totalorder %s24, 1
        %s358 = scalar_select %p357, %s24, 1
        %p359 = scmp.lt.s32.totalorder %s26, 0
        %s360 = scalar_select %p359, %s26, 0
        %p361 = scmp.lt.s32.totalorder %s25, 0
        %s362 = scalar_select %p361, %s25, 0
        %s363 = sadd.s32 %s362, %s360
        %s364 = sadd.s32 %s363, %s358
        %s365 = smul.addr %s364, 4
        %s366 = scalar_lea.vmem %s1, %s365
        %p367 = pneg %p84
        %p368 = pneg %p81
        %p369 = scmp.lt.s32.totalorder %s24, 1
        %s370 = scalar_select %p369, %s24, 1
        %p371 = scmp.lt.s32.totalorder %s25, 0
        %s372 = scalar_select %p371, %s25, 0
        %s373 = sadd.s32 %s372, %s370
        %s374 = smul.addr %s373, 4
        %s375 = scalar_lea.vmem %s2, %s374
        %p376 = pneg %p112
        %p377 = pneg %p109
        %p378 = scmp.lt.s32.totalorder %s24, 1
        %s379 = scalar_select %p378, %s24, 1
        %p380 = scmp.lt.s32.totalorder %s25, 0
        %s381 = scalar_select %p380, %s25, 0
        %s382 = sadd.s32 %s381, %s379
        %s383 = smul.addr %s382, 4
        %s384 = scalar_lea.vmem %s3, %s383
        %p385 = pneg %p140
        %p386 = pneg %p137
        %s387 = smul.u32 4, %s25
        %p388 = scmp.lt.s32.totalorder %s24, 1
        %s389 = scalar_select %p388, %s24, 1
        %p390 = scmp.lt.s32.totalorder %s387, 3
        %s391 = scalar_select %p390, %s387, 3
        %p392 = scmp.lt.s32.totalorder %s26, 0
        %s393 = scalar_select %p392, %s26, 0
        %s394 = sadd.s32 %s393, %s391
        %s395 = smul.addr %s389, 4
        %s396 = sadd.s32 %s394, %s395
        %s397 = smul.addr %s396, 4
        %s398 = scalar_lea.vmem %s4, %s397
        %p399 = pneg %p170
        %p400 = pneg %p167
        %p401 = scmp.lt.s32.totalorder %s25, 0
        %s402 = scalar_select %p401, %s25, 0
        %s403 = scalar_lea.vmem %s5, %s402
        %p404 = pneg %p196
        %p405 = pneg %p193
        %p406 = scmp.lt.s32.totalorder %s25, 0
        %s407 = scalar_select %p406, %s25, 0
        %s408 = scalar_lea.vmem %s6, %s407
        %p409 = pneg %p222
        %p410 = pneg %p219
        %p411 = pneg %p252
        %p412 = pneg %p249
        %p413 = scmp.lt.s32.totalorder %s24, 1
        %s414 = scalar_select %p413, %s24, 1
        %p415 = scmp.lt.s32.totalorder %s26, 0
        %s416 = scalar_select %p415, %s26, 0
        %p417 = scmp.lt.s32.totalorder %s25, 0
        %s418 = scalar_select %p417, %s25, 0
        %s419 = sadd.s32 %s418, %s416
        %s420 = sadd.s32 %s419, %s414
        %s421 = smul.addr %s420, 4
        %s422 = scalar_lea.vmem %s7, %s421
        %p423 = scmp.lt.s32.totalorder %s24, 1
        %s424 = scalar_select %p423, %s24, 1
        %p425 = scmp.lt.s32.totalorder %s26, 0
        %s426 = scalar_select %p425, %s26, 0
        %p427 = scmp.lt.s32.totalorder %s25, 0
        %s428 = scalar_select %p427, %s25, 0
        %s429 = sadd.s32 %s428, %s426
        %s430 = sadd.s32 %s429, %s424
        %s431 = smul.addr %s430, 4
        %s432 = scalar_lea.vmem %s1, %s431
        %p433 = scmp.lt.s32.totalorder %s24, 1
        %s434 = scalar_select %p433, %s24, 1
        %p435 = scmp.lt.s32.totalorder %s25, 0
        %s436 = scalar_select %p435, %s25, 0
        %s437 = sadd.s32 %s436, %s434
        %s438 = smul.addr %s437, 4
        %s439 = scalar_lea.vmem %s2, %s438
        %p440 = scmp.lt.s32.totalorder %s24, 1
        %s441 = scalar_select %p440, %s24, 1
        %p442 = scmp.lt.s32.totalorder %s25, 0
        %s443 = scalar_select %p442, %s25, 0
        %s444 = sadd.s32 %s443, %s441
        %s445 = smul.addr %s444, 4
        %s446 = scalar_lea.vmem %s3, %s445
        %s447 = smul.u32 4, %s25
        %p448 = scmp.lt.s32.totalorder %s24, 1
        %s449 = scalar_select %p448, %s24, 1
        %p450 = scmp.lt.s32.totalorder %s447, 3
        %s451 = scalar_select %p450, %s447, 3
        %p452 = scmp.lt.s32.totalorder %s26, 0
        %s453 = scalar_select %p452, %s26, 0
        %s454 = sadd.s32 %s453, %s451
        %s455 = smul.addr %s449, 4
        %s456 = sadd.s32 %s454, %s455
        %s457 = smul.addr %s456, 4
        %s458 = scalar_lea.vmem %s4, %s457
        %s459 = smul.u32 4, %s25
        %p460 = scmp.lt.s32.totalorder %s25, 0
        %s461 = scalar_select %p460, %s25, 0
        %s462 = scalar_lea.vmem %s5, %s461
        %p463 = scmp.lt.s32.totalorder %s25, 0
        %s464 = scalar_select %p463, %s25, 0
        %s465 = scalar_lea.vmem %s6, %s464
        %p466 = scmp.lt.s32.totalorder %s24, 1
        %s467 = scalar_select %p466, %s24, 1
        %p468 = scmp.lt.s32.totalorder %s26, 0
        %s469 = scalar_select %p468, %s26, 0
        %p470 = scmp.lt.s32.totalorder %s25, 0
        %s471 = scalar_select %p470, %s25, 0
        %s472 = sadd.s32 %s471, %s469
        %s473 = sadd.s32 %s472, %s467
        %s474 = smul.addr %s473, 4
        %s475 = scalar_lea.vmem %s7, %s474
        %s477 = smul.u32 %s26, 8
        %s478 = sld [smem:[#allocation2 + %s24]]
        %v479 = vlaneseq
        %v480 = vshrl.u32 %v479, 7
        %v481 = vstv %s477
        %v482 = vadd.s32 %v481, %v480
        %v483 = vlaneseq
        %v484 = vand.u32 %v483, 127
        %v485 = vstv %s478
        %vm486 = vcmp.ge.s32.totalorder %v482, %v485
        %vm487 = vcmp.ge.s32.totalorder %v484, %v485
        %v488 = vsel %vm486, 1, 0
        %vm489 = vcmp.eq.s32.totalorder %v488, 1
        %v490 = vsel %vm487, 1, 0
        %vm491 = vcmp.eq.s32.totalorder %v490, 1
        %vm492 = vmor %vm489, %vm491
        %v493 = vld [vmem:[%s432] sm:$0xf]
        %v494 = vld [vmem:[%s439] sm:$0xf]
        %v495 = vld [vmem:[%s446] sm:$0xf]
        %v496 = vld [vmem:[%s462] sm:$0x1]
        %v497 = vunpack.c.l.bf16 %v493
        %v499 = vlaneseq
        %v500 = vshrl.u32 %v499, 7
        %v501 = vsub.s32 0, %v500
        %v502 = vrot.slane %v496, %v501
        %v504 = vadd.f32 %v497, %v502
        %v505 = vpack.c.bf16 %v504, %v504
        %v506 = vld [vmem:[%s458] sm:$0xf]
        %v507 = vunpack.c.l.bf16 %v506
        %vm508 = vcmask 64512
        %v510 = vsel %vm508, %v505, 0
        %v513 = vsel %vm508, %v494, 0
        %515 = vmatprep.subr.bf16.mxu0 0
        %516 = vmatpush1.bf16.xpose.msra.mxu0 0
        %517 = vmatprep.subr.bf16.mxu0 0
        %518 = vmatpush1.bf16.xpose.msra.mxu0 0
        %519 = vmatprep.subr.bf16.mxu0 0
        %520 = vmatpush1.bf16.xpose.msra.mxu0 0
        %521 = vmatprep.subr.bf16.mxu0 0
        %522 = vmatpush1.bf16.xpose.msra.mxu0 0
        %523 = vmatprep.subr.bf16.mxu0 0
        %524 = vmatpush1.bf16.xpose.msra.mxu0 0
        %525 = vmatprep.subr.bf16.mxu0 0
        %526 = vmatpush1.bf16.xpose.msra.mxu0 0
        %527 = vmatprep.subr.bf16.mxu0 0
        %528 = vmatpush1.bf16.xpose.msra.mxu0 0
        %529 = vmatprep.subr.bf16.mxu0 0
        %530 = vmatpush1.bf16.xpose.msra.mxu0 %v513
        %531 = vmatprep.subr.bf16.mxu0 0
        %532 = vmatpush2.bf16.xpose.msra.mxu0 0
        %533 = vmatprep.subr.bf16.mxu0 0
        %534 = vmatpush2.bf16.xpose.msra.mxu0 0
        %535 = vmatprep.subr.bf16.mxu0 0
        %536 = vmatpush2.bf16.xpose.msra.mxu0 0
        %537 = vmatprep.subr.bf16.mxu0 0
        %538 = vmatpush2.bf16.xpose.msra.mxu0 0
        %539 = vmatprep.subr.bf16.mxu0 0
        %540 = vmatpush2.bf16.xpose.msra.mxu0 0
        %541 = vmatprep.subr.bf16.mxu0 0
        %542 = vmatpush2.bf16.xpose.msra.mxu0 0
        %543 = vmatprep.subr.bf16.mxu0 0
        %544 = vmatpush2.bf16.xpose.msra.mxu0 0
        %545 = vmatprep.subr.bf16.mxu0 0
        %546 = vmatpush2.bf16.xpose.msra.mxu0 0
        %547 = vmatprep.mubr.bf16.mxu0 0
        %548 = vmatmul.mubr.bf16.gmra.mxu0 %v510
        %v549 = vpop.f32.mrf.mxu0
        %v550 = vadd.f32 %v507, %v549
        %v551 = vpop.f32.mrf.mxu0
        %v552 = vpop.f32.mrf.mxu0
        %v553 = vpop.f32.mrf.mxu0
        %554 = vdwg.mxu0
        %v555 = vmul.f32 %v550, 0.35355338
        %v556 = vsel %vm492, -10000.0, %v555
        %v557 = vsel %vm508, %v556, -inf
        %558 = vmax.xlane.f32.xlu0 %v557
        %v559 = vpop.xlane.xlu0 %558
        %v560 = vsub.f32 %v556, %v559
        %v561 = vmul.f32 %v560, 1.442695
        %v562 = vpow.pop %v561
        %v563 = vsel %vm508, %v562, 0.0
        %564 = vadd.xlane.f32.xlu0 %v563
        %v565 = vpop.xlane.xlu0 %564
        %v566 = vrcp.pop %v565
        %v567 = vmul.f32 %v562, %v566
        %v568 = vsel %vm489, 0.0, %v567
        %v569 = vpack.c.bf16 %v568, %v568
        %v571 = vsel %vm508, %v569, 0
        %vm573 = vcmask 1043456
        %v575 = vsel %vm573, %v495, 0
        %577 = vmatprep.subr.bf16.mxu0 0
        %578 = vmatpush1.bf16.msra.mxu0 0
        %579 = vmatprep.subr.bf16.mxu0 0
        %580 = vmatpush1.bf16.msra.mxu0 0
        %581 = vmatprep.subr.bf16.mxu0 0
        %582 = vmatpush1.bf16.msra.mxu0 0
        %583 = vmatprep.subr.bf16.mxu0 0
        %584 = vmatpush1.bf16.msra.mxu0 0
        %585 = vmatprep.subr.bf16.mxu0 0
        %586 = vmatpush1.bf16.msra.mxu0 0
        %587 = vmatprep.subr.bf16.mxu0 0
        %588 = vmatpush1.bf16.msra.mxu0 0
        %589 = vmatprep.subr.bf16.mxu0 0
        %590 = vmatpush1.bf16.msra.mxu0 0
        %591 = vmatprep.subr.bf16.mxu0 0
        %592 = vmatpush1.bf16.msra.mxu0 %v575
        %593 = vmatprep.subr.bf16.mxu0 0
        %594 = vmatpush2.bf16.msra.mxu0 0
        %595 = vmatprep.subr.bf16.mxu0 0
        %596 = vmatpush2.bf16.msra.mxu0 0
        %597 = vmatprep.subr.bf16.mxu0 0
        %598 = vmatpush2.bf16.msra.mxu0 0
        %599 = vmatprep.subr.bf16.mxu0 0
        %600 = vmatpush2.bf16.msra.mxu0 0
        %601 = vmatprep.subr.bf16.mxu0 0
        %602 = vmatpush2.bf16.msra.mxu0 0
        %603 = vmatprep.subr.bf16.mxu0 0
        %604 = vmatpush2.bf16.msra.mxu0 0
        %605 = vmatprep.subr.bf16.mxu0 0
        %606 = vmatpush2.bf16.msra.mxu0 0
        %607 = vmatprep.subr.bf16.mxu0 0
        %608 = vmatpush2.bf16.msra.mxu0 0
        %609 = vmatprep.mubr.bf16.mxu0 0
        %610 = vmatmul.mubr.bf16.gmra.mxu0 %v571
        %v611 = vpop.f32.mrf.mxu0
        %v612 = vadd.f32 0.0, %v611
        %v613 = vpop.f32.mrf.mxu0
        %v614 = vpop.f32.mrf.mxu0
        %v615 = vpop.f32.mrf.mxu0
        %616 = vdwg.mxu0
        %s617 = scalar_lea.vmem %s458, 4
        %v618 = vld [vmem:[%s617] sm:$0xf]
        %v619 = vunpack.c.l.bf16 %v618
        %621 = vrot.lane.b32.xlu0 %v505, 120
        %v622 = vpop.permute.xlu0 %621
        %v624 = vunpack.c.l.b16 %v494
        %v625 = vpack.c.b16 %v624, %v624
        %626 = vrot.lane.b32.xlu0 %v625, 120
        %v627 = vpop.permute.xlu0 %626
        %v629 = vsel %vm508, %v622, 0
        %v632 = vsel %vm508, %v627, 0
        %634 = vmatprep.subr.bf16.mxu0 0
        %635 = vmatpush1.bf16.xpose.msra.mxu0 0
        %636 = vmatprep.subr.bf16.mxu0 0
        %637 = vmatpush1.bf16.xpose.msra.mxu0 0
        %638 = vmatprep.subr.bf16.mxu0 0
        %639 = vmatpush1.bf16.xpose.msra.mxu0 0
        %640 = vmatprep.subr.bf16.mxu0 0
        %641 = vmatpush1.bf16.xpose.msra.mxu0 0
        %642 = vmatprep.subr.bf16.mxu0 0
        %643 = vmatpush1.bf16.xpose.msra.mxu0 0
        %644 = vmatprep.subr.bf16.mxu0 0
        %645 = vmatpush1.bf16.xpose.msra.mxu0 0
        %646 = vmatprep.subr.bf16.mxu0 0
        %647 = vmatpush1.bf16.xpose.msra.mxu0 0
        %648 = vmatprep.subr.bf16.mxu0 0
        %649 = vmatpush1.bf16.xpose.msra.mxu0 %v632
        %650 = vmatprep.subr.bf16.mxu0 0
        %651 = vmatpush2.bf16.xpose.msra.mxu0 0
        %652 = vmatprep.subr.bf16.mxu0 0
        %653 = vmatpush2.bf16.xpose.msra.mxu0 0
        %654 = vmatprep.subr.bf16.mxu0 0
        %655 = vmatpush2.bf16.xpose.msra.mxu0 0
        %656 = vmatprep.subr.bf16.mxu0 0
        %657 = vmatpush2.bf16.xpose.msra.mxu0 0
        %658 = vmatprep.subr.bf16.mxu0 0
        %659 = vmatpush2.bf16.xpose.msra.mxu0 0
        %660 = vmatprep.subr.bf16.mxu0 0
        %661 = vmatpush2.bf16.xpose.msra.mxu0 0
        %662 = vmatprep.subr.bf16.mxu0 0
        %663 = vmatpush2.bf16.xpose.msra.mxu0 0
        %664 = vmatprep.subr.bf16.mxu0 0
        %665 = vmatpush2.bf16.xpose.msra.mxu0 0
        %666 = vmatprep.mubr.bf16.mxu0 0
        %667 = vmatmul.mubr.bf16.gmra.mxu0 %v629
        %v668 = vpop.f32.mrf.mxu0
        %v669 = vadd.f32 %v619, %v668
        %v670 = vpop.f32.mrf.mxu0
        %v671 = vpop.f32.mrf.mxu0
        %v672 = vpop.f32.mrf.mxu0
        %673 = vdwg.mxu0
        %v674 = vmul.f32 %v669, 0.35355338
        %v675 = vsel %vm492, -10000.0, %v674
        %v676 = vsel %vm508, %v675, -inf
        %677 = vmax.xlane.f32.xlu0 %v676
        %v678 = vpop.xlane.xlu0 %677
        %v679 = vsub.f32 %v675, %v678
        %v680 = vmul.f32 %v679, 1.442695
        %v681 = vpow.pop %v680
        %v682 = vsel %vm508, %v681, 0.0
        %683 = vadd.xlane.f32.xlu0 %v682
        %v684 = vpop.xlane.xlu0 %683
        %v685 = vrcp.pop %v684
        %v686 = vmul.f32 %v681, %v685
        %v687 = vsel %vm489, 0.0, %v686
        %v688 = vpack.c.bf16 %v687, %v687
        %v690 = vunpack.c.l.b16 %v495
        %v691 = vpack.c.b16 %v690, %v690
        %692 = vrot.lane.b32.xlu0 %v691, 120
        %v693 = vpop.permute.xlu0 %692
        %v695 = vsel %vm508, %v688, 0
        %v698 = vsel %vm573, %v693, 0
        %700 = vmatprep.subr.bf16.mxu0 0
        %701 = vmatpush1.bf16.msra.mxu0 0
        %702 = vmatprep.subr.bf16.mxu0 0
        %703 = vmatpush1.bf16.msra.mxu0 0
        %704 = vmatprep.subr.bf16.mxu0 0
        %705 = vmatpush1.bf16.msra.mxu0 0
        %706 = vmatprep.subr.bf16.mxu0 0
        %707 = vmatpush1.bf16.msra.mxu0 0
        %708 = vmatprep.subr.bf16.mxu0 0
        %709 = vmatpush1.bf16.msra.mxu0 0
        %710 = vmatprep.subr.bf16.mxu0 0
        %711 = vmatpush1.bf16.msra.mxu0 0
        %712 = vmatprep.subr.bf16.mxu0 0
        %713 = vmatpush1.bf16.msra.mxu0 0
        %714 = vmatprep.subr.bf16.mxu0 0
        %715 = vmatpush1.bf16.msra.mxu0 %v698
        %716 = vmatprep.subr.bf16.mxu0 0
        %717 = vmatpush2.bf16.msra.mxu0 0
        %718 = vmatprep.subr.bf16.mxu0 0
        %719 = vmatpush2.bf16.msra.mxu0 0
        %720 = vmatprep.subr.bf16.mxu0 0
        %721 = vmatpush2.bf16.msra.mxu0 0
        %722 = vmatprep.subr.bf16.mxu0 0
        %723 = vmatpush2.bf16.msra.mxu0 0
        %724 = vmatprep.subr.bf16.mxu0 0
        %725 = vmatpush2.bf16.msra.mxu0 0
        %726 = vmatprep.subr.bf16.mxu0 0
        %727 = vmatpush2.bf16.msra.mxu0 0
        %728 = vmatprep.subr.bf16.mxu0 0
        %729 = vmatpush2.bf16.msra.mxu0 0
        %730 = vmatprep.subr.bf16.mxu0 0
        %731 = vmatpush2.bf16.msra.mxu0 0
        %732 = vmatprep.mubr.bf16.mxu0 0
        %733 = vmatmul.mubr.bf16.gmra.mxu0 %v695
        %v734 = vpop.f32.mrf.mxu0
        %v735 = vadd.f32 0.0, %v734
        %v736 = vpop.f32.mrf.mxu0
        %v737 = vpop.f32.mrf.mxu0
        %v738 = vpop.f32.mrf.mxu0
        %739 = vdwg.mxu0
        %s740 = scalar_lea.vmem %s458, 8
        %v741 = vld [vmem:[%s740] sm:$0xf]
        %v742 = vunpack.c.l.bf16 %v741
        %743 = vrot.lane.b32.xlu0 %v505, 112
        %v744 = vpop.permute.xlu0 %743
        %745 = vrot.lane.b32.xlu0 %v625, 112
        %v746 = vpop.permute.xlu0 %745
        %v748 = vsel %vm508, %v744, 0
        %v751 = vsel %vm508, %v746, 0
        %753 = vmatprep.subr.bf16.mxu0 0
        %754 = vmatpush1.bf16.xpose.msra.mxu0 0
        %755 = vmatprep.subr.bf16.mxu0 0
        %756 = vmatpush1.bf16.xpose.msra.mxu0 0
        %757 = vmatprep.subr.bf16.mxu0 0
        %758 = vmatpush1.bf16.xpose.msra.mxu0 0
        %759 = vmatprep.subr.bf16.mxu0 0
        %760 = vmatpush1.bf16.xpose.msra.mxu0 0
        %761 = vmatprep.subr.bf16.mxu0 0
        %762 = vmatpush1.bf16.xpose.msra.mxu0 0
        %763 = vmatprep.subr.bf16.mxu0 0
        %764 = vmatpush1.bf16.xpose.msra.mxu0 0
        %765 = vmatprep.subr.bf16.mxu0 0
        %766 = vmatpush1.bf16.xpose.msra.mxu0 0
        %767 = vmatprep.subr.bf16.mxu0 0
        %768 = vmatpush1.bf16.xpose.msra.mxu0 %v751
        %769 = vmatprep.subr.bf16.mxu0 0
        %770 = vmatpush2.bf16.xpose.msra.mxu0 0
        %771 = vmatprep.subr.bf16.mxu0 0
        %772 = vmatpush2.bf16.xpose.msra.mxu0 0
        %773 = vmatprep.subr.bf16.mxu0 0
        %774 = vmatpush2.bf16.xpose.msra.mxu0 0
        %775 = vmatprep.subr.bf16.mxu0 0
        %776 = vmatpush2.bf16.xpose.msra.mxu0 0
        %777 = vmatprep.subr.bf16.mxu0 0
        %778 = vmatpush2.bf16.xpose.msra.mxu0 0
        %779 = vmatprep.subr.bf16.mxu0 0
        %780 = vmatpush2.bf16.xpose.msra.mxu0 0
        %781 = vmatprep.subr.bf16.mxu0 0
        %782 = vmatpush2.bf16.xpose.msra.mxu0 0
        %783 = vmatprep.subr.bf16.mxu0 0
        %784 = vmatpush2.bf16.xpose.msra.mxu0 0
        %785 = vmatprep.mubr.bf16.mxu0 0
        %786 = vmatmul.mubr.bf16.gmra.mxu0 %v748
        %v787 = vpop.f32.mrf.mxu0
        %v788 = vadd.f32 %v742, %v787
        %v789 = vpop.f32.mrf.mxu0
        %v790 = vpop.f32.mrf.mxu0
        %v791 = vpop.f32.mrf.mxu0
        %792 = vdwg.mxu0
        %v793 = vmul.f32 %v788, 0.35355338
        %v794 = vsel %vm492, -10000.0, %v793
        %v795 = vsel %vm508, %v794, -inf
        %796 = vmax.xlane.f32.xlu0 %v795
        %v797 = vpop.xlane.xlu0 %796
        %v798 = vsub.f32 %v794, %v797
        %v799 = vmul.f32 %v798, 1.442695
        %v800 = vpow.pop %v799
        %v801 = vsel %vm508, %v800, 0.0
        %802 = vadd.xlane.f32.xlu0 %v801
        %v803 = vpop.xlane.xlu0 %802
        %v804 = vrcp.pop %v803
        %v805 = vmul.f32 %v800, %v804
        %v806 = vsel %vm489, 0.0, %v805
        %v807 = vpack.c.bf16 %v806, %v806
        %808 = vrot.lane.b32.xlu0 %v691, 112
        %v809 = vpop.permute.xlu0 %808
        %v811 = vsel %vm508, %v807, 0
        %v814 = vsel %vm573, %v809, 0
        %816 = vmatprep.subr.bf16.mxu0 0
        %817 = vmatpush1.bf16.msra.mxu0 0
        %818 = vmatprep.subr.bf16.mxu0 0
        %819 = vmatpush1.bf16.msra.mxu0 0
        %820 = vmatprep.subr.bf16.mxu0 0
        %821 = vmatpush1.bf16.msra.mxu0 0
        %822 = vmatprep.subr.bf16.mxu0 0
        %823 = vmatpush1.bf16.msra.mxu0 0
        %824 = vmatprep.subr.bf16.mxu0 0
        %825 = vmatpush1.bf16.msra.mxu0 0
        %826 = vmatprep.subr.bf16.mxu0 0
        %827 = vmatpush1.bf16.msra.mxu0 0
        %828 = vmatprep.subr.bf16.mxu0 0
        %829 = vmatpush1.bf16.msra.mxu0 0
        %830 = vmatprep.subr.bf16.mxu0 0
        %831 = vmatpush1.bf16.msra.mxu0 %v814
        %832 = vmatprep.subr.bf16.mxu0 0
        %833 = vmatpush2.bf16.msra.mxu0 0
        %834 = vmatprep.subr.bf16.mxu0 0
        %835 = vmatpush2.bf16.msra.mxu0 0
        %836 = vmatprep.subr.bf16.mxu0 0
        %837 = vmatpush2.bf16.msra.mxu0 0
        %838 = vmatprep.subr.bf16.mxu0 0
        %839 = vmatpush2.bf16.msra.mxu0 0
        %840 = vmatprep.subr.bf16.mxu0 0
        %841 = vmatpush2.bf16.msra.mxu0 0
        %842 = vmatprep.subr.bf16.mxu0 0
        %843 = vmatpush2.bf16.msra.mxu0 0
        %844 = vmatprep.subr.bf16.mxu0 0
        %845 = vmatpush2.bf16.msra.mxu0 0
        %846 = vmatprep.subr.bf16.mxu0 0
        %847 = vmatpush2.bf16.msra.mxu0 0
        %848 = vmatprep.mubr.bf16.mxu0 0
        %849 = vmatmul.mubr.bf16.gmra.mxu0 %v811
        %v850 = vpop.f32.mrf.mxu0
        %v851 = vadd.f32 0.0, %v850
        %v852 = vpop.f32.mrf.mxu0
        %v853 = vpop.f32.mrf.mxu0
        %v854 = vpop.f32.mrf.mxu0
        %855 = vdwg.mxu0
        %s856 = scalar_lea.vmem %s458, 12
        %v857 = vld [vmem:[%s856] sm:$0xf]
        %v858 = vunpack.c.l.bf16 %v857
        %859 = vrot.lane.b32.xlu0 %v505, 104
        %v860 = vpop.permute.xlu0 %859
        %861 = vrot.lane.b32.xlu0 %v625, 104
        %v862 = vpop.permute.xlu0 %861
        %v864 = vsel %vm508, %v860, 0
        %v867 = vsel %vm508, %v862, 0
        %869 = vmatprep.subr.bf16.mxu0 0
        %870 = vmatpush1.bf16.xpose.msra.mxu0 0
        %871 = vmatprep.subr.bf16.mxu0 0
        %872 = vmatpush1.bf16.xpose.msra.mxu0 0
        %873 = vmatprep.subr.bf16.mxu0 0
        %874 = vmatpush1.bf16.xpose.msra.mxu0 0
        %875 = vmatprep.subr.bf16.mxu0 0
        %876 = vmatpush1.bf16.xpose.msra.mxu0 0
        %877 = vmatprep.subr.bf16.mxu0 0
        %878 = vmatpush1.bf16.xpose.msra.mxu0 0
        %879 = vmatprep.subr.bf16.mxu0 0
        %880 = vmatpush1.bf16.xpose.msra.mxu0 0
        %881 = vmatprep.subr.bf16.mxu0 0
        %882 = vmatpush1.bf16.xpose.msra.mxu0 0
        %883 = vmatprep.subr.bf16.mxu0 0
        %884 = vmatpush1.bf16.xpose.msra.mxu0 %v867
        %885 = vmatprep.subr.bf16.mxu0 0
        %886 = vmatpush2.bf16.xpose.msra.mxu0 0
        %887 = vmatprep.subr.bf16.mxu0 0
        %888 = vmatpush2.bf16.xpose.msra.mxu0 0
        %889 = vmatprep.subr.bf16.mxu0 0
        %890 = vmatpush2.bf16.xpose.msra.mxu0 0
        %891 = vmatprep.subr.bf16.mxu0 0
        %892 = vmatpush2.bf16.xpose.msra.mxu0 0
        %893 = vmatprep.subr.bf16.mxu0 0
        %894 = vmatpush2.bf16.xpose.msra.mxu0 0
        %895 = vmatprep.subr.bf16.mxu0 0
        %896 = vmatpush2.bf16.xpose.msra.mxu0 0
        %897 = vmatprep.subr.bf16.mxu0 0
        %898 = vmatpush2.bf16.xpose.msra.mxu0 0
        %899 = vmatprep.subr.bf16.mxu0 0
        %900 = vmatpush2.bf16.xpose.msra.mxu0 0
        %901 = vmatprep.mubr.bf16.mxu0 0
        %902 = vmatmul.mubr.bf16.gmra.mxu0 %v864
        %v903 = vpop.f32.mrf.mxu0
        %v904 = vadd.f32 %v858, %v903
        %v905 = vpop.f32.mrf.mxu0
        %v906 = vpop.f32.mrf.mxu0
        %v907 = vpop.f32.mrf.mxu0
        %908 = vdwg.mxu0
        %v909 = vmul.f32 %v904, 0.35355338
        %v910 = vsel %vm492, -10000.0, %v909
        %v911 = vsel %vm508, %v910, -inf
        %912 = vmax.xlane.f32.xlu0 %v911
        %v913 = vpop.xlane.xlu0 %912
        %v914 = vsub.f32 %v910, %v913
        %v915 = vmul.f32 %v914, 1.442695
        %v916 = vpow.pop %v915
        %v917 = vsel %vm508, %v916, 0.0
        %918 = vadd.xlane.f32.xlu0 %v917
        %v919 = vpop.xlane.xlu0 %918
        %v920 = vrcp.pop %v919
        %v921 = vmul.f32 %v916, %v920
        %v922 = vsel %vm489, 0.0, %v921
        %v923 = vpack.c.bf16 %v922, %v922
        %924 = vrot.lane.b32.xlu0 %v691, 104
        %v925 = vpop.permute.xlu0 %924
        %v927 = vsel %vm508, %v923, 0
        %v930 = vsel %vm573, %v925, 0
        %932 = vmatprep.subr.bf16.mxu0 0
        %933 = vmatpush1.bf16.msra.mxu0 0
        %934 = vmatprep.subr.bf16.mxu0 0
        %935 = vmatpush1.bf16.msra.mxu0 0
        %936 = vmatprep.subr.bf16.mxu0 0
        %937 = vmatpush1.bf16.msra.mxu0 0
        %938 = vmatprep.subr.bf16.mxu0 0
        %939 = vmatpush1.bf16.msra.mxu0 0
        %940 = vmatprep.subr.bf16.mxu0 0
        %941 = vmatpush1.bf16.msra.mxu0 0
        %942 = vmatprep.subr.bf16.mxu0 0
        %943 = vmatpush1.bf16.msra.mxu0 0
        %944 = vmatprep.subr.bf16.mxu0 0
        %945 = vmatpush1.bf16.msra.mxu0 0
        %946 = vmatprep.subr.bf16.mxu0 0
        %947 = vmatpush1.bf16.msra.mxu0 %v930
        %948 = vmatprep.subr.bf16.mxu0 0
        %949 = vmatpush2.bf16.msra.mxu0 0
        %950 = vmatprep.subr.bf16.mxu0 0
        %951 = vmatpush2.bf16.msra.mxu0 0
        %952 = vmatprep.subr.bf16.mxu0 0
        %953 = vmatpush2.bf16.msra.mxu0 0
        %954 = vmatprep.subr.bf16.mxu0 0
        %955 = vmatpush2.bf16.msra.mxu0 0
        %956 = vmatprep.subr.bf16.mxu0 0
        %957 = vmatpush2.bf16.msra.mxu0 0
        %958 = vmatprep.subr.bf16.mxu0 0
        %959 = vmatpush2.bf16.msra.mxu0 0
        %960 = vmatprep.subr.bf16.mxu0 0
        %961 = vmatpush2.bf16.msra.mxu0 0
        %962 = vmatprep.subr.bf16.mxu0 0
        %963 = vmatpush2.bf16.msra.mxu0 0
        %964 = vmatprep.mubr.bf16.mxu0 0
        %965 = vmatmul.mubr.bf16.gmra.mxu0 %v927
        %v966 = vpop.f32.mrf.mxu0
        %v967 = vadd.f32 0.0, %v966
        %v968 = vpop.f32.mrf.mxu0
        %v969 = vpop.f32.mrf.mxu0
        %v970 = vpop.f32.mrf.mxu0
        %971 = vdwg.mxu0
        %973 = vrot.lane.b32.xlu0 %v735, 8
        %v974 = vpop.permute.xlu0 %973
        %977 = vrot.lane.b32.xlu0 %v851, 16
        %v978 = vpop.permute.xlu0 %977
        %981 = vrot.lane.b32.xlu0 %v967, 24
        %v982 = vpop.permute.xlu0 %981
        %v984 = vsel %vm508, %v612, %v974
        %vm985 = vcmask 130048
        %v986 = vsel %vm985, %v984, %v978
        %vm987 = vcmask 195584
        %v988 = vsel %vm987, %v986, %v982
        %v989 = vpack.c.bf16 %v988, %v988
        %vm990 = vcmask 257024
        %991 = vst.msk [vmem:[%s475] sm:$0xf] %vm990, %v989
        %p992 = scmp.lt.s32.totalorder %s24, 1
        %s993 = scalar_select %p992, %s24, 1
        %p994 = scmp.lt.s32.totalorder %s26, 0
        %s995 = scalar_select %p994, %s26, 0
        %p996 = scmp.lt.s32.totalorder %s25, 0
        %s997 = scalar_select %p996, %s25, 0
        %s998 = sadd.s32 %s997, %s995
        %s999 = sadd.s32 %s998, %s993
        %s1000 = smul.addr %s999, 4
        %s1001 = scalar_lea.vmem %s7, %s1000
        // Predicated region
        $region53: #{_lambda_.48} parent=47 // pred_check
          %p1002 = pneg %p249
        $region54: #{_lambda_.48} parent=47 // pred_check_branch
          %1004 = sbr.rel (%p1002) target = $region56
        $region55: #{_lambda_.48} parent=47 // pred_region
          _
        $region56: #{_lambda_.48} parent=47 // pred_fallthru
          _
      $region48: #{_lambda_.48} parent=5 // pred_fallthru
        _
      %p1005 = scmp.le.s32.totalorder 2, %s14
      // Predicated region
      $region57: #{_lambda_.48} parent=5 // pred_check
        %p1006 = pneg %p1005
      $region58: #{_lambda_.48} parent=5 // pred_check_branch
        %1008 = sbr.rel (%p1006) target = $region60
      $region59: #{_lambda_.48} parent=5 // pred_region
        %s1009 = ssub.s32 %s14, 2
        // Predicated region
        $region61: #{_lambda_.48} parent=59 // pred_check
          %p1010 = pneg %p255
        $region62: #{_lambda_.48} parent=59 // pred_check_branch
          %1012 = sbr.rel (%p1010) target = $region64
        $region63: #{_lambda_.48} parent=59 // pred_region
          %p1013 = scmp.lt.s32.totalorder %s27, 1
          %s1014 = scalar_select %p1013, %s27, 1
          %p1015 = scmp.lt.s32.totalorder %s29, 0
          %s1016 = scalar_select %p1015, %s29, 0
          %p1017 = scmp.lt.s32.totalorder %s28, 0
          %s1018 = scalar_select %p1017, %s28, 0
          %s1019 = sadd.s32 %s1018, %s1016
          %s1020 = sadd.s32 %s1019, %s1014
          %s1021 = smul.addr %s1020, 4
          %s1022 = scalar_lea.vmem %s7, %s1021
        $region64: #{_lambda_.48} parent=59 // pred_fallthru
          _
      $region60: #{_lambda_.48} parent=5 // pred_fallthru
        _
    $region6: #{_lambda_.48} parent=1 // loop_footer
      %s18 = sadd.s32 1, %s14
    $region7: #{_lambda_.48} parent=1 // loop_footer_branch
      %13 = sbr.rel target = $region3
    $region8: #{_lambda_.48} parent=1 // loop_exit
      _
    %1023 = vsyncpa [#allocation3], 1
    %s1024 = scalar_lea.sflag [#allocation3], 1
    %1025 = vsyncpa %s1024, 1

// kernel: _lambda_.53
$region0: #{_lambda_.53}
  #allocation0 [shape = 'u32[]', space=smem, size = 0x4, offset = 0x4, fixed_abs, tag = 'smem constant byte address 0x4 - core index']
  #allocation1 [shape = 'u32[144,128]{1,0:T(1,128)}', space=vmem, size = 0x12000, scoped, tag = 'internal scratch']
  %s0 = inlined_call_operand.vmem [shape: s32[2], index: 0, kind: input, shape index: {}]
  %s1 = inlined_call_operand.vmem [shape: bf16[2,8,32], index: 1, kind: input, shape index: {}]
  %s2 = inlined_call_operand.vmem [shape: bf16[2,8,32], index: 2, kind: input, shape index: {}]
  %s3 = inlined_call_operand.vmem [shape: f32[31,32], index: 3, kind: input, shape index: {}]
  %s4 = inlined_call_operand.vmem [shape: f32[1,32], index: 4, kind: input, shape index: {}]
  %s5 = inlined_call_operand.vmem [shape: f32[1,32], index: 5, kind: input, shape index: {}]
  %s6 = inlined_call_operand.vmem [shape: f32[1,32], index: 6, kind: input, shape index: {}]
  %s7 = inlined_call_operand.vmem [shape: bf16[2,8,32], index: 7, kind: output, shape index: {}]
  %s8 = sld [smem:[#allocation0]]
  $region65: #{_lambda_.53} parent=0
    _
  %s10 = ssub.s32 1, %s8
  %s11 = scalar_select 0, %s10, %s8
  $region1: #{_lambda_.53} parent=0
    #allocation2 [shape = 'u8[512]{0}', space=smem, size = 0x200, scoped, tag = 'input window, operand 0, single buffered']
    #allocation3 [shape = 's32[2]{0}', space=sflag, size = 0x8, scoped, tag = 'scoped memory for _lambda_.53']
    %12 = vsyncpa [#allocation3], 0
    loop: start=0, step=1, limit=4
    $region2: #{_lambda_.53} parent=1 // loop_pre_header
      _
    $region3: #{_lambda_.53} parent=1 // loop_header
      %s14 = sphi 0, %s18
      %p15 = scmp.ge.s32.totalorder %s14, 4
      %s21 = sphi 0, %s33
      %s22 = sphi 0, %s29
      %s23 = sphi 0, %s21
      %s24 = sphi 0, %s22
      %s25 = sphi 0, %s23
      %s26 = sphi 0, %s24
      %s34 = sphi 0, %s34
      %s36 = sphi 0, %s34
      %s37 = sphi 0, %s36
      %s51 = sphi 0, %s37
      %s59 = sphi 0, %s61
      %s62 = sphi 0, %s59
      %s63 = sphi 0, %s62
      %s79 = sphi 0, %s63
      %s87 = sphi 0, %s89
      %s90 = sphi 0, %s87
      %s91 = sphi 0, %s90
      %s107 = sphi 0, %s91
      %s113 = sphi 0, %s115
      %s116 = sphi 0, %s113
      %s117 = sphi 0, %s116
      %s133 = sphi 0, %s117
      %s139 = sphi 0, %s141
      %s142 = sphi 0, %s139
      %s143 = sphi 0, %s142
      %s159 = sphi 0, %s143
      %s165 = sphi 0, %s167
      %s168 = sphi 0, %s165
      %s169 = sphi 0, %s168
      %s185 = sphi 0, %s169
      %s191 = sphi 0, %s193
      %s194 = sphi 0, %s191
      %s195 = sphi 0, %s194
      %s211 = sphi 0, %s195
      %s219 = sphi 0, %s221
      %s222 = sphi 0, %s219
      %s223 = sphi 0, %s222
      %s239 = sphi 0, %s223
    $region4: #{_lambda_.53} parent=1 // loop_header_branch
      %17 = sbr.rel (%p15) target = $region8
    $region5: #{_lambda_.53} parent=1 // loop_body
      %s19 = ssub.s32 %s14, 1
      %s20 = ssub.s32 %s14, 2
      %s27 = sadd.s32 1, %s22
      %p28 = scmp.ge.s32.totalorder %s27, 1
      %s29 = scalar_select %p28, 0, %s27
      %s30 = sadd.s32 1, %s21
      %s31 = scalar_select %p28, %s30, %s21
      %p32 = scmp.ge.s32.totalorder %s31, 2
      %s33 = scalar_select %p32, 0, %s31
      %s35 = sadd.s32 %s34, 1
      %p38 = scmp.eq.s32.totalorder %s14, 1
      %p39 = scmp.ne.s32.totalorder %s34, %s36
      %p40 = scmp.eq.s32.totalorder %s14, 0
      %p41 = por %p39, %p40
      %p42 = scmp.ne.s32.totalorder %s34, %s36
      %p43 = scmp.eq.s32.totalorder %s19, 1
      %p44 = por %p42, %p43
      %p45 = scmp.ne.s32.totalorder %s36, %s37
      %p46 = scmp.eq.s32.totalorder %s19, 0
      %p47 = por %p45, %p46
      %p48 = scmp.ne.s32.totalorder %s36, %s37
      %p49 = scmp.eq.s32.totalorder %s20, 1
      %p50 = por %p48, %p49
      %p52 = scmp.ne.s32.totalorder %s37, %s51
      %p53 = scmp.eq.s32.totalorder %s20, 0
      %p54 = por %p52, %p53
      %s55 = ssub.s32 %s21, %s33
      %s56 = ssub.s32 %s22, %s29
      %s57 = sor.u32 %s55, %s56
      %p58 = scmp.eq.s32.totalorder %s57, 0
      %s60 = sadd.s32 %s59, 1
      %s61 = scalar_select %p58, %s59, %s60
      %p64 = pneg %p58
      %p65 = scmp.eq.s32.totalorder %s14, 1
      %p66 = por %p64, %p65
      %p67 = scmp.ne.s32.totalorder %s59, %s62
      %p68 = scmp.eq.s32.totalorder %s14, 0
      %p69 = por %p67, %p68
      %p70 = scmp.ne.s32.totalorder %s59, %s62
      %p71 = scmp.eq.s32.totalorder %s19, 1
      %p72 = por %p70, %p71
      %p73 = scmp.ne.s32.totalorder %s62, %s63
      %p74 = scmp.eq.s32.totalorder %s19, 0
      %p75 = por %p73, %p74
      %p76 = scmp.ne.s32.totalorder %s62, %s63
      %p77 = scmp.eq.s32.totalorder %s20, 1
      %p78 = por %p76, %p77
      %p80 = scmp.ne.s32.totalorder %s63, %s79
      %p81 = scmp.eq.s32.totalorder %s20, 0
      %p82 = por %p80, %p81
      %s83 = ssub.s32 %s21, %s33
      %s84 = ssub.s32 %s22, %s29
      %s85 = sor.u32 %s83, %s84
      %p86 = scmp.eq.s32.totalorder %s85, 0
      %s88 = sadd.s32 %s87, 1
      %s89 = scalar_select %p86, %s87, %s88
      %p92 = pneg %p86
      %p93 = scmp.eq.s32.totalorder %s14, 1
      %p94 = por %p92, %p93
      %p95 = scmp.ne.s32.totalorder %s87, %s90
      %p96 = scmp.eq.s32.totalorder %s14, 0
      %p97 = por %p95, %p96
      %p98 = scmp.ne.s32.totalorder %s87, %s90
      %p99 = scmp.eq.s32.totalorder %s19, 1
      %p100 = por %p98, %p99
      %p101 = scmp.ne.s32.totalorder %s90, %s91
      %p102 = scmp.eq.s32.totalorder %s19, 0
      %p103 = por %p101, %p102
      %p104 = scmp.ne.s32.totalorder %s90, %s91
      %p105 = scmp.eq.s32.totalorder %s20, 1
      %p106 = por %p104, %p105
      %p108 = scmp.ne.s32.totalorder %s91, %s107
      %p109 = scmp.eq.s32.totalorder %s20, 0
      %p110 = por %p108, %p109
      %s111 = ssub.s32 %s22, %s29
      %p112 = scmp.eq.s32.totalorder %s111, 0
      %s114 = sadd.s32 %s113, 1
      %s115 = scalar_select %p112, %s113, %s114
      %p118 = pneg %p112
      %p119 = scmp.eq.s32.totalorder %s14, 1
      %p120 = por %p118, %p119
      %p121 = scmp.ne.s32.totalorder %s113, %s116
      %p122 = scmp.eq.s32.totalorder %s14, 0
      %p123 = por %p121, %p122
      %p124 = scmp.ne.s32.totalorder %s113, %s116
      %p125 = scmp.eq.s32.totalorder %s19, 1
      %p126 = por %p124, %p125
      %p127 = scmp.ne.s32.totalorder %s116, %s117
      %p128 = scmp.eq.s32.totalorder %s19, 0
      %p129 = por %p127, %p128
      %p130 = scmp.ne.s32.totalorder %s116, %s117
      %p131 = scmp.eq.s32.totalorder %s20, 1
      %p132 = por %p130, %p131
      %p134 = scmp.ne.s32.totalorder %s117, %s133
      %p135 = scmp.eq.s32.totalorder %s20, 0
      %p136 = por %p134, %p135
      %s137 = ssub.s32 %s22, %s29
      %p138 = scmp.eq.s32.totalorder %s137, 0
      %s140 = sadd.s32 %s139, 1
      %s141 = scalar_select %p138, %s139, %s140
      %p144 = pneg %p138
      %p145 = scmp.eq.s32.totalorder %s14, 1
      %p146 = por %p144, %p145
      %p147 = scmp.ne.s32.totalorder %s139, %s142
      %p148 = scmp.eq.s32.totalorder %s14, 0
      %p149 = por %p147, %p148
      %p150 = scmp.ne.s32.totalorder %s139, %s142
      %p151 = scmp.eq.s32.totalorder %s19, 1
      %p152 = por %p150, %p151
      %p153 = scmp.ne.s32.totalorder %s142, %s143
      %p154 = scmp.eq.s32.totalorder %s19, 0
      %p155 = por %p153, %p154
      %p156 = scmp.ne.s32.totalorder %s142, %s143
      %p157 = scmp.eq.s32.totalorder %s20, 1
      %p158 = por %p156, %p157
      %p160 = scmp.ne.s32.totalorder %s143, %s159
      %p161 = scmp.eq.s32.totalorder %s20, 0
      %p162 = por %p160, %p161
      %s163 = ssub.s32 %s22, %s29
      %p164 = scmp.eq.s32.totalorder %s163, 0
      %s166 = sadd.s32 %s165, 1
      %s167 = scalar_select %p164, %s165, %s166
      %p170 = pneg %p164
      %p171 = scmp.eq.s32.totalorder %s14, 1
      %p172 = por %p170, %p171
      %p173 = scmp.ne.s32.totalorder %s165, %s168
      %p174 = scmp.eq.s32.totalorder %s14, 0
      %p175 = por %p173, %p174
      %p176 = scmp.ne.s32.totalorder %s165, %s168
      %p177 = scmp.eq.s32.totalorder %s19, 1
      %p178 = por %p176, %p177
      %p179 = scmp.ne.s32.totalorder %s168, %s169
      %p180 = scmp.eq.s32.totalorder %s19, 0
      %p181 = por %p179, %p180
      %p182 = scmp.ne.s32.totalorder %s168, %s169
      %p183 = scmp.eq.s32.totalorder %s20, 1
      %p184 = por %p182, %p183
      %p186 = scmp.ne.s32.totalorder %s169, %s185
      %p187 = scmp.eq.s32.totalorder %s20, 0
      %p188 = por %p186, %p187
      %s189 = ssub.s32 %s22, %s29
      %p190 = scmp.eq.s32.totalorder %s189, 0
      %s192 = sadd.s32 %s191, 1
      %s193 = scalar_select %p190, %s191, %s192
      %p196 = pneg %p190
      %p197 = scmp.eq.s32.totalorder %s14, 1
      %p198 = por %p196, %p197
      %p199 = scmp.ne.s32.totalorder %s191, %s194
      %p200 = scmp.eq.s32.totalorder %s14, 0
      %p201 = por %p199, %p200
      %p202 = scmp.ne.s32.totalorder %s191, %s194
      %p203 = scmp.eq.s32.totalorder %s19, 1
      %p204 = por %p202, %p203
      %p205 = scmp.ne.s32.totalorder %s194, %s195
      %p206 = scmp.eq.s32.totalorder %s19, 0
      %p207 = por %p205, %p206
      %p208 = scmp.ne.s32.totalorder %s194, %s195
      %p209 = scmp.eq.s32.totalorder %s20, 1
      %p210 = por %p208, %p209
      %p212 = scmp.ne.s32.totalorder %s195, %s211
      %p213 = scmp.eq.s32.totalorder %s20, 0
      %p214 = por %p212, %p213
      %s215 = ssub.s32 %s21, %s33
      %s216 = ssub.s32 %s22, %s29
      %s217 = sor.u32 %s215, %s216
      %p218 = scmp.eq.s32.totalorder %s217, 0
      %s220 = sadd.s32 %s219, 1
      %s221 = scalar_select %p218, %s219, %s220
      %p224 = pneg %p218
      %p225 = scmp.eq.s32.totalorder %s14, 1
      %p226 = por %p224, %p225
      %p227 = scmp.ne.s32.totalorder %s219, %s222
      %p228 = scmp.eq.s32.totalorder %s14, 0
      %p229 = por %p227, %p228
      %p230 = scmp.ne.s32.totalorder %s219, %s222
      %p231 = scmp.eq.s32.totalorder %s19, 1
      %p232 = por %p230, %p231
      %p233 = scmp.ne.s32.totalorder %s222, %s223
      %p234 = scmp.eq.s32.totalorder %s19, 0
      %p235 = por %p233, %p234
      %p236 = scmp.ne.s32.totalorder %s222, %s223
      %p237 = scmp.eq.s32.totalorder %s20, 1
      %p238 = por %p236, %p237
      %p240 = scmp.ne.s32.totalorder %s223, %s239
      %p241 = scmp.eq.s32.totalorder %s20, 0
      %p242 = por %p240, %p241
      %p243 = scmp.le.s32.totalorder 1, %s14
      %p244 = scmp.lt.s32.totalorder %s14, 3
      %p245 = pnand %p243, %p244
      %p246 = pneg %p245
      // Predicated region
      $region9: #{_lambda_.53} parent=5 // pred_check
        _
      $region10: #{_lambda_.53} parent=5 // pred_check_branch
        %248 = sbr.rel (%p245) target = $region12
      $region11: #{_lambda_.53} parent=5 // pred_region
        %s249 = ssub.s32 %s14, 1
        // Predicated region
        $region13: #{_lambda_.53} parent=11 // pred_check
          %p250 = pneg %p47
        $region14: #{_lambda_.53} parent=11 // pred_check_branch
          %252 = sbr.rel (%p250) target = $region16
        $region15: #{_lambda_.53} parent=11 // pred_region
          %s254 = ssub.s32 16, 16
          %255 = vsyncadd [#allocation3], %s254
          %s257 = sshll.u32 %s0, 4
          %s258 = int_to_ptr.vmem [resolvable:$true] %s257
          %260 = dma.vmem_to_smem %s258, 16, [#allocation2], [#allocation3]
        $region16: #{_lambda_.53} parent=11 // pred_fallthru
          _
        // Predicated region
        $region17: #{_lambda_.53} parent=11 // pred_check
          %p261 = pneg %p129
        $region18: #{_lambda_.53} parent=11 // pred_check_branch
          %263 = sbr.rel (%p261) target = $region20
        $region19: #{_lambda_.53} parent=11 // pred_region
          %p264 = scmp.lt.s32.totalorder %s24, 0
          %s265 = scalar_select %p264, %s24, 0
          %s266 = smul.addr %s265, 8
          %s267 = scalar_lea.vmem %s3, %s266
        $region20: #{_lambda_.53} parent=11 // pred_fallthru
          _
        // Predicated region
        $region21: #{_lambda_.53} parent=11 // pred_check
          %p268 = pneg %p155
        $region22: #{_lambda_.53} parent=11 // pred_check_branch
          %270 = sbr.rel (%p268) target = $region24
        $region23: #{_lambda_.53} parent=11 // pred_region
          %p271 = scmp.lt.s32.totalorder %s24, 0
          %s272 = scalar_select %p271, %s24, 0
          %s273 = scalar_lea.vmem %s4, %s272
        $region24: #{_lambda_.53} parent=11 // pred_fallthru
          _
        // Predicated region
        $region25: #{_lambda_.53} parent=11 // pred_check
          %p274 = pneg %p181
        $region26: #{_lambda_.53} parent=11 // pred_check_branch
          %276 = sbr.rel (%p274) target = $region28
        $region27: #{_lambda_.53} parent=11 // pred_region
          %p277 = scmp.lt.s32.totalorder %s24, 0
          %s278 = scalar_select %p277, %s24, 0
          %s279 = scalar_lea.vmem %s5, %s278
        $region28: #{_lambda_.53} parent=11 // pred_fallthru
          _
        // Predicated region
        $region29: #{_lambda_.53} parent=11 // pred_check
          %p280 = pneg %p207
        $region30: #{_lambda_.53} parent=11 // pred_check_branch
          %282 = sbr.rel (%p280) target = $region32
        $region31: #{_lambda_.53} parent=11 // pred_region
          %p283 = scmp.lt.s32.totalorder %s24, 0
          %s284 = scalar_select %p283, %s24, 0
          %s285 = scalar_lea.vmem %s6, %s284
        $region32: #{_lambda_.53} parent=11 // pred_fallthru
          _
      $region12: #{_lambda_.53} parent=5 // pred_fallthru
        _
      %p286 = scmp.lt.s32.totalorder %s14, 2
      // Predicated region
      $region33: #{_lambda_.53} parent=5 // pred_check
        %p287 = pneg %p286
      $region34: #{_lambda_.53} parent=5 // pred_check_branch
        %289 = sbr.rel (%p287) target = $region36
      $region35: #{_lambda_.53} parent=5 // pred_region
        // Predicated region
        $region37: #{_lambda_.53} parent=35 // pred_check
          %p290 = pneg %p69
        $region38: #{_lambda_.53} parent=35 // pred_check_branch
          %292 = sbr.rel (%p290) target = $region40
        $region39: #{_lambda_.53} parent=35 // pred_region
          %p293 = scmp.lt.s32.totalorder %s21, 1
          %s294 = scalar_select %p293, %s21, 1
          %p295 = scmp.lt.s32.totalorder %s22, 0
          %s296 = scalar_select %p295, %s22, 0
          %s297 = sadd.s32 %s296, %s294
          %s298 = smul.addr %s297, 4
          %s299 = scalar_lea.vmem %s1, %s298
        $region40: #{_lambda_.53} parent=35 // pred_fallthru
          _
        // Predicated region
        $region41: #{_lambda_.53} parent=35 // pred_check
          %p300 = pneg %p97
        $region42: #{_lambda_.53} parent=35 // pred_check_branch
          %302 = sbr.rel (%p300) target = $region44
        $region43: #{_lambda_.53} parent=35 // pred_region
          %p303 = scmp.lt.s32.totalorder %s21, 1
          %s304 = scalar_select %p303, %s21, 1
          %p305 = scmp.lt.s32.totalorder %s22, 0
          %s306 = scalar_select %p305, %s22, 0
          %s307 = sadd.s32 %s306, %s304
          %s308 = smul.addr %s307, 4
          %s309 = scalar_lea.vmem %s2, %s308
        $region44: #{_lambda_.53} parent=35 // pred_fallthru
          _
      $region36: #{_lambda_.53} parent=5 // pred_fallthru
        _
      %p310 = scmp.le.s32.totalorder 1, %s14
      %p311 = scmp.lt.s32.totalorder %s14, 3
      %p312 = pnand %p310, %p311
      %p313 = pneg %p312
      // Predicated region
      $region45: #{_lambda_.53} parent=5 // pred_check
        _
      $region46: #{_lambda_.53} parent=5 // pred_check_branch
        %315 = sbr.rel (%p312) target = $region48
      $region47: #{_lambda_.53} parent=5 // pred_region
        %s316 = ssub.s32 %s14, 1
        // Predicated region
        $region49: #{_lambda_.53} parent=47 // pred_check
          %p317 = pneg %p47
        $region50: #{_lambda_.53} parent=47 // pred_check_branch
          %319 = sbr.rel (%p317) target = $region52
        $region51: #{_lambda_.53} parent=47 // pred_region
          %320 = dma.done [#allocation3], 16
        $region52: #{_lambda_.53} parent=47 // pred_fallthru
          _
        %321 = sfence
        %p322 = pneg %p47
        %p323 = pneg %p44
        %p324 = scmp.lt.s32.totalorder %s23, 1
        %s325 = scalar_select %p324, %s23, 1
        %p326 = scmp.lt.s32.totalorder %s24, 0
        %s327 = scalar_select %p326, %s24, 0
        %s328 = sadd.s32 %s327, %s325
        %s329 = smul.addr %s328, 4
        %s330 = scalar_lea.vmem %s1, %s329
        %p331 = pneg %p75
        %p332 = pneg %p72
        %p333 = scmp.lt.s32.totalorder %s23, 1
        %s334 = scalar_select %p333, %s23, 1
        %p335 = scmp.lt.s32.totalorder %s24, 0
        %s336 = scalar_select %p335, %s24, 0
        %s337 = sadd.s32 %s336, %s334
        %s338 = smul.addr %s337, 4
        %s339 = scalar_lea.vmem %s2, %s338
        %p340 = pneg %p103
        %p341 = pneg %p100
        %p342 = scmp.lt.s32.totalorder %s24, 0
        %s343 = scalar_select %p342, %s24, 0
        %s344 = smul.addr %s343, 8
        %s345 = scalar_lea.vmem %s3, %s344
        %p346 = pneg %p129
        %p347 = pneg %p126
        %p348 = scmp.lt.s32.totalorder %s24, 0
        %s349 = scalar_select %p348, %s24, 0
        %s350 = scalar_lea.vmem %s4, %s349
        %p351 = pneg %p155
        %p352 = pneg %p152
        %p353 = scmp.lt.s32.totalorder %s24, 0
        %s354 = scalar_select %p353, %s24, 0
        %s355 = scalar_lea.vmem %s5, %s354
        %p356 = pneg %p181
        %p357 = pneg %p178
        %p358 = scmp.lt.s32.totalorder %s24, 0
        %s359 = scalar_select %p358, %s24, 0
        %s360 = scalar_lea.vmem %s6, %s359
        %p361 = pneg %p207
        %p362 = pneg %p204
        %p363 = pneg %p235
        %p364 = pneg %p232
        %p365 = scmp.lt.s32.totalorder %s23, 1
        %s366 = scalar_select %p365, %s23, 1
        %p367 = scmp.lt.s32.totalorder %s24, 0
        %s368 = scalar_select %p367, %s24, 0
        %s369 = sadd.s32 %s368, %s366
        %s370 = smul.addr %s369, 4
        %s371 = scalar_lea.vmem %s7, %s370
        %p372 = scmp.lt.s32.totalorder %s23, 1
        %s373 = scalar_select %p372, %s23, 1
        %p374 = scmp.lt.s32.totalorder %s24, 0
        %s375 = scalar_select %p374, %s24, 0
        %s376 = sadd.s32 %s375, %s373
        %s377 = smul.addr %s376, 4
        %s378 = scalar_lea.vmem %s1, %s377
        %p379 = scmp.lt.s32.totalorder %s23, 1
        %s380 = scalar_select %p379, %s23, 1
        %p381 = scmp.lt.s32.totalorder %s24, 0
        %s382 = scalar_select %p381, %s24, 0
        %s383 = sadd.s32 %s382, %s380
        %s384 = smul.addr %s383, 4
        %s385 = scalar_lea.vmem %s2, %s384
        %p386 = scmp.lt.s32.totalorder %s24, 0
        %s387 = scalar_select %p386, %s24, 0
        %s388 = smul.addr %s387, 8
        %s389 = scalar_lea.vmem %s3, %s388
        %p390 = scmp.lt.s32.totalorder %s24, 0
        %s391 = scalar_select %p390, %s24, 0
        %s392 = scalar_lea.vmem %s4, %s391
        %p393 = scmp.lt.s32.totalorder %s24, 0
        %s394 = scalar_select %p393, %s24, 0
        %s395 = scalar_lea.vmem %s5, %s394
        %p396 = scmp.lt.s32.totalorder %s24, 0
        %s397 = scalar_select %p396, %s24, 0
        %s398 = scalar_lea.vmem %s6, %s397
        %p399 = scmp.lt.s32.totalorder %s23, 1
        %s400 = scalar_select %p399, %s23, 1
        %p401 = scmp.lt.s32.totalorder %s24, 0
        %s402 = scalar_select %p401, %s24, 0
        %s403 = sadd.s32 %s402, %s400
        %s404 = smul.addr %s403, 4
        %s405 = scalar_lea.vmem %s7, %s404
        %s406 = sld [smem:[#allocation2 + %s23]]
        %v407 = vld [vmem:[%s378] sm:$0xf]
        %v408 = vunpack.c.l.bf16 %v407
        %v409 = vld [vmem:[%s385] sm:$0xf]
        %v410 = vunpack.c.l.bf16 %v409
        %v411 = vxor.u32 %v410, 2147483648
        %v412 = vmul.f32 %v411, 1.442695
        %v413 = vpow.pop %v412
        %v414 = vadd.f32 %v413, 1.0
        %v415 = vrcp.pop %v414
        %v416 = vmul.f32 1.0, %v415
        %v417 = vmul.f32 %v408, %v416
        %v418 = vlaneseq
        %v419 = vshrl.u32 %v418, 7
        %v420 = vstv %s406
        %vm421 = vcmp.lt.s32.totalorder %v419, %v420
        %v422 = vsel %vm421, 1, 0
        %vm423 = vcmp.eq.s32.totalorder %v422, 1
        %v424 = vsel %vm423, %v417, 0.0
        %v426 = vrot.slane %v424, 1
        %vm428 = vcmask 1046528
        %v429 = vsel %vm428, 0.0, %v426
        %v430 = vsel %vm428, %v426, 0.0
        %v431 = vld [vmem:[%s389] sm:$0xff]
        %v432 = vld [vmem:[%s389 + $0x8] sm:$0xff]
        %v433 = vld [vmem:[%s389 + $0x10] sm:$0xff]
        %v434 = vld [vmem:[%s389 + $0x18] sm:$0x7f]
        %v435 = vlaneseq
        %v436 = vshrl.u32 %v435, 7
        %v437 = vsub.s32 0, %v436
        %v438 = vrot.slane %v431, %v437
        %v439 = vmul.f32 %v438, 0.0
        %v440 = vadd.f32 %v439, 0.0
        %v441 = vlaneseq
        %v442 = vshrl.u32 %v441, 7
        %v443 = vsub.s32 0, %v442
        %v444 = vrot.slane %v432, %v443
        %v445 = vmul.f32 %v429, %v444
        %v446 = vadd.f32 %v440, %v445
        %v447 = vlaneseq
        %v448 = vshrl.u32 %v447, 7
        %v449 = vsub.s32 0, %v448
        %v450 = vrot.slane %v433, %v449
        %v451 = vmul.f32 %v430, %v450
        %v452 = vadd.f32 %v446, %v451
        %v453 = vlaneseq
        %v454 = vshrl.u32 %v453, 7
        %v455 = vsub.s32 0, %v454
        %v456 = vrot.slane %v434, %v455
        %v457 = vmul.f32 %v456, 0.0
        %v458 = vadd.f32 %v452, %v457
        %v459 = vlaneseq
        %v460 = vshrl.u32 %v459, 7
        %v461 = vsub.s32 1, %v460
        %v462 = vrot.slane %v431, %v461
        %v463 = vmul.f32 %v462, 0.0
        %v464 = vmul.f32 %v429, %v462
        %v467 = vrot.slane %v463, 1
        %v468 = vrot.slane %v464, 1
        %v469 = vsel %vm428, %v467, %v468
        %v471 = vadd.f32 %v458, %v469
        %v472 = vlaneseq
        %v473 = vshrl.u32 %v472, 7
        %v474 = vsub.s32 1, %v473
        %v475 = vrot.slane %v432, %v474
        %v476 = vmul.f32 %v429, %v475
        %v477 = vmul.f32 %v430, %v475
        %v480 = vrot.slane %v476, 1
        %v481 = vrot.slane %v477, 1
        %v482 = vsel %vm428, %v480, %v481
        %v484 = vadd.f32 %v471, %v482
        %v485 = vlaneseq
        %v486 = vshrl.u32 %v485, 7
        %v487 = vsub.s32 1, %v486
        %v488 = vrot.slane %v433, %v487
        %v489 = vmul.f32 %v430, %v488
        %v490 = vmul.f32 %v488, 0.0
        %v493 = vrot.slane %v489, 1
        %v494 = vrot.slane %v490, 1
        %v495 = vsel %vm428, %v493, %v494
        %v497 = vadd.f32 %v484, %v495
        %v498 = vlaneseq
        %v499 = vshrl.u32 %v498, 7
        %v500 = vsub.s32 1, %v499
        %v501 = vrot.slane %v434, %v500
        %v502 = vmul.f32 %v501, 0.0
        %v504 = vrot.slane %v502, 1
        %v505 = vsel %vm428, %v504, %v504
        %v507 = vadd.f32 %v497, %v505
        %v508 = vlaneseq
        %v509 = vshrl.u32 %v508, 7
        %v510 = vsub.s32 2, %v509
        %v511 = vrot.slane %v431, %v510
        %v512 = vmul.f32 %v511, 0.0
        %v513 = vmul.f32 %v429, %v511
        %vm516 = vcmask 1045504
        %v517 = vrot.slane %v512, 2
        %v518 = vrot.slane %v513, 2
        %v519 = vsel %vm516, %v517, %v518
        %v521 = vadd.f32 %v507, %v519
        %v522 = vlaneseq
        %v523 = vshrl.u32 %v522, 7
        %v524 = vsub.s32 2, %v523
        %v525 = vrot.slane %v432, %v524
        %v526 = vmul.f32 %v429, %v525
        %v527 = vmul.f32 %v430, %v525
        %v530 = vrot.slane %v526, 2
        %v531 = vrot.slane %v527, 2
        %v532 = vsel %vm516, %v530, %v531
        %v534 = vadd.f32 %v521, %v532
        %v535 = vlaneseq
        %v536 = vshrl.u32 %v535, 7
        %v537 = vsub.s32 2, %v536
        %v538 = vrot.slane %v433, %v537
        %v539 = vmul.f32 %v430, %v538
        %v540 = vmul.f32 %v538, 0.0
        %v543 = vrot.slane %v539, 2
        %v544 = vrot.slane %v540, 2
        %v545 = vsel %vm516, %v543, %v544
        %v547 = vadd.f32 %v534, %v545
        %v548 = vlaneseq
        %v549 = vshrl.u32 %v548, 7
        %v550 = vsub.s32 2, %v549
        %v551 = vrot.slane %v434, %v550
        %v552 = vmul.f32 %v551, 0.0
        %v554 = vrot.slane %v552, 2
        %v555 = vsel %vm516, %v554, %v554
        %v557 = vadd.f32 %v547, %v555
        %v558 = vlaneseq
        %v559 = vshrl.u32 %v558, 7
        %v560 = vsub.s32 3, %v559
        %v561 = vrot.slane %v431, %v560
        %v562 = vmul.f32 %v561, 0.0
        %v563 = vmul.f32 %v429, %v561
        %vm566 = vcmask 1044480
        %v567 = vrot.slane %v562, 3
        %v568 = vrot.slane %v563, 3
        %v569 = vsel %vm566, %v567, %v568
        %v571 = vadd.f32 %v557, %v569
        %v572 = vlaneseq
        %v573 = vshrl.u32 %v572, 7
        %v574 = vsub.s32 3, %v573
        %v575 = vrot.slane %v432, %v574
        %v576 = vmul.f32 %v429, %v575
        %v577 = vmul.f32 %v430, %v575
        %v580 = vrot.slane %v576, 3
        %v581 = vrot.slane %v577, 3
        %v582 = vsel %vm566, %v580, %v581
        %v584 = vadd.f32 %v571, %v582
        %v585 = vlaneseq
        %v586 = vshrl.u32 %v585, 7
        %v587 = vsub.s32 3, %v586
        %v588 = vrot.slane %v433, %v587
        %v589 = vmul.f32 %v430, %v588
        %v590 = vmul.f32 %v588, 0.0
        %v593 = vrot.slane %v589, 3
        %v594 = vrot.slane %v590, 3
        %v595 = vsel %vm566, %v593, %v594
        %v597 = vadd.f32 %v584, %v595
        %v598 = vlaneseq
        %v599 = vshrl.u32 %v598, 7
        %v600 = vsub.s32 3, %v599
        %v601 = vrot.slane %v434, %v600
        %v602 = vmul.f32 %v601, 0.0
        %v604 = vrot.slane %v602, 3
        %v605 = vsel %vm566, %v604, %v604
        %v607 = vadd.f32 %v597, %v605
        %v608 = vlaneseq
        %v609 = vshrl.u32 %v608, 7
        %v610 = vsub.s32 4, %v609
        %v611 = vrot.slane %v431, %v610
        %v612 = vmul.f32 %v611, 0.0
        %v613 = vmul.f32 %v429, %v611
        %vm616 = vcmask 1043456
        %v617 = vrot.slane %v612, 4
        %v618 = vrot.slane %v613, 4
        %v619 = vsel %vm616, %v617, %v618
        %v621 = vadd.f32 %v607, %v619
        %v622 = vlaneseq
        %v623 = vshrl.u32 %v622, 7
        %v624 = vsub.s32 4, %v623
        %v625 = vrot.slane %v432, %v624
        %v626 = vmul.f32 %v429, %v625
        %v627 = vmul.f32 %v430, %v625
        %v630 = vrot.slane %v626, 4
        %v631 = vrot.slane %v627, 4
        %v632 = vsel %vm616, %v630, %v631
        %v634 = vadd.f32 %v621, %v632
        %v635 = vlaneseq
        %v636 = vshrl.u32 %v635, 7
        %v637 = vsub.s32 4, %v636
        %v638 = vrot.slane %v433, %v637
        %v639 = vmul.f32 %v430, %v638
        %v640 = vmul.f32 %v638, 0.0
        %v643 = vrot.slane %v639, 4
        %v644 = vrot.slane %v640, 4
        %v645 = vsel %vm616, %v643, %v644
        %v647 = vadd.f32 %v634, %v645
        %v648 = vlaneseq
        %v649 = vshrl.u32 %v648, 7
        %v650 = vsub.s32 4, %v649
        %v651 = vrot.slane %v434, %v650
        %v652 = vmul.f32 %v651, 0.0
        %v654 = vrot.slane %v652, 4
        %v655 = vsel %vm616, %v654, %v654
        %v657 = vadd.f32 %v647, %v655
        %v658 = vlaneseq
        %v659 = vshrl.u32 %v658, 7
        %v660 = vsub.s32 5, %v659
        %v661 = vrot.slane %v431, %v660
        %v662 = vmul.f32 %v661, 0.0
        %v663 = vmul.f32 %v429, %v661
        %vm666 = vcmask 1042432
        %v667 = vrot.slane %v662, 5
        %v668 = vrot.slane %v663, 5
        %v669 = vsel %vm666, %v667, %v668
        %v671 = vadd.f32 %v657, %v669
        %v672 = vlaneseq
        %v673 = vshrl.u32 %v672, 7
        %v674 = vsub.s32 5, %v673
        %v675 = vrot.slane %v432, %v674
        %v676 = vmul.f32 %v429, %v675
        %v677 = vmul.f32 %v430, %v675
        %v680 = vrot.slane %v676, 5
        %v681 = vrot.slane %v677, 5
        %v682 = vsel %vm666, %v680, %v681
        %v684 = vadd.f32 %v671, %v682
        %v685 = vlaneseq
        %v686 = vshrl.u32 %v685, 7
        %v687 = vsub.s32 5, %v686
        %v688 = vrot.slane %v433, %v687
        %v689 = vmul.f32 %v430, %v688
        %v690 = vmul.f32 %v688, 0.0
        %v693 = vrot.slane %v689, 5
        %v694 = vrot.slane %v690, 5
        %v695 = vsel %vm666, %v693, %v694
        %v697 = vadd.f32 %v684, %v695
        %v698 = vlaneseq
        %v699 = vshrl.u32 %v698, 7
        %v700 = vsub.s32 5, %v699
        %v701 = vrot.slane %v434, %v700
        %v702 = vmul.f32 %v701, 0.0
        %v704 = vrot.slane %v702, 5
        %v705 = vsel %vm666, %v704, %v704
        %v707 = vadd.f32 %v697, %v705
        %v708 = vlaneseq
        %v709 = vshrl.u32 %v708, 7
        %v710 = vsub.s32 6, %v709
        %v711 = vrot.slane %v431, %v710
        %v712 = vmul.f32 %v711, 0.0
        %v713 = vmul.f32 %v429, %v711
        %vm716 = vcmask 1041408
        %v717 = vrot.slane %v712, 6
        %v718 = vrot.slane %v713, 6
        %v719 = vsel %vm716, %v717, %v718
        %v721 = vadd.f32 %v707, %v719
        %v722 = vlaneseq
        %v723 = vshrl.u32 %v722, 7
        %v724 = vsub.s32 6, %v723
        %v725 = vrot.slane %v432, %v724
        %v726 = vmul.f32 %v429, %v725
        %v727 = vmul.f32 %v430, %v725
        %v730 = vrot.slane %v726, 6
        %v731 = vrot.slane %v727, 6
        %v732 = vsel %vm716, %v730, %v731
        %v734 = vadd.f32 %v721, %v732
        %v735 = vlaneseq
        %v736 = vshrl.u32 %v735, 7
        %v737 = vsub.s32 6, %v736
        %v738 = vrot.slane %v433, %v737
        %v739 = vmul.f32 %v430, %v738
        %v740 = vmul.f32 %v738, 0.0
        %v743 = vrot.slane %v739, 6
        %v744 = vrot.slane %v740, 6
        %v745 = vsel %vm716, %v743, %v744
        %v747 = vadd.f32 %v734, %v745
        %v748 = vlaneseq
        %v749 = vshrl.u32 %v748, 7
        %v750 = vsub.s32 6, %v749
        %v751 = vrot.slane %v434, %v750
        %v752 = vmul.f32 %v751, 0.0
        %v754 = vrot.slane %v752, 6
        %v755 = vsel %vm716, %v754, %v754
        %v757 = vadd.f32 %v747, %v755
        %v758 = vlaneseq
        %v759 = vshrl.u32 %v758, 7
        %v760 = vsub.s32 7, %v759
        %v761 = vrot.slane %v431, %v760
        %v762 = vmul.f32 %v761, 0.0
        %v763 = vmul.f32 %v429, %v761
        %vm766 = vcmask 1040384
        %v767 = vrot.slane %v762, 7
        %v768 = vrot.slane %v763, 7
        %v769 = vsel %vm766, %v767, %v768
        %v771 = vadd.f32 %v757, %v769
        %v772 = vlaneseq
        %v773 = vshrl.u32 %v772, 7
        %v774 = vsub.s32 7, %v773
        %v775 = vrot.slane %v432, %v774
        %v776 = vmul.f32 %v429, %v775
        %v777 = vmul.f32 %v430, %v775
        %v780 = vrot.slane %v776, 7
        %v781 = vrot.slane %v777, 7
        %v782 = vsel %vm766, %v780, %v781
        %v784 = vadd.f32 %v771, %v782
        %v785 = vlaneseq
        %v786 = vshrl.u32 %v785, 7
        %v787 = vsub.s32 7, %v786
        %v788 = vrot.slane %v433, %v787
        %v789 = vmul.f32 %v430, %v788
        %v790 = vmul.f32 %v788, 0.0
        %v793 = vrot.slane %v789, 7
        %v794 = vrot.slane %v790, 7
        %v795 = vsel %vm766, %v793, %v794
        %v797 = vadd.f32 %v784, %v795
        %v798 = vld [vmem:[%s392] sm:$0x1]
        %v800 = vlaneseq
        %v801 = vshrl.u32 %v800, 7
        %v802 = vsub.s32 0, %v801
        %v803 = vrot.slane %v798, %v802
        %v805 = vadd.f32 %v797, %v803
        %v806 = vld [vmem:[%s395] sm:$0x1]
        %v808 = vlaneseq
        %v809 = vshrl.u32 %v808, 7
        %v810 = vsub.s32 0, %v809
        %v811 = vrot.slane %v806, %v810
        %v813 = vmul.f32 %v805, %v811
        %v814 = vld [vmem:[%s398] sm:$0x1]
        %v816 = vlaneseq
        %v817 = vshrl.u32 %v816, 7
        %v818 = vsub.s32 0, %v817
        %v819 = vrot.slane %v814, %v818
        %v821 = vadd.f32 %v813, %v819
        %v822 = vxor.u32 %v821, 2147483648
        %v823 = vmul.f32 %v822, 1.442695
        %v824 = vpow.pop %v823
        %v825 = vadd.f32 %v824, 1.0
        %v826 = vrcp.pop %v825
        %v827 = vmul.f32 1.0, %v826
        %v828 = vmul.f32 %v821, %v827
        %v829 = vpack.c.bf16 %v828, %v828
        %vm830 = vcmask 257024
        %831 = vst.msk [vmem:[%s405] sm:$0xf] %vm830, %v829
        %p832 = scmp.lt.s32.totalorder %s23, 1
        %s833 = scalar_select %p832, %s23, 1
        %p834 = scmp.lt.s32.totalorder %s24, 0
        %s835 = scalar_select %p834, %s24, 0
        %s836 = sadd.s32 %s835, %s833
        %s837 = smul.addr %s836, 4
        %s838 = scalar_lea.vmem %s7, %s837
        // Predicated region
        $region53: #{_lambda_.53} parent=47 // pred_check
          %p839 = pneg %p232
        $region54: #{_lambda_.53} parent=47 // pred_check_branch
          %841 = sbr.rel (%p839) target = $region56
        $region55: #{_lambda_.53} parent=47 // pred_region
          _
        $region56: #{_lambda_.53} parent=47 // pred_fallthru
          _
      $region48: #{_lambda_.53} parent=5 // pred_fallthru
        _
      %p842 = scmp.le.s32.totalorder 2, %s14
      // Predicated region
      $region57: #{_lambda_.53} parent=5 // pred_check
        %p843 = pneg %p842
      $region58: #{_lambda_.53} parent=5 // pred_check_branch
        %845 = sbr.rel (%p843) target = $region60
      $region59: #{_lambda_.53} parent=5 // pred_region
        %s846 = ssub.s32 %s14, 2
        // Predicated region
        $region61: #{_lambda_.53} parent=59 // pred_check
          %p847 = pneg %p238
        $region62: #{_lambda_.53} parent=59 // pred_check_branch
          %849 = sbr.rel (%p847) target = $region64
        $region63: #{_lambda_.53} parent=59 // pred_region
          %p850 = scmp.lt.s32.totalorder %s25, 1
          %s851 = scalar_select %p850, %s25, 1
          %p852 = scmp.lt.s32.totalorder %s26, 0
          %s853 = scalar_select %p852, %s26, 0
          %s854 = sadd.s32 %s853, %s851
          %s855 = smul.addr %s854, 4
          %s856 = scalar_lea.vmem %s7, %s855
        $region64: #{_lambda_.53} parent=59 // pred_fallthru
          _
      $region60: #{_lambda_.53} parent=5 // pred_fallthru
        _
    $region6: #{_lambda_.53} parent=1 // loop_footer
      %s18 = sadd.s32 1, %s14
    $region7: #{_lambda_.53} parent=1 // loop_footer_branch
      %13 = sbr.rel target = $region3
    $region8: #{_lambda_.53} parent=1 // loop_exit
      _
    %857 = vsyncpa [#allocation3], 1
    %s858 = scalar_lea.sflag [#allocation3], 1
    %859 = vsyncpa %s858, 1

</llo_original>
